<compile_context>
chip_gen: v6e
topology: v6e:2x2x1
jax: 0.10.0
libtpu: 0.0.40
codegen_flags: <defaults>
</compile_context>

<pallas_src>
import functools

import jax
import jax.numpy as jnp
from jax.experimental import pallas as pl
from jax.experimental.pallas import tpu as pltpu


def _round_up(a, m):
    return (a + m - 1) // m * m


# ----------------------------------------------------------------------------
# Kernel 1: graph Laplacians of TN point clouds per grid step (createLap)
# Lane-dense layout: input (3, K, TN), output (K*K, TN); all intermediates are
# (K, TN) planes -> full 128-lane utilization, no spills, unmasked stores.
# ----------------------------------------------------------------------------
def _lap_kernel(x_ref, l_ref, *, normalized):
    p = x_ref[...]                            # (3, K, TN) float32
    _, K, TN = p.shape
    px, py, pz = p[0], p[1], p[2]             # (K, TN) each

    # per-row weight planes: w_i[j, n] = exp(||pt_i - pt_j||)  (matches torch
    # weights = exp(cdist))
    w_planes = []
    for i in range(K):
        dx = px[i:i + 1, :] - px              # (K, TN), row-i bcast over sublanes
        dy = py[i:i + 1, :] - py
        dz = pz[i:i + 1, :] - pz
        d2 = dx * dx + dy * dy + dz * dz
        w_planes.append(jnp.exp(jnp.sqrt(d2)))

    # degree: col[j, n] = sum_i w_i[j, n]  == torch weights.sum(dim=1)
    # K unrolled VPU adds (no cross-sublane reduction).
    col = w_planes[0]
    for i in range(1, K):
        col = col + w_planes[i]

    row_idx = jax.lax.broadcasted_iota(jnp.int32, (K, TN), 0)   # j index per row
    if normalized:
        inv = jax.lax.rsqrt(col + 1e-7)       # EUP rsqrt (own VLIW slot)

    out_planes = []
    for i in range(K):
        delta = (row_idx == i).astype(jnp.float32)              # delta_{ij}
        if normalized:
            # L[i,j] = delta_ij - inv_i * w[i,j] * inv_j
            out_planes.append(delta - (inv[i:i + 1, :] * w_planes[i]) * inv)
        else:
            # L[i,j] = delta_ij * col_i - w[i,j]   (diag_embed(col) - w)
            out_planes.append(delta * col[i:i + 1, :] - w_planes[i])

    # single lane-dense (K*K, TN) store
    l_ref[...] = jnp.concatenate(out_planes, axis=0)


def laplacian_pallas(pc_t, normalized):
    """pc_t: (3, K, N) lane-dense point clouds -> (N, K, K) Laplacians."""
    _, K, N = pc_t.shape
    TN = min(2048, _round_up(N, 128))                 # lane-axis tile, mult of 128
    N_pad = _round_up(N, TN)
    pc_pad = jnp.zeros((3, K, N_pad), jnp.float32).at[:, :, :N].set(
        pc_t.astype(jnp.float32))

    kernel = functools.partial(_lap_kernel, normalized=normalized)
    flat = pl.pallas_call(
        kernel,
        out_shape=jax.ShapeDtypeStruct((K * K, N_pad), jnp.float32),
        grid=(N_pad // TN,),
        in_specs=[pl.BlockSpec((3, K, TN), lambda i: (0, 0, i))],
        out_specs=pl.BlockSpec((K * K, TN), lambda i: (0, i)),
        compiler_params=pltpu.CompilerParams(
            dimension_semantics=("parallel",),
            # tile VMEM: in 2*3*K*TN*4 + out 2*K*K*TN*4 + temps << 8 MiB
            vmem_limit_bytes=32 * 1024 * 1024),
        cost_estimate=pl.CostEstimate(
            flops=int(N_pad * 12 * K * K),
            transcendentals=int(N_pad * 2 * K * K),
            bytes_accessed=int(4 * N_pad * (3 * K + K * K))),
    )(pc_pad)
    # (K*K, N) -> (N, K, K)
    return jnp.transpose(flat[:, :N].reshape(K, K, N), (2, 0, 1))


# ----------------------------------------------------------------------------
# Kernel 2: one Linear stage of the MLP:  [BN + ReLU] + Linear (+ BN partials)
# One pallas_call per stage (activation cached through HBM) -> each matmul runs
# exactly once.  Per-tile masked sum/sumsq partials are emitted for the NEXT
# BatchNorm layer; a tiny XLA reduction between stages finalizes full-batch
# (training-mode) statistics, so tiling never changes BN semantics.
# ----------------------------------------------------------------------------
def _mlp_stage_kernel(*refs, apply_bn, emit_stats, n_rows):
    idx = 0
    x_ref = refs[idx]; idx += 1
    if apply_bn:
        stats_ref, gamma_ref, beta_ref = refs[idx], refs[idx + 1], refs[idx + 2]
        idx += 3
    w_ref, b_ref = refs[idx], refs[idx + 1]; idx += 2
    out_ref = refs[idx]; idx += 1
    psum_ref = refs[idx] if emit_stats else None

    h = x_ref[...]                                        # (TR, Din) f32
    if apply_bn:
        mean = stats_ref[0:1, :]
        rstd = stats_ref[1:2, :]
        h = jnp.maximum((h - mean) * rstd * gamma_ref[...] + beta_ref[...], 0.0)

    # bf16 MXU operands, f32 accumulation
    y = (jnp.dot(h.astype(jnp.bfloat16), w_ref[...],
                 preferred_element_type=jnp.float32) + b_ref[...])
    out_ref[...] = y

    if emit_stats:
        TR = x_ref.shape[0]
        t = pl.program_id(0)
        rows = t * TR + jax.lax.broadcasted_iota(jnp.int32, (TR, 1), 0)
        mask = (rows < n_rows).astype(jnp.float32)        # (TR, 1) row-pad mask
        ym = y * mask
        psum_ref[...] = jnp.concatenate(
            [jnp.sum(ym, axis=0, keepdims=True),
             jnp.sum(ym * y, axis=0, keepdims=True)], axis=0).reshape(1, 2, -1)


def _mlp_stage(x, stats, gamma, beta, w_bf16, b, *, apply_bn, emit_stats,
               n_rows, TR):
    N_pad, Din = x.shape
    Dout = w_bf16.shape[1]
    nt = N_pad // TR

    inputs = [x]
    in_specs = [pl.BlockSpec((TR, Din), lambda t: (t, 0))]
    if apply_bn:
        inputs += [stats, gamma, beta]
        in_specs += [pl.BlockSpec((2, Din), lambda t: (0, 0)),
                     pl.BlockSpec((1, Din), lambda t: (0, 0)),
                     pl.BlockSpec((1, Din), lambda t: (0, 0))]
    inputs += [w_bf16, b]
    in_specs += [pl.BlockSpec((Din, Dout), lambda t: (0, 0)),
                 pl.BlockSpec((1, Dout), lambda t: (0, 0))]

    out_shape = [jax.ShapeDtypeStruct((N_pad, Dout), jnp.float32)]
    out_specs = [pl.BlockSpec((TR, Dout), lambda t: (t, 0))]
    if emit_stats:
        out_shape.append(jax.ShapeDtypeStruct((nt, 2, Dout), jnp.float32))
        out_specs.append(pl.BlockSpec((1, 2, Dout), lambda t: (t, 0, 0)))

    kernel = functools.partial(_mlp_stage_kernel, apply_bn=apply_bn,
                               emit_stats=emit_stats, n_rows=n_rows)
    outs = pl.pallas_call(
        kernel,
        out_shape=out_shape,
        grid=(nt,),
        in_specs=in_specs,
        out_specs=out_specs,
        compiler_params=pltpu.CompilerParams(
            dimension_semantics=("parallel",),       # row tiles independent (v7x 2-TC)
            vmem_limit_bytes=32 * 1024 * 1024),
        cost_estimate=pl.CostEstimate(
            flops=int(2 * N_pad * Din * Dout),
            transcendentals=0,
            # x + out once, weights once (constant index map), small params
            bytes_accessed=int(4 * N_pad * (Din + Dout) + 2 * Din * Dout + 16 * Din)),
    )(*inputs)
    if emit_stats:
        return outs[0], outs[1]
    return outs[0]


def _finalize_stats(psum, n_rows):
    """psum: (nt, 2, D) per-tile masked sum / sumsq -> (2, D) [mean; rstd]."""
    s = jnp.sum(psum, axis=0)
    mean = s[0] / float(n_rows)
    var = jnp.maximum(s[1] / float(n_rows) - mean * mean, 0.0)   # biased (training)
    rstd = jax.lax.rsqrt(var + 1e-5)                              # BatchNorm1d eps
    return jnp.stack([mean, rstd], axis=0)


def mlp_pallas(x, params, num_mid):
    """Linear + [BN + ReLU + Linear]*num_mid + BN + ReLU + Linear."""
    N, F = x.shape
    LANE = 128
    assert len(params) == 4 * num_mid + 6
    hidden = params[0].shape[1]
    out_dim = params[-2].shape[1]
    Fp = _round_up(F, LANE)
    Hp = _round_up(hidden, LANE)
    Op = _round_up(out_dim, LANE)

    TR = min(1024, _round_up(N, 8))                 # row tile (multiple of 8)
    N_pad = _round_up(N, TR)

    def padp(a, r, c, dtype=jnp.float32):
        z = jnp.zeros((r, c), jnp.float32).at[:a.shape[0], :a.shape[1]].set(
            a.astype(jnp.float32))
        return z.astype(dtype)

    xp = jnp.zeros((N_pad, Fp), jnp.float32).at[:N, :F].set(x.astype(jnp.float32))

    # stage 0: Linear(F -> H) + stats for BN_0
    w0 = padp(params[0], Fp, Hp, jnp.bfloat16)
    b0 = padp(params[1], 1, Hp)
    h, psum = _mlp_stage(xp, None, None, None, w0, b0,
                         apply_bn=False, emit_stats=True, n_rows=N, TR=TR)
    stats = _finalize_stats(psum, N)

    i = 2
    for _ in range(num_mid):
        g = padp(params[i], 1, Hp)
        be = padp(params[i + 1], 1, Hp)
        w = padp(params[i + 2], Hp, Hp, jnp.bfloat16)
        b = padp(params[i + 3], 1, Hp)
        h, psum = _mlp_stage(h, stats, g, be, w, b,
                             apply_bn=True, emit_stats=True, n_rows=N, TR=TR)
        stats = _finalize_stats(psum, N)
        i += 4

    # final stage: BN + ReLU + Linear(H -> out)
    g = padp(params[i], 1, Hp)
    be = padp(params[i + 1], 1, Hp)
    w = padp(params[i + 2], Hp, Op, jnp.bfloat16)
    b = padp(params[i + 3], 1, Op)
    out = _mlp_stage(h, stats, g, be, w, b,
                     apply_bn=True, emit_stats=False, n_rows=N, TR=TR)
    return out[:N, :out_dim]


# ----------------------------------------------------------------------------
# Parameter construction (deterministic, synthetic)
# ----------------------------------------------------------------------------
def init_mlp_params(key, input_size, num_layers, hidden, out_dim):
    params = []
    keys = jax.random.split(key, 4 * num_layers + 4)
    ki = iter(range(len(keys)))

    def lin(in_d, out_d):
        w = 0.1 * jax.random.normal(keys[next(ki)], (in_d, out_d), jnp.float32)
        b = 0.1 * jax.random.normal(keys[next(ki)], (1, out_d), jnp.float32)
        return w, b

    def bn(d):
        g = 1.0 + 0.1 * jax.random.normal(keys[next(ki)], (1, d), jnp.float32)
        be = 0.1 * jax.random.normal(keys[next(ki)], (1, d), jnp.float32)
        return g, be

    params += list(lin(input_size, hidden))
    for _ in range(num_layers - 1):
        params += list(bn(hidden))
        params += list(lin(hidden, hidden))
    params += list(bn(hidden))
    params += list(lin(hidden, out_dim))
    return params


# ----------------------------------------------------------------------------
# Full shapeClassifier forward
# ----------------------------------------------------------------------------
def shape_classifier_forward(x, mlp_params, *, lpe_dim, lpe_normalize,
                             use_second_deg, num_mlp_layers):
    B, C, M, K = x.shape                       # (batch, 3, centroids, knn)
    N = B * M
    # (N, K, 3) layout for the downstream gather / feature construction
    pc = jnp.transpose(x, (0, 2, 3, 1)).reshape(N, K, 3).astype(jnp.float32)
    # (3, K, N) lane-dense layout for the Laplacian kernel
    pc_t = jnp.transpose(x, (1, 3, 0, 2)).reshape(3, K, N).astype(jnp.float32)

    # createLap — Pallas kernel (point-cloud index on the lane axis)
    lap = laplacian_pallas(pc_t, normalized=lpe_normalize)       # (N, K, K)

    # TODO(synk): symmetric eigendecomposition has no Pallas TPU primitive; uses
    # jnp.linalg.eigh (likely the end-to-end bottleneck for large N — a batched
    # 8x8 Jacobi-sweep Pallas kernel in the same lane-dense layout is the next step).
    _, eigvecs_full = jnp.linalg.eigh(lap)
    eigvecs = eigvecs_full[:, :, 1:lpe_dim + 1]                   # (N, K, lpe_dim)

    # sort_by_first_eigenvector (index prep in plain JAX)
    abs_first = jnp.abs(eigvecs[:, :, 0])
    sorted_idx = jnp.argsort(abs_first[:, 1:], axis=1).astype(jnp.int32)
    zeros = jnp.zeros((eigvecs.shape[0], 1), dtype=jnp.int32)
    indices = jnp.concatenate([zeros, 1 + sorted_idx], axis=1)    # (N, K)

    fixed_eigs = jnp.take_along_axis(
        eigvecs, jnp.broadcast_to(indices[:, :, None], eigvecs.shape), axis=1)
    data = jnp.take_along_axis(
        pc, jnp.broadcast_to(indices[:, :, None], pc.shape), axis=1)  # (N, K, 3)

    if use_second_deg:
        xx, yy, zz = data[..., 0], data[..., 1], data[..., 2]
        data = jnp.stack([xx * xx, xx * yy, xx * zz, yy * yy, yy * zz,
                          zz * zz, xx, yy, zz], axis=2)
    if lpe_dim != 0:
        data = jnp.concatenate([data, fixed_eigs], axis=2)        # (N, K, input_dim)

    data = jnp.transpose(data, (0, 2, 1))                          # (N, input_dim, K)
    flat = data.reshape(data.shape[0], -1)                         # (N, input_dim * K)

    # classifier MLP — one row-tiled Pallas matmul stage per Linear layer
    return mlp_pallas(flat, mlp_params, num_mid=num_mlp_layers - 1)


# ----------------------------------------------------------------------------
if __name__ == "__main__":
    # synthetic "args"
    batch = 2
    num_centroids = 4
    k_nearest = 8                       # == sampled_points + 1
    sampled_points = k_nearest - 1
    lpe_dim = 4
    lpe_normalize = True
    use_xyz = True
    use_second_deg = False
    num_mlp_layers = 3
    num_neurons = 32
    output_dim = 5

    input_dim = (9 if use_second_deg else (3 if use_xyz else 0)) + lpe_dim
    input_size = input_dim * (sampled_points + 1)

    key = jax.random.PRNGKey(0)
    kx, kp = jax.random.split(key)
    x = jax.random.normal(kx, (batch, 3, num_centroids, k_nearest), jnp.float32)
    mlp_params = init_mlp_params(kp, input_size, num_mlp_layers, num_neurons, output_dim)

    fwd = jax.jit(functools.partial(
        shape_classifier_forward,
        lpe_dim=lpe_dim, lpe_normalize=lpe_normalize,
        use_second_deg=use_second_deg, num_mlp_layers=num_mlp_layers))

    out = fwd(x, mlp_params)
    jax.block_until_ready(out)
    assert out.shape == (batch * num_centroids, output_dim)
    assert bool(jnp.all(jnp.isfinite(out)))
    print("KERNEL_OK")
</pallas_src>

<mosaic_0001>
module attributes {stable_mosaic.version = 11 : i64} {
  func.func @_lap_kernel(%arg0: i32, %arg1: memref<3x8x128xf32, #tpu.memory_space<vmem>>, %arg2: memref<64x128xf32, #tpu.memory_space<vmem>>) attributes {dimension_semantics = [#tpu.dimension_semantics<parallel>], iteration_bounds = array<i64: 1>, scalar_prefetch = 0 : i64, scratch_operands = 0 : i64, tpu.core_type = #tpu.core_type<tc>, window_params = [{transform_indices = @transform_0, window_bounds = array<i64: 3, 8, 128>}, {transform_indices = @transform_1, window_bounds = array<i64: 64, 128>}]} {
    %c0 = arith.constant 0 : index
    %c0_0 = arith.constant 0 : index
    %c0_1 = arith.constant 0 : index
    %0 = vector.load %arg1[%c0, %c0_0, %c0_1] : memref<3x8x128xf32, #tpu.memory_space<vmem>>, vector<3x8x128xf32>
    %1 = vector.extract_strided_slice %0 {offsets = [0, 0, 0], sizes = [1, 8, 128], strides = [1, 1, 1]} : vector<3x8x128xf32> to vector<1x8x128xf32>
    %2 = vector.shape_cast %1 : vector<1x8x128xf32> to vector<8x128xf32>
    %3 = vector.extract_strided_slice %0 {offsets = [1, 0, 0], sizes = [1, 8, 128], strides = [1, 1, 1]} : vector<3x8x128xf32> to vector<1x8x128xf32>
    %4 = vector.shape_cast %3 : vector<1x8x128xf32> to vector<8x128xf32>
    %5 = vector.extract_strided_slice %0 {offsets = [2, 0, 0], sizes = [1, 8, 128], strides = [1, 1, 1]} : vector<3x8x128xf32> to vector<1x8x128xf32>
    %6 = vector.shape_cast %5 : vector<1x8x128xf32> to vector<8x128xf32>
    %7 = vector.extract_strided_slice %2 {offsets = [0, 0], sizes = [1, 128], strides = [1, 1]} : vector<8x128xf32> to vector<1x128xf32>
    %8 = vector.broadcast %7 : vector<1x128xf32> to vector<8x128xf32>
    %9 = arith.subf %8, %2 : vector<8x128xf32>
    %10 = vector.extract_strided_slice %4 {offsets = [0, 0], sizes = [1, 128], strides = [1, 1]} : vector<8x128xf32> to vector<1x128xf32>
    %11 = vector.broadcast %10 : vector<1x128xf32> to vector<8x128xf32>
    %12 = arith.subf %11, %4 : vector<8x128xf32>
    %13 = vector.extract_strided_slice %6 {offsets = [0, 0], sizes = [1, 128], strides = [1, 1]} : vector<8x128xf32> to vector<1x128xf32>
    %14 = vector.broadcast %13 : vector<1x128xf32> to vector<8x128xf32>
    %15 = arith.subf %14, %6 : vector<8x128xf32>
    %16 = arith.mulf %9, %9 : vector<8x128xf32>
    %17 = arith.mulf %12, %12 : vector<8x128xf32>
    %18 = arith.addf %16, %17 : vector<8x128xf32>
    %19 = arith.mulf %15, %15 : vector<8x128xf32>
    %20 = arith.addf %18, %19 : vector<8x128xf32>
    %21 = math.sqrt %20 : vector<8x128xf32>
    %22 = math.exp %21 : vector<8x128xf32>
    %23 = vector.extract_strided_slice %2 {offsets = [1, 0], sizes = [1, 128], strides = [1, 1]} : vector<8x128xf32> to vector<1x128xf32>
    %24 = vector.broadcast %23 : vector<1x128xf32> to vector<8x128xf32>
    %25 = arith.subf %24, %2 : vector<8x128xf32>
    %26 = vector.extract_strided_slice %4 {offsets = [1, 0], sizes = [1, 128], strides = [1, 1]} : vector<8x128xf32> to vector<1x128xf32>
    %27 = vector.broadcast %26 : vector<1x128xf32> to vector<8x128xf32>
    %28 = arith.subf %27, %4 : vector<8x128xf32>
    %29 = vector.extract_strided_slice %6 {offsets = [1, 0], sizes = [1, 128], strides = [1, 1]} : vector<8x128xf32> to vector<1x128xf32>
    %30 = vector.broadcast %29 : vector<1x128xf32> to vector<8x128xf32>
    %31 = arith.subf %30, %6 : vector<8x128xf32>
    %32 = arith.mulf %25, %25 : vector<8x128xf32>
    %33 = arith.mulf %28, %28 : vector<8x128xf32>
    %34 = arith.addf %32, %33 : vector<8x128xf32>
    %35 = arith.mulf %31, %31 : vector<8x128xf32>
    %36 = arith.addf %34, %35 : vector<8x128xf32>
    %37 = math.sqrt %36 : vector<8x128xf32>
    %38 = math.exp %37 : vector<8x128xf32>
    %39 = vector.extract_strided_slice %2 {offsets = [2, 0], sizes = [1, 128], strides = [1, 1]} : vector<8x128xf32> to vector<1x128xf32>
    %40 = vector.broadcast %39 : vector<1x128xf32> to vector<8x128xf32>
    %41 = arith.subf %40, %2 : vector<8x128xf32>
    %42 = vector.extract_strided_slice %4 {offsets = [2, 0], sizes = [1, 128], strides = [1, 1]} : vector<8x128xf32> to vector<1x128xf32>
    %43 = vector.broadcast %42 : vector<1x128xf32> to vector<8x128xf32>
    %44 = arith.subf %43, %4 : vector<8x128xf32>
    %45 = vector.extract_strided_slice %6 {offsets = [2, 0], sizes = [1, 128], strides = [1, 1]} : vector<8x128xf32> to vector<1x128xf32>
    %46 = vector.broadcast %45 : vector<1x128xf32> to vector<8x128xf32>
    %47 = arith.subf %46, %6 : vector<8x128xf32>
    %48 = arith.mulf %41, %41 : vector<8x128xf32>
    %49 = arith.mulf %44, %44 : vector<8x128xf32>
    %50 = arith.addf %48, %49 : vector<8x128xf32>
    %51 = arith.mulf %47, %47 : vector<8x128xf32>
    %52 = arith.addf %50, %51 : vector<8x128xf32>
    %53 = math.sqrt %52 : vector<8x128xf32>
    %54 = math.exp %53 : vector<8x128xf32>
    %55 = vector.extract_strided_slice %2 {offsets = [3, 0], sizes = [1, 128], strides = [1, 1]} : vector<8x128xf32> to vector<1x128xf32>
    %56 = vector.broadcast %55 : vector<1x128xf32> to vector<8x128xf32>
    %57 = arith.subf %56, %2 : vector<8x128xf32>
    %58 = vector.extract_strided_slice %4 {offsets = [3, 0], sizes = [1, 128], strides = [1, 1]} : vector<8x128xf32> to vector<1x128xf32>
    %59 = vector.broadcast %58 : vector<1x128xf32> to vector<8x128xf32>
    %60 = arith.subf %59, %4 : vector<8x128xf32>
    %61 = vector.extract_strided_slice %6 {offsets = [3, 0], sizes = [1, 128], strides = [1, 1]} : vector<8x128xf32> to vector<1x128xf32>
    %62 = vector.broadcast %61 : vector<1x128xf32> to vector<8x128xf32>
    %63 = arith.subf %62, %6 : vector<8x128xf32>
    %64 = arith.mulf %57, %57 : vector<8x128xf32>
    %65 = arith.mulf %60, %60 : vector<8x128xf32>
    %66 = arith.addf %64, %65 : vector<8x128xf32>
    %67 = arith.mulf %63, %63 : vector<8x128xf32>
    %68 = arith.addf %66, %67 : vector<8x128xf32>
    %69 = math.sqrt %68 : vector<8x128xf32>
    %70 = math.exp %69 : vector<8x128xf32>
    %71 = vector.extract_strided_slice %2 {offsets = [4, 0], sizes = [1, 128], strides = [1, 1]} : vector<8x128xf32> to vector<1x128xf32>
    %72 = vector.broadcast %71 : vector<1x128xf32> to vector<8x128xf32>
    %73 = arith.subf %72, %2 : vector<8x128xf32>
    %74 = vector.extract_strided_slice %4 {offsets = [4, 0], sizes = [1, 128], strides = [1, 1]} : vector<8x128xf32> to vector<1x128xf32>
    %75 = vector.broadcast %74 : vector<1x128xf32> to vector<8x128xf32>
    %76 = arith.subf %75, %4 : vector<8x128xf32>
    %77 = vector.extract_strided_slice %6 {offsets = [4, 0], sizes = [1, 128], strides = [1, 1]} : vector<8x128xf32> to vector<1x128xf32>
    %78 = vector.broadcast %77 : vector<1x128xf32> to vector<8x128xf32>
    %79 = arith.subf %78, %6 : vector<8x128xf32>
    %80 = arith.mulf %73, %73 : vector<8x128xf32>
    %81 = arith.mulf %76, %76 : vector<8x128xf32>
    %82 = arith.addf %80, %81 : vector<8x128xf32>
    %83 = arith.mulf %79, %79 : vector<8x128xf32>
    %84 = arith.addf %82, %83 : vector<8x128xf32>
    %85 = math.sqrt %84 : vector<8x128xf32>
    %86 = math.exp %85 : vector<8x128xf32>
    %87 = vector.extract_strided_slice %2 {offsets = [5, 0], sizes = [1, 128], strides = [1, 1]} : vector<8x128xf32> to vector<1x128xf32>
    %88 = vector.broadcast %87 : vector<1x128xf32> to vector<8x128xf32>
    %89 = arith.subf %88, %2 : vector<8x128xf32>
    %90 = vector.extract_strided_slice %4 {offsets = [5, 0], sizes = [1, 128], strides = [1, 1]} : vector<8x128xf32> to vector<1x128xf32>
    %91 = vector.broadcast %90 : vector<1x128xf32> to vector<8x128xf32>
    %92 = arith.subf %91, %4 : vector<8x128xf32>
    %93 = vector.extract_strided_slice %6 {offsets = [5, 0], sizes = [1, 128], strides = [1, 1]} : vector<8x128xf32> to vector<1x128xf32>
    %94 = vector.broadcast %93 : vector<1x128xf32> to vector<8x128xf32>
    %95 = arith.subf %94, %6 : vector<8x128xf32>
    %96 = arith.mulf %89, %89 : vector<8x128xf32>
    %97 = arith.mulf %92, %92 : vector<8x128xf32>
    %98 = arith.addf %96, %97 : vector<8x128xf32>
    %99 = arith.mulf %95, %95 : vector<8x128xf32>
    %100 = arith.addf %98, %99 : vector<8x128xf32>
    %101 = math.sqrt %100 : vector<8x128xf32>
    %102 = math.exp %101 : vector<8x128xf32>
    %103 = vector.extract_strided_slice %2 {offsets = [6, 0], sizes = [1, 128], strides = [1, 1]} : vector<8x128xf32> to vector<1x128xf32>
    %104 = vector.broadcast %103 : vector<1x128xf32> to vector<8x128xf32>
    %105 = arith.subf %104, %2 : vector<8x128xf32>
    %106 = vector.extract_strided_slice %4 {offsets = [6, 0], sizes = [1, 128], strides = [1, 1]} : vector<8x128xf32> to vector<1x128xf32>
    %107 = vector.broadcast %106 : vector<1x128xf32> to vector<8x128xf32>
    %108 = arith.subf %107, %4 : vector<8x128xf32>
    %109 = vector.extract_strided_slice %6 {offsets = [6, 0], sizes = [1, 128], strides = [1, 1]} : vector<8x128xf32> to vector<1x128xf32>
    %110 = vector.broadcast %109 : vector<1x128xf32> to vector<8x128xf32>
    %111 = arith.subf %110, %6 : vector<8x128xf32>
    %112 = arith.mulf %105, %105 : vector<8x128xf32>
    %113 = arith.mulf %108, %108 : vector<8x128xf32>
    %114 = arith.addf %112, %113 : vector<8x128xf32>
    %115 = arith.mulf %111, %111 : vector<8x128xf32>
    %116 = arith.addf %114, %115 : vector<8x128xf32>
    %117 = math.sqrt %116 : vector<8x128xf32>
    %118 = math.exp %117 : vector<8x128xf32>
    %119 = vector.extract_strided_slice %2 {offsets = [7, 0], sizes = [1, 128], strides = [1, 1]} : vector<8x128xf32> to vector<1x128xf32>
    %120 = vector.broadcast %119 : vector<1x128xf32> to vector<8x128xf32>
    %121 = arith.subf %120, %2 : vector<8x128xf32>
    %122 = vector.extract_strided_slice %4 {offsets = [7, 0], sizes = [1, 128], strides = [1, 1]} : vector<8x128xf32> to vector<1x128xf32>
    %123 = vector.broadcast %122 : vector<1x128xf32> to vector<8x128xf32>
    %124 = arith.subf %123, %4 : vector<8x128xf32>
    %125 = vector.extract_strided_slice %6 {offsets = [7, 0], sizes = [1, 128], strides = [1, 1]} : vector<8x128xf32> to vector<1x128xf32>
    %126 = vector.broadcast %125 : vector<1x128xf32> to vector<8x128xf32>
    %127 = arith.subf %126, %6 : vector<8x128xf32>
    %128 = arith.mulf %121, %121 : vector<8x128xf32>
    %129 = arith.mulf %124, %124 : vector<8x128xf32>
    %130 = arith.addf %128, %129 : vector<8x128xf32>
    %131 = arith.mulf %127, %127 : vector<8x128xf32>
    %132 = arith.addf %130, %131 : vector<8x128xf32>
    %133 = math.sqrt %132 : vector<8x128xf32>
    %134 = math.exp %133 : vector<8x128xf32>
    %135 = arith.addf %22, %38 : vector<8x128xf32>
    %136 = arith.addf %135, %54 : vector<8x128xf32>
    %137 = arith.addf %136, %70 : vector<8x128xf32>
    %138 = arith.addf %137, %86 : vector<8x128xf32>
    %139 = arith.addf %138, %102 : vector<8x128xf32>
    %140 = arith.addf %139, %118 : vector<8x128xf32>
    %141 = arith.addf %140, %134 : vector<8x128xf32>
    %142 = tpu.iota {dimensions = array<i32: 0>} : vector<8x128xi32>
    %cst = arith.constant 1.000000e-07 : f32
    %143 = vector.broadcast %cst : f32 to vector<8x128xf32>
    %144 = arith.addf %141, %143 : vector<8x128xf32>
    %145 = math.rsqrt %144 : vector<8x128xf32>
    %c0_i32 = arith.constant 0 : i32
    %146 = vector.broadcast %c0_i32 : i32 to vector<8x128xi32>
    %147 = arith.cmpi eq, %142, %146 : vector<8x128xi32>
    %148 = arith.extui %147 : vector<8x128xi1> to vector<8x128xi32>
    %149 = arith.sitofp %148 : vector<8x128xi32> to vector<8x128xf32>
    %150 = vector.extract_strided_slice %145 {offsets = [0, 0], sizes = [1, 128], strides = [1, 1]} : vector<8x128xf32> to vector<1x128xf32>
    %151 = vector.broadcast %150 : vector<1x128xf32> to vector<8x128xf32>
    %152 = arith.mulf %151, %22 : vector<8x128xf32>
    %153 = arith.mulf %152, %145 : vector<8x128xf32>
    %154 = arith.subf %149, %153 : vector<8x128xf32>
    %c1_i32 = arith.constant 1 : i32
    %155 = vector.broadcast %c1_i32 : i32 to vector<8x128xi32>
    %156 = arith.cmpi eq, %142, %155 : vector<8x128xi32>
    %157 = arith.extui %156 : vector<8x128xi1> to vector<8x128xi32>
    %158 = arith.sitofp %157 : vector<8x128xi32> to vector<8x128xf32>
    %159 = vector.extract_strided_slice %145 {offsets = [1, 0], sizes = [1, 128], strides = [1, 1]} : vector<8x128xf32> to vector<1x128xf32>
    %160 = vector.broadcast %159 : vector<1x128xf32> to vector<8x128xf32>
    %161 = arith.mulf %160, %38 : vector<8x128xf32>
    %162 = arith.mulf %161, %145 : vector<8x128xf32>
    %163 = arith.subf %158, %162 : vector<8x128xf32>
    %c2_i32 = arith.constant 2 : i32
    %164 = vector.broadcast %c2_i32 : i32 to vector<8x128xi32>
    %165 = arith.cmpi eq, %142, %164 : vector<8x128xi32>
    %166 = arith.extui %165 : vector<8x128xi1> to vector<8x128xi32>
    %167 = arith.sitofp %166 : vector<8x128xi32> to vector<8x128xf32>
    %168 = vector.extract_strided_slice %145 {offsets = [2, 0], sizes = [1, 128], strides = [1, 1]} : vector<8x128xf32> to vector<1x128xf32>
    %169 = vector.broadcast %168 : vector<1x128xf32> to vector<8x128xf32>
    %170 = arith.mulf %169, %54 : vector<8x128xf32>
    %171 = arith.mulf %170, %145 : vector<8x128xf32>
    %172 = arith.subf %167, %171 : vector<8x128xf32>
    %c3_i32 = arith.constant 3 : i32
    %173 = vector.broadcast %c3_i32 : i32 to vector<8x128xi32>
    %174 = arith.cmpi eq, %142, %173 : vector<8x128xi32>
    %175 = arith.extui %174 : vector<8x128xi1> to vector<8x128xi32>
    %176 = arith.sitofp %175 : vector<8x128xi32> to vector<8x128xf32>
    %177 = vector.extract_strided_slice %145 {offsets = [3, 0], sizes = [1, 128], strides = [1, 1]} : vector<8x128xf32> to vector<1x128xf32>
    %178 = vector.broadcast %177 : vector<1x128xf32> to vector<8x128xf32>
    %179 = arith.mulf %178, %70 : vector<8x128xf32>
    %180 = arith.mulf %179, %145 : vector<8x128xf32>
    %181 = arith.subf %176, %180 : vector<8x128xf32>
    %c4_i32 = arith.constant 4 : i32
    %182 = vector.broadcast %c4_i32 : i32 to vector<8x128xi32>
    %183 = arith.cmpi eq, %142, %182 : vector<8x128xi32>
    %184 = arith.extui %183 : vector<8x128xi1> to vector<8x128xi32>
    %185 = arith.sitofp %184 : vector<8x128xi32> to vector<8x128xf32>
    %186 = vector.extract_strided_slice %145 {offsets = [4, 0], sizes = [1, 128], strides = [1, 1]} : vector<8x128xf32> to vector<1x128xf32>
    %187 = vector.broadcast %186 : vector<1x128xf32> to vector<8x128xf32>
    %188 = arith.mulf %187, %86 : vector<8x128xf32>
    %189 = arith.mulf %188, %145 : vector<8x128xf32>
    %190 = arith.subf %185, %189 : vector<8x128xf32>
    %c5_i32 = arith.constant 5 : i32
    %191 = vector.broadcast %c5_i32 : i32 to vector<8x128xi32>
    %192 = arith.cmpi eq, %142, %191 : vector<8x128xi32>
    %193 = arith.extui %192 : vector<8x128xi1> to vector<8x128xi32>
    %194 = arith.sitofp %193 : vector<8x128xi32> to vector<8x128xf32>
    %195 = vector.extract_strided_slice %145 {offsets = [5, 0], sizes = [1, 128], strides = [1, 1]} : vector<8x128xf32> to vector<1x128xf32>
    %196 = vector.broadcast %195 : vector<1x128xf32> to vector<8x128xf32>
    %197 = arith.mulf %196, %102 : vector<8x128xf32>
    %198 = arith.mulf %197, %145 : vector<8x128xf32>
    %199 = arith.subf %194, %198 : vector<8x128xf32>
    %c6_i32 = arith.constant 6 : i32
    %200 = vector.broadcast %c6_i32 : i32 to vector<8x128xi32>
    %201 = arith.cmpi eq, %142, %200 : vector<8x128xi32>
    %202 = arith.extui %201 : vector<8x128xi1> to vector<8x128xi32>
    %203 = arith.sitofp %202 : vector<8x128xi32> to vector<8x128xf32>
    %204 = vector.extract_strided_slice %145 {offsets = [6, 0], sizes = [1, 128], strides = [1, 1]} : vector<8x128xf32> to vector<1x128xf32>
    %205 = vector.broadcast %204 : vector<1x128xf32> to vector<8x128xf32>
    %206 = arith.mulf %205, %118 : vector<8x128xf32>
    %207 = arith.mulf %206, %145 : vector<8x128xf32>
    %208 = arith.subf %203, %207 : vector<8x128xf32>
    %c7_i32 = arith.constant 7 : i32
    %209 = vector.broadcast %c7_i32 : i32 to vector<8x128xi32>
    %210 = arith.cmpi eq, %142, %209 : vector<8x128xi32>
    %211 = arith.extui %210 : vector<8x128xi1> to vector<8x128xi32>
    %212 = arith.sitofp %211 : vector<8x128xi32> to vector<8x128xf32>
    %213 = vector.extract_strided_slice %145 {offsets = [7, 0], sizes = [1, 128], strides = [1, 1]} : vector<8x128xf32> to vector<1x128xf32>
    %214 = vector.broadcast %213 : vector<1x128xf32> to vector<8x128xf32>
    %215 = arith.mulf %214, %134 : vector<8x128xf32>
    %216 = arith.mulf %215, %145 : vector<8x128xf32>
    %217 = arith.subf %212, %216 : vector<8x128xf32>
    %218 = tpu.concatenate %154, %163, %172, %181, %190, %199, %208, %217 in 0 : vector<8x128xf32>, vector<8x128xf32>, vector<8x128xf32>, vector<8x128xf32>, vector<8x128xf32>, vector<8x128xf32>, vector<8x128xf32>, vector<8x128xf32> -> vector<64x128xf32>
    %c0_2 = arith.constant 0 : index
    %c0_3 = arith.constant 0 : index
    %219 = vector.load %arg2[%c0_2, %c0_3] : memref<64x128xf32, #tpu.memory_space<vmem>>, vector<64x128xf32>
    tpu.vector_store %arg2[%c0_2, %c0_3], %218 {strides = array<i32>} : memref<64x128xf32, #tpu.memory_space<vmem>>, vector<64x128xf32>,
    return
  }
  func.func @transform_0(%arg0: i32) -> (i32, i32, i32) {
    %c0_i32 = arith.constant 0 : i32
    %c0_i32_0 = arith.constant 0 : i32
    %c0_i32_1 = arith.constant 0 : i32
    return %c0_i32, %c0_i32_0, %arg0 : i32, i32, i32
  }
  func.func @transform_1(%arg0: i32) -> (i32, i32) {
    %c0_i32 = arith.constant 0 : i32
    %c0_i32_0 = arith.constant 0 : i32
    return %c0_i32, %arg0 : i32, i32
  }
}

module attributes {stable_mosaic.version = 11 : i64} {
  func.func @_mlp_stage_kernel(%arg0: i32, %arg1: memref<8x128xf32, #tpu.memory_space<vmem>>, %arg2: memref<128x128xbf16, #tpu.memory_space<vmem>>, %arg3: memref<1x128xf32, #tpu.memory_space<vmem>>, %arg4: memref<8x128xf32, #tpu.memory_space<vmem>>, %arg5: memref<1x2x128xf32, #tpu.memory_space<vmem>>) attributes {dimension_semantics = [#tpu.dimension_semantics<parallel>], iteration_bounds = array<i64: 1>, scalar_prefetch = 0 : i64, scratch_operands = 0 : i64, tpu.core_type = #tpu.core_type<tc>, window_params = [{transform_indices = @transform_0, window_bounds = array<i64: 8, 128>}, {pipeline_mode = #tpu.pipeline_mode<synchronous>, transform_indices = @transform_1, window_bounds = array<i64: 128, 128>}, {pipeline_mode = #tpu.pipeline_mode<synchronous>, transform_indices = @transform_2, window_bounds = array<i64: 1, 128>}, {transform_indices = @transform_3, window_bounds = array<i64: 8, 128>}, {transform_indices = @transform_4, window_bounds = array<i64: 1, 2, 128>}]} {
    %c0 = arith.constant 0 : index
    %c0_0 = arith.constant 0 : index
    %0 = vector.load %arg1[%c0, %c0_0] : memref<8x128xf32, #tpu.memory_space<vmem>>, vector<8x128xf32>
    %1 = arith.truncf %0 : vector<8x128xf32> to vector<8x128xbf16>
    %c0_1 = arith.constant 0 : index
    %c0_2 = arith.constant 0 : index
    %2 = vector.load %arg2[%c0_1, %c0_2] : memref<128x128xbf16, #tpu.memory_space<vmem>>, vector<128x128xbf16>
    %cst = arith.constant dense<0.000000e+00> : vector<8x128xf32>
    %3 = tpu.matmul %1, %2, %cst {dimension_numbers = #tpu.dot_dimension_numbers<[1], [0], [0], [1], [0, 0, 1, 1], [], []>} : vector<8x128xbf16>, vector<128x128xbf16>, vector<8x128xf32> -> vector<8x128xf32>
    %c0_3 = arith.constant 0 : index
    %c0_4 = arith.constant 0 : index
    %4 = vector.load %arg3[%c0_3, %c0_4] : memref<1x128xf32, #tpu.memory_space<vmem>>, vector<1x128xf32>
    %5 = vector.broadcast %4 : vector<1x128xf32> to vector<8x128xf32>
    %6 = arith.addf %3, %5 : vector<8x128xf32>
    %c0_5 = arith.constant 0 : index
    %c0_6 = arith.constant 0 : index
    %7 = vector.load %arg4[%c0_5, %c0_6] : memref<8x128xf32, #tpu.memory_space<vmem>>, vector<8x128xf32>
    tpu.vector_store %arg4[%c0_5, %c0_6], %6 {strides = array<i32>} : memref<8x128xf32, #tpu.memory_space<vmem>>, vector<8x128xf32>,
    %c8_i32 = arith.constant 8 : i32
    %8 = arith.muli %arg0, %c8_i32 : i32
    %9 = tpu.iota {dimensions = array<i32: 0>} : vector<8x1xi32>
    %10 = vector.broadcast %8 : i32 to vector<8x1xi32>
    %11 = arith.addi %10, %9 : vector<8x1xi32>
    %c8_i32_7 = arith.constant 8 : i32
    %12 = vector.broadcast %c8_i32_7 : i32 to vector<8x1xi32>
    %13 = arith.cmpi slt, %11, %12 : vector<8x1xi32>
    %14 = arith.extui %13 : vector<8x1xi1> to vector<8x1xi32>
    %15 = arith.sitofp %14 : vector<8x1xi32> to vector<8x1xf32>
    %16 = vector.broadcast %15 : vector<8x1xf32> to vector<8x128xf32>
    %17 = arith.mulf %6, %16 : vector<8x128xf32>
    %cst_8 = arith.constant dense<0.000000e+00> : vector<128xf32>
    %18 = vector.multi_reduction <add>, %17, %cst_8 [0] : vector<8x128xf32> to vector<128xf32>
    %19 = vector.shape_cast %18 : vector<128xf32> to vector<1x128xf32>
    %20 = arith.mulf %17, %6 : vector<8x128xf32>
    %cst_9 = arith.constant dense<0.000000e+00> : vector<128xf32>
    %21 = vector.multi_reduction <add>, %20, %cst_9 [0] : vector<8x128xf32> to vector<128xf32>
    %22 = vector.shape_cast %21 : vector<128xf32> to vector<1x128xf32>
    %23 = tpu.concatenate %19, %22 in 0 : vector<1x128xf32>, vector<1x128xf32> -> vector<2x128xf32>
    %24 = vector.shape_cast %23 : vector<2x128xf32> to vector<1x2x128xf32>
    %c0_10 = arith.constant 0 : index
    %c0_11 = arith.constant 0 : index
    %c0_12 = arith.constant 0 : index
    %25 = vector.load %arg5[%c0_10, %c0_11, %c0_12] : memref<1x2x128xf32, #tpu.memory_space<vmem>>, vector<1x2x128xf32>
    tpu.vector_store %arg5[%c0_10, %c0_11, %c0_12], %24 {strides = array<i32>} : memref<1x2x128xf32, #tpu.memory_space<vmem>>, vector<1x2x128xf32>,
    return
  }
  func.func @transform_0(%arg0: i32) -> (i32, i32) {
    %c0_i32 = arith.constant 0 : i32
    %c0_i32_0 = arith.constant 0 : i32
    return %arg0, %c0_i32 : i32, i32
  }
  func.func @transform_1(%arg0: i32) -> (i32, i32) {
    %c0_i32 = arith.constant 0 : i32
    %c0_i32_0 = arith.constant 0 : i32
    %c0_i32_1 = arith.constant 0 : i32
    return %c0_i32, %c0_i32_0 : i32, i32
  }
  func.func @transform_2(%arg0: i32) -> (i32, i32) {
    %c0_i32 = arith.constant 0 : i32
    %c0_i32_0 = arith.constant 0 : i32
    %c0_i32_1 = arith.constant 0 : i32
    return %c0_i32, %c0_i32_0 : i32, i32
  }
  func.func @transform_3(%arg0: i32) -> (i32, i32) {
    %c0_i32 = arith.constant 0 : i32
    %c0_i32_0 = arith.constant 0 : i32
    return %arg0, %c0_i32 : i32, i32
  }
  func.func @transform_4(%arg0: i32) -> (i32, i32, i32) {
    %c0_i32 = arith.constant 0 : i32
    %c0_i32_0 = arith.constant 0 : i32
    %c0_i32_1 = arith.constant 0 : i32
    return %arg0, %c0_i32, %c0_i32_0 : i32, i32, i32
  }
}

module attributes {stable_mosaic.version = 11 : i64} {
  func.func @_mlp_stage_kernel(%arg0: i32, %arg1: memref<8x128xf32, #tpu.memory_space<vmem>>, %arg2: memref<2x128xf32, #tpu.memory_space<vmem>>, %arg3: memref<1x128xf32, #tpu.memory_space<vmem>>, %arg4: memref<1x128xf32, #tpu.memory_space<vmem>>, %arg5: memref<128x128xbf16, #tpu.memory_space<vmem>>, %arg6: memref<1x128xf32, #tpu.memory_space<vmem>>, %arg7: memref<8x128xf32, #tpu.memory_space<vmem>>, %arg8: memref<1x2x128xf32, #tpu.memory_space<vmem>>) attributes {dimension_semantics = [#tpu.dimension_semantics<parallel>], iteration_bounds = array<i64: 1>, scalar_prefetch = 0 : i64, scratch_operands = 0 : i64, tpu.core_type = #tpu.core_type<tc>, window_params = [{transform_indices = @transform_0, window_bounds = array<i64: 8, 128>}, {pipeline_mode = #tpu.pipeline_mode<synchronous>, transform_indices = @transform_1, window_bounds = array<i64: 2, 128>}, {pipeline_mode = #tpu.pipeline_mode<synchronous>, transform_indices = @transform_2, window_bounds = array<i64: 1, 128>}, {pipeline_mode = #tpu.pipeline_mode<synchronous>, transform_indices = @transform_3, window_bounds = array<i64: 1, 128>}, {pipeline_mode = #tpu.pipeline_mode<synchronous>, transform_indices = @transform_4, window_bounds = array<i64: 128, 128>}, {pipeline_mode = #tpu.pipeline_mode<synchronous>, transform_indices = @transform_5, window_bounds = array<i64: 1, 128>}, {transform_indices = @transform_6, window_bounds = array<i64: 8, 128>}, {transform_indices = @transform_7, window_bounds = array<i64: 1, 2, 128>}]} {
    %c0 = arith.constant 0 : index
    %c0_0 = arith.constant 0 : index
    %0 = vector.load %arg1[%c0, %c0_0] : memref<8x128xf32, #tpu.memory_space<vmem>>, vector<8x128xf32>
    %c0_1 = arith.constant 0 : index
    %c0_2 = arith.constant 0 : index
    %1 = vector.load %arg2[%c0_1, %c0_2] : memref<2x128xf32, #tpu.memory_space<vmem>>, vector<1x128xf32>
    %c1 = arith.constant 1 : index
    %c0_3 = arith.constant 0 : index
    %2 = vector.load %arg2[%c1, %c0_3] : memref<2x128xf32, #tpu.memory_space<vmem>>, vector<1x128xf32>
    %3 = vector.broadcast %1 : vector<1x128xf32> to vector<8x128xf32>
    %4 = arith.subf %0, %3 : vector<8x128xf32>
    %5 = vector.broadcast %2 : vector<1x128xf32> to vector<8x128xf32>
    %6 = arith.mulf %4, %5 : vector<8x128xf32>
    %c0_4 = arith.constant 0 : index
    %c0_5 = arith.constant 0 : index
    %7 = vector.load %arg3[%c0_4, %c0_5] : memref<1x128xf32, #tpu.memory_space<vmem>>, vector<1x128xf32>
    %8 = vector.broadcast %7 : vector<1x128xf32> to vector<8x128xf32>
    %9 = arith.mulf %6, %8 : vector<8x128xf32>
    %c0_6 = arith.constant 0 : index
    %c0_7 = arith.constant 0 : index
    %10 = vector.load %arg4[%c0_6, %c0_7] : memref<1x128xf32, #tpu.memory_space<vmem>>, vector<1x128xf32>
    %11 = vector.broadcast %10 : vector<1x128xf32> to vector<8x128xf32>
    %12 = arith.addf %9, %11 : vector<8x128xf32>
    %cst = arith.constant 0.000000e+00 : f32
    %13 = vector.broadcast %cst : f32 to vector<8x128xf32>
    %14 = arith.maximumf %12, %13 : vector<8x128xf32>
    %15 = arith.truncf %14 : vector<8x128xf32> to vector<8x128xbf16>
    %c0_8 = arith.constant 0 : index
    %c0_9 = arith.constant 0 : index
    %16 = vector.load %arg5[%c0_8, %c0_9] : memref<128x128xbf16, #tpu.memory_space<vmem>>, vector<128x128xbf16>
    %cst_10 = arith.constant dense<0.000000e+00> : vector<8x128xf32>
    %17 = tpu.matmul %15, %16, %cst_10 {dimension_numbers = #tpu.dot_dimension_numbers<[1], [0], [0], [1], [0, 0, 1, 1], [], []>} : vector<8x128xbf16>, vector<128x128xbf16>, vector<8x128xf32> -> vector<8x128xf32>
    %c0_11 = arith.constant 0 : index
    %c0_12 = arith.constant 0 : index
    %18 = vector.load %arg6[%c0_11, %c0_12] : memref<1x128xf32, #tpu.memory_space<vmem>>, vector<1x128xf32>
    %19 = vector.broadcast %18 : vector<1x128xf32> to vector<8x128xf32>
    %20 = arith.addf %17, %19 : vector<8x128xf32>
    %c0_13 = arith.constant 0 : index
    %c0_14 = arith.constant 0 : index
    %21 = vector.load %arg7[%c0_13, %c0_14] : memref<8x128xf32, #tpu.memory_space<vmem>>, vector<8x128xf32>
    tpu.vector_store %arg7[%c0_13, %c0_14], %20 {strides = array<i32>} : memref<8x128xf32, #tpu.memory_space<vmem>>, vector<8x128xf32>,
    %c8_i32 = arith.constant 8 : i32
    %22 = arith.muli %arg0, %c8_i32 : i32
    %23 = tpu.iota {dimensions = array<i32: 0>} : vector<8x1xi32>
    %24 = vector.broadcast %22 : i32 to vector<8x1xi32>
    %25 = arith.addi %24, %23 : vector<8x1xi32>
    %c8_i32_15 = arith.constant 8 : i32
    %26 = vector.broadcast %c8_i32_15 : i32 to vector<8x1xi32>
    %27 = arith.cmpi slt, %25, %26 : vector<8x1xi32>
    %28 = arith.extui %27 : vector<8x1xi1> to vector<8x1xi32>
    %29 = arith.sitofp %28 : vector<8x1xi32> to vector<8x1xf32>
    %30 = vector.broadcast %29 : vector<8x1xf32> to vector<8x128xf32>
    %31 = arith.mulf %20, %30 : vector<8x128xf32>
    %cst_16 = arith.constant dense<0.000000e+00> : vector<128xf32>
    %32 = vector.multi_reduction <add>, %31, %cst_16 [0] : vector<8x128xf32> to vector<128xf32>
    %33 = vector.shape_cast %32 : vector<128xf32> to vector<1x128xf32>
    %34 = arith.mulf %31, %20 : vector<8x128xf32>
    %cst_17 = arith.constant dense<0.000000e+00> : vector<128xf32>
    %35 = vector.multi_reduction <add>, %34, %cst_17 [0] : vector<8x128xf32> to vector<128xf32>
    %36 = vector.shape_cast %35 : vector<128xf32> to vector<1x128xf32>
    %37 = tpu.concatenate %33, %36 in 0 : vector<1x128xf32>, vector<1x128xf32> -> vector<2x128xf32>
    %38 = vector.shape_cast %37 : vector<2x128xf32> to vector<1x2x128xf32>
    %c0_18 = arith.constant 0 : index
    %c0_19 = arith.constant 0 : index
    %c0_20 = arith.constant 0 : index
    %39 = vector.load %arg8[%c0_18, %c0_19, %c0_20] : memref<1x2x128xf32, #tpu.memory_space<vmem>>, vector<1x2x128xf32>
    tpu.vector_store %arg8[%c0_18, %c0_19, %c0_20], %38 {strides = array<i32>} : memref<1x2x128xf32, #tpu.memory_space<vmem>>, vector<1x2x128xf32>,
    return
  }
  func.func @transform_0(%arg0: i32) -> (i32, i32) {
    %c0_i32 = arith.constant 0 : i32
    %c0_i32_0 = arith.constant 0 : i32
    return %arg0, %c0_i32 : i32, i32
  }
  func.func @transform_1(%arg0: i32) -> (i32, i32) {
    %c0_i32 = arith.constant 0 : i32
    %c0_i32_0 = arith.constant 0 : i32
    %c0_i32_1 = arith.constant 0 : i32
    return %c0_i32, %c0_i32_0 : i32, i32
  }
  func.func @transform_2(%arg0: i32) -> (i32, i32) {
    %c0_i32 = arith.constant 0 : i32
    %c0_i32_0 = arith.constant 0 : i32
    %c0_i32_1 = arith.constant 0 : i32
    return %c0_i32, %c0_i32_0 : i32, i32
  }
  func.func @transform_3(%arg0: i32) -> (i32, i32) {
    %c0_i32 = arith.constant 0 : i32
    %c0_i32_0 = arith.constant 0 : i32
    %c0_i32_1 = arith.constant 0 : i32
    return %c0_i32, %c0_i32_0 : i32, i32
  }
  func.func @transform_4(%arg0: i32) -> (i32, i32) {
    %c0_i32 = arith.constant 0 : i32
    %c0_i32_0 = arith.constant 0 : i32
    %c0_i32_1 = arith.constant 0 : i32
    return %c0_i32, %c0_i32_0 : i32, i32
  }
  func.func @transform_5(%arg0: i32) -> (i32, i32) {
    %c0_i32 = arith.constant 0 : i32
    %c0_i32_0 = arith.constant 0 : i32
    %c0_i32_1 = arith.constant 0 : i32
    return %c0_i32, %c0_i32_0 : i32, i32
  }
  func.func @transform_6(%arg0: i32) -> (i32, i32) {
    %c0_i32 = arith.constant 0 : i32
    %c0_i32_0 = arith.constant 0 : i32
    return %arg0, %c0_i32 : i32, i32
  }
  func.func @transform_7(%arg0: i32) -> (i32, i32, i32) {
    %c0_i32 = arith.constant 0 : i32
    %c0_i32_0 = arith.constant 0 : i32
    %c0_i32_1 = arith.constant 0 : i32
    return %arg0, %c0_i32, %c0_i32_0 : i32, i32, i32
  }
}

module attributes {stable_mosaic.version = 11 : i64} {
  func.func @_mlp_stage_kernel(%arg0: i32, %arg1: memref<8x128xf32, #tpu.memory_space<vmem>>, %arg2: memref<2x128xf32, #tpu.memory_space<vmem>>, %arg3: memref<1x128xf32, #tpu.memory_space<vmem>>, %arg4: memref<1x128xf32, #tpu.memory_space<vmem>>, %arg5: memref<128x128xbf16, #tpu.memory_space<vmem>>, %arg6: memref<1x128xf32, #tpu.memory_space<vmem>>, %arg7: memref<8x128xf32, #tpu.memory_space<vmem>>) attributes {dimension_semantics = [#tpu.dimension_semantics<parallel>], iteration_bounds = array<i64: 1>, scalar_prefetch = 0 : i64, scratch_operands = 0 : i64, tpu.core_type = #tpu.core_type<tc>, window_params = [{transform_indices = @transform_0, window_bounds = array<i64: 8, 128>}, {pipeline_mode = #tpu.pipeline_mode<synchronous>, transform_indices = @transform_1, window_bounds = array<i64: 2, 128>}, {pipeline_mode = #tpu.pipeline_mode<synchronous>, transform_indices = @transform_2, window_bounds = array<i64: 1, 128>}, {pipeline_mode = #tpu.pipeline_mode<synchronous>, transform_indices = @transform_3, window_bounds = array<i64: 1, 128>}, {pipeline_mode = #tpu.pipeline_mode<synchronous>, transform_indices = @transform_4, window_bounds = array<i64: 128, 128>}, {pipeline_mode = #tpu.pipeline_mode<synchronous>, transform_indices = @transform_5, window_bounds = array<i64: 1, 128>}, {transform_indices = @transform_6, window_bounds = array<i64: 8, 128>}]} {
    %c0 = arith.constant 0 : index
    %c0_0 = arith.constant 0 : index
    %0 = vector.load %arg1[%c0, %c0_0] : memref<8x128xf32, #tpu.memory_space<vmem>>, vector<8x128xf32>
    %c0_1 = arith.constant 0 : index
    %c0_2 = arith.constant 0 : index
    %1 = vector.load %arg2[%c0_1, %c0_2] : memref<2x128xf32, #tpu.memory_space<vmem>>, vector<1x128xf32>
    %c1 = arith.constant 1 : index
    %c0_3 = arith.constant 0 : index
    %2 = vector.load %arg2[%c1, %c0_3] : memref<2x128xf32, #tpu.memory_space<vmem>>, vector<1x128xf32>
    %3 = vector.broadcast %1 : vector<1x128xf32> to vector<8x128xf32>
    %4 = arith.subf %0, %3 : vector<8x128xf32>
    %5 = vector.broadcast %2 : vector<1x128xf32> to vector<8x128xf32>
    %6 = arith.mulf %4, %5 : vector<8x128xf32>
    %c0_4 = arith.constant 0 : index
    %c0_5 = arith.constant 0 : index
    %7 = vector.load %arg3[%c0_4, %c0_5] : memref<1x128xf32, #tpu.memory_space<vmem>>, vector<1x128xf32>
    %8 = vector.broadcast %7 : vector<1x128xf32> to vector<8x128xf32>
    %9 = arith.mulf %6, %8 : vector<8x128xf32>
    %c0_6 = arith.constant 0 : index
    %c0_7 = arith.constant 0 : index
    %10 = vector.load %arg4[%c0_6, %c0_7] : memref<1x128xf32, #tpu.memory_space<vmem>>, vector<1x128xf32>
    %11 = vector.broadcast %10 : vector<1x128xf32> to vector<8x128xf32>
    %12 = arith.addf %9, %11 : vector<8x128xf32>
    %cst = arith.constant 0.000000e+00 : f32
    %13 = vector.broadcast %cst : f32 to vector<8x128xf32>
    %14 = arith.maximumf %12, %13 : vector<8x128xf32>
    %15 = arith.truncf %14 : vector<8x128xf32> to vector<8x128xbf16>
    %c0_8 = arith.constant 0 : index
    %c0_9 = arith.constant 0 : index
    %16 = vector.load %arg5[%c0_8, %c0_9] : memref<128x128xbf16, #tpu.memory_space<vmem>>, vector<128x128xbf16>
    %cst_10 = arith.constant dense<0.000000e+00> : vector<8x128xf32>
    %17 = tpu.matmul %15, %16, %cst_10 {dimension_numbers = #tpu.dot_dimension_numbers<[1], [0], [0], [1], [0, 0, 1, 1], [], []>} : vector<8x128xbf16>, vector<128x128xbf16>, vector<8x128xf32> -> vector<8x128xf32>
    %c0_11 = arith.constant 0 : index
    %c0_12 = arith.constant 0 : index
    %18 = vector.load %arg6[%c0_11, %c0_12] : memref<1x128xf32, #tpu.memory_space<vmem>>, vector<1x128xf32>
    %19 = vector.broadcast %18 : vector<1x128xf32> to vector<8x128xf32>
    %20 = arith.addf %17, %19 : vector<8x128xf32>
    %c0_13 = arith.constant 0 : index
    %c0_14 = arith.constant 0 : index
    %21 = vector.load %arg7[%c0_13, %c0_14] : memref<8x128xf32, #tpu.memory_space<vmem>>, vector<8x128xf32>
    tpu.vector_store %arg7[%c0_13, %c0_14], %20 {strides = array<i32>} : memref<8x128xf32, #tpu.memory_space<vmem>>, vector<8x128xf32>,
    return
  }
  func.func @transform_0(%arg0: i32) -> (i32, i32) {
    %c0_i32 = arith.constant 0 : i32
    %c0_i32_0 = arith.constant 0 : i32
    return %arg0, %c0_i32 : i32, i32
  }
  func.func @transform_1(%arg0: i32) -> (i32, i32) {
    %c0_i32 = arith.constant 0 : i32
    %c0_i32_0 = arith.constant 0 : i32
    %c0_i32_1 = arith.constant 0 : i32
    return %c0_i32, %c0_i32_0 : i32, i32
  }
  func.func @transform_2(%arg0: i32) -> (i32, i32) {
    %c0_i32 = arith.constant 0 : i32
    %c0_i32_0 = arith.constant 0 : i32
    %c0_i32_1 = arith.constant 0 : i32
    return %c0_i32, %c0_i32_0 : i32, i32
  }
  func.func @transform_3(%arg0: i32) -> (i32, i32) {
    %c0_i32 = arith.constant 0 : i32
    %c0_i32_0 = arith.constant 0 : i32
    %c0_i32_1 = arith.constant 0 : i32
    return %c0_i32, %c0_i32_0 : i32, i32
  }
  func.func @transform_4(%arg0: i32) -> (i32, i32) {
    %c0_i32 = arith.constant 0 : i32
    %c0_i32_0 = arith.constant 0 : i32
    %c0_i32_1 = arith.constant 0 : i32
    return %c0_i32, %c0_i32_0 : i32, i32
  }
  func.func @transform_5(%arg0: i32) -> (i32, i32) {
    %c0_i32 = arith.constant 0 : i32
    %c0_i32_0 = arith.constant 0 : i32
    %c0_i32_1 = arith.constant 0 : i32
    return %c0_i32, %c0_i32_0 : i32, i32
  }
  func.func @transform_6(%arg0: i32) -> (i32, i32) {
    %c0_i32 = arith.constant 0 : i32
    %c0_i32_0 = arith.constant 0 : i32
    return %arg0, %c0_i32 : i32, i32
  }
}

</mosaic_0001>

<llo_original>
// kernel: custom-call.2
$region0: #{custom-call.2}
  %s0 = inlined_call_operand.vmem [shape: f32[8,4,4], index: 0, kind: input, shape index: {}]
  %s1 = inlined_call_operand.vmem [shape: f32[8,4,4], index: 1, kind: input, shape index: {}]
  %s2 = inlined_call_operand.vmem [shape: f32[8,4,4], index: 2, kind: input, shape index: {}]
  %s3 = inlined_call_operand.vmem [shape: f32[8,4,4], index: 3, kind: input, shape index: {}]
  %s4 = inlined_call_operand.vmem [shape: f32[8,4], index: 4, kind: output, shape index: {0}]
  %s5 = inlined_call_operand.vmem [shape: f32[8,4], index: 5, kind: output, shape index: {1}]
  %s6 = inlined_call_operand.vmem [shape: f32[8,4,4], index: 6, kind: output, shape index: {2}]
  %s7 = inlined_call_operand.vmem [shape: f32[8,4,4], index: 7, kind: output, shape index: {3}]
  %s8 = inlined_call_operand.vmem [shape: f32[8,4,4], index: 8, kind: output, shape index: {4}]
  %s9 = inlined_call_operand.vmem [shape: f32[8,4,4], index: 9, kind: output, shape index: {5}]
  %10 = xla_tuple %s4, %s5, %s6, %s7, %s8, %s9
  $region1: #{custom-call.2} parent=0
    #allocation0 [shape = 'u8[4096]{0}', space=vmem, size = 0x1000, scoped, tag = 'operand span for operand 0']
    #allocation1 [shape = 'u8[4096]{0}', space=vmem, size = 0x1000, scoped, tag = 'packed  for operand 0']
    #allocation2 [shape = 'u8[4096]{0}', space=vmem, size = 0x1000, scoped, tag = 'operand span for operand 1']
    #allocation3 [shape = 'u8[4096]{0}', space=vmem, size = 0x1000, scoped, tag = 'packed  for operand 1']
    #allocation4 [shape = 'u8[4096]{0}', space=vmem, size = 0x1000, scoped, tag = 'operand span for operand 2']
    #allocation5 [shape = 'u8[4096]{0}', space=vmem, size = 0x1000, scoped, tag = 'packed  for operand 2']
    #allocation6 [shape = 'u8[4096]{0}', space=vmem, size = 0x1000, scoped, tag = 'operand span for operand 3']
    #allocation7 [shape = 'u8[4096]{0}', space=vmem, size = 0x1000, scoped, tag = 'packed  for operand 3']
    #allocation8 [shape = 'u8[8192]{0}', space=vmem, size = 0x2000, scoped, tag = 'operand span for operand 4']
    #allocation9 [shape = 'u8[8192]{0}', space=vmem, size = 0x2000, scoped, tag = 'operand span for operand 5']
    #allocation10 [shape = 'u8[4096]{0}', space=vmem, size = 0x1000, scoped, tag = 'operand span for operand 6']
    #allocation11 [shape = 'u8[4096]{0}', space=vmem, size = 0x1000, scoped, tag = 'packed  for operand 6']
    #allocation12 [shape = 'u8[4096]{0}', space=vmem, size = 0x1000, scoped, tag = 'operand span for operand 7']
    #allocation13 [shape = 'u8[4096]{0}', space=vmem, size = 0x1000, scoped, tag = 'packed  for operand 7']
    #allocation14 [shape = 'u8[4096]{0}', space=vmem, size = 0x1000, scoped, tag = 'operand span for operand 8']
    #allocation15 [shape = 'u8[4096]{0}', space=vmem, size = 0x1000, scoped, tag = 'packed  for operand 8']
    #allocation16 [shape = 'u8[4096]{0}', space=vmem, size = 0x1000, scoped, tag = 'operand span for operand 9']
    #allocation17 [shape = 'u8[4096]{0}', space=vmem, size = 0x1000, scoped, tag = 'packed  for operand 9']
    loop: start=0, step=1, limit=10
    $region2: #{custom-call.2} parent=1 // loop_pre_header
      _
    $region3: #{custom-call.2} parent=1 // loop_header
      %s12 = sphi 0, %s16
      %p13 = scmp.ge.s32.totalorder %s12, 10
      %s24 = sphi 0, %s26
      %s27 = sphi 0, %s24
      %s28 = sphi 0, %s27
      %s44 = sphi 0, %s28
      %s52 = sphi 0, %s54
      %s55 = sphi 0, %s52
      %s56 = sphi 0, %s55
      %s72 = sphi 0, %s56
    $region4: #{custom-call.2} parent=1 // loop_header_branch
      %15 = sbr.rel (%p13) target = $region8
    $region5: #{custom-call.2} parent=1 // loop_body
      %s17 = ssub.s32 %s12, 1
      %s18 = ssub.s32 %s12, 2
      %s19 = sadd.s32 %s12, 1
      %s20 = sshrl.u32 %s12, 3
      %s21 = sshrl.u32 %s19, 3
      %s22 = ssub.s32 %s20, %s21
      %p23 = scmp.eq.s32.totalorder %s22, 0
      %s25 = sadd.s32 %s24, 1
      %s26 = scalar_select %p23, %s24, %s25
      %p29 = pneg %p23
      %p30 = scmp.eq.s32.totalorder %s12, 7
      %p31 = por %p29, %p30
      %p32 = scmp.ne.s32.totalorder %s24, %s27
      %p33 = scmp.eq.s32.totalorder %s12, 0
      %p34 = por %p32, %p33
      %p35 = scmp.ne.s32.totalorder %s24, %s27
      %p36 = scmp.eq.s32.totalorder %s17, 7
      %p37 = por %p35, %p36
      %p38 = scmp.ne.s32.totalorder %s27, %s28
      %p39 = scmp.eq.s32.totalorder %s17, 0
      %p40 = por %p38, %p39
      %p41 = scmp.ne.s32.totalorder %s27, %s28
      %p42 = scmp.eq.s32.totalorder %s18, 7
      %p43 = por %p41, %p42
      %p45 = scmp.ne.s32.totalorder %s28, %s44
      %p46 = scmp.eq.s32.totalorder %s18, 0
      %p47 = por %p45, %p46
      %s48 = sshrl.u32 %s12, 3
      %s49 = sshrl.u32 %s19, 3
      %s50 = ssub.s32 %s48, %s49
      %p51 = scmp.eq.s32.totalorder %s50, 0
      %s53 = sadd.s32 %s52, 1
      %s54 = scalar_select %p51, %s52, %s53
      %p57 = pneg %p51
      %p58 = scmp.eq.s32.totalorder %s12, 7
      %p59 = por %p57, %p58
      %p60 = scmp.ne.s32.totalorder %s52, %s55
      %p61 = scmp.eq.s32.totalorder %s12, 0
      %p62 = por %p60, %p61
      %p63 = scmp.ne.s32.totalorder %s52, %s55
      %p64 = scmp.eq.s32.totalorder %s17, 7
      %p65 = por %p63, %p64
      %p66 = scmp.ne.s32.totalorder %s55, %s56
      %p67 = scmp.eq.s32.totalorder %s17, 0
      %p68 = por %p66, %p67
      %p69 = scmp.ne.s32.totalorder %s55, %s56
      %p70 = scmp.eq.s32.totalorder %s18, 7
      %p71 = por %p69, %p70
      %p73 = scmp.ne.s32.totalorder %s56, %s72
      %p74 = scmp.eq.s32.totalorder %s18, 0
      %p75 = por %p73, %p74
      %p76 = scmp.le.s32.totalorder 1, %s12
      %p77 = scmp.lt.s32.totalorder %s12, 9
      %p78 = pnand %p76, %p77
      %p79 = pneg %p78
      // Predicated region
      $region9: #{custom-call.2} parent=5 // pred_check
        _
      $region10: #{custom-call.2} parent=5 // pred_check_branch
        %81 = sbr.rel (%p78) target = $region12
      $region11: #{custom-call.2} parent=5 // pred_region
        %s82 = ssub.s32 %s12, 1
      $region12: #{custom-call.2} parent=5 // pred_fallthru
        _
      %p83 = scmp.lt.s32.totalorder %s12, 8
      // Predicated region
      $region13: #{custom-call.2} parent=5 // pred_check
        %p84 = pneg %p83
      $region14: #{custom-call.2} parent=5 // pred_check_branch
        %86 = sbr.rel (%p84) target = $region16
      $region15: #{custom-call.2} parent=5 // pred_region
        %s87 = sand.u32 %s12, 1
        %s88 = sand.u32 %s12, 1
        %s89 = smul.addr %s88, 4
        %s90 = scalar_lea.vmem [#allocation1], %s89
        %s91 = smul.addr %s12, 4
        %s92 = scalar_lea.vmem %s0, %s91
        // Predicated region
        $region17: #{custom-call.2} parent=15 // pred_check
          _
        $region18: #{custom-call.2} parent=15 // pred_check_branch
          %94 = sbr.rel (0) target = $region20
        $region19: #{custom-call.2} parent=15 // pred_region
          // Predicated region
          $region21: #{custom-call.2} parent=19 // pred_check
            _
          $region22: #{custom-call.2} parent=19 // pred_check_branch
            %96 = sbr.rel target = $region24
          $region23: #{custom-call.2} parent=19 // pred_region
            // Predicated region
            $region36: #{custom-call.2} parent=23 // pred_check
              _
            $region37: #{custom-call.2} parent=23 // pred_check_branch
              %112 = sbr.rel (0) target = $region39
            $region38: #{custom-call.2} parent=23 // pred_region
              %s114 = ssub.s32 16, 1
              loop: start=0, step=1, limit=1
              $region40: #{custom-call.2} parent=38 // loop_pre_header
                _
              $region41: #{custom-call.2} parent=38 // loop_header
                %s116 = sphi 0, %s120
                %p117 = scmp.ge.s32.totalorder %s116, 1
                %s121 = sphi %s92, %s92
                %s122 = sphi %s90, %s90
              $region42: #{custom-call.2} parent=38 // loop_header_branch
                %119 = sbr.rel (%p117) target = $region46
              $region43: #{custom-call.2} parent=38 // loop_body
                %v123 = vld [vmem:[%s121] sm:%s114]
                %124 = vst [vmem:[%s122] sm:%s114] %v123
              $region44: #{custom-call.2} parent=38 // loop_footer
                %s120 = sadd.s32 1, %s116
              $region45: #{custom-call.2} parent=38 // loop_footer_branch
                %115 = sbr.rel target = $region41
              $region46: #{custom-call.2} parent=38 // loop_exit
                _
            $region39: #{custom-call.2} parent=23 // pred_fallthru
              _
          $region24: #{custom-call.2} parent=19 // pred_fallthru
            _
          // Predicated region
          $region25: #{custom-call.2} parent=19 // pred_check
            _
          $region26: #{custom-call.2} parent=19 // pred_check_branch
            %98 = sbr.rel (0) target = $region28
          $region27: #{custom-call.2} parent=19 // pred_region
            %s100 = ssub.s32 16, 1
            loop: start=0, step=1, limit=1
            $region29: #{custom-call.2} parent=27 // loop_pre_header
              _
            $region30: #{custom-call.2} parent=27 // loop_header
              %s102 = sphi 0, %s106
              %p103 = scmp.ge.s32.totalorder %s102, 1
              %s107 = sphi %s92, %s92
              %s108 = sphi %s90, %s90
            $region31: #{custom-call.2} parent=27 // loop_header_branch
              %105 = sbr.rel (%p103) target = $region35
            $region32: #{custom-call.2} parent=27 // loop_body
              %v109 = vld [vmem:[%s107] sm:%s100]
              %110 = vst [vmem:[%s108] sm:%s100] %v109
            $region33: #{custom-call.2} parent=27 // loop_footer
              %s106 = sadd.s32 1, %s102
            $region34: #{custom-call.2} parent=27 // loop_footer_branch
              %101 = sbr.rel target = $region30
            $region35: #{custom-call.2} parent=27 // loop_exit
              _
          $region28: #{custom-call.2} parent=19 // pred_fallthru
            _
        $region20: #{custom-call.2} parent=15 // pred_fallthru
          _
        %125 = vnop
        %s126 = sand.u32 %s12, 1
        %s127 = sand.u32 %s12, 1
        %s128 = smul.addr %s127, 4
        %s129 = scalar_lea.vmem [#allocation3], %s128
        %s130 = smul.addr %s12, 4
        %s131 = scalar_lea.vmem %s1, %s130
        // Predicated region
        $region47: #{custom-call.2} parent=15 // pred_check
          _
        $region48: #{custom-call.2} parent=15 // pred_check_branch
          %133 = sbr.rel (0) target = $region50
        $region49: #{custom-call.2} parent=15 // pred_region
          // Predicated region
          $region51: #{custom-call.2} parent=49 // pred_check
            _
          $region52: #{custom-call.2} parent=49 // pred_check_branch
            %135 = sbr.rel target = $region54
          $region53: #{custom-call.2} parent=49 // pred_region
            // Predicated region
            $region66: #{custom-call.2} parent=53 // pred_check
              _
            $region67: #{custom-call.2} parent=53 // pred_check_branch
              %151 = sbr.rel (0) target = $region69
            $region68: #{custom-call.2} parent=53 // pred_region
              %s153 = ssub.s32 16, 1
              loop: start=0, step=1, limit=1
              $region70: #{custom-call.2} parent=68 // loop_pre_header
                _
              $region71: #{custom-call.2} parent=68 // loop_header
                %s155 = sphi 0, %s159
                %p156 = scmp.ge.s32.totalorder %s155, 1
                %s160 = sphi %s131, %s131
                %s161 = sphi %s129, %s129
              $region72: #{custom-call.2} parent=68 // loop_header_branch
                %158 = sbr.rel (%p156) target = $region76
              $region73: #{custom-call.2} parent=68 // loop_body
                %v162 = vld [vmem:[%s160] sm:%s153]
                %163 = vst [vmem:[%s161] sm:%s153] %v162
              $region74: #{custom-call.2} parent=68 // loop_footer
                %s159 = sadd.s32 1, %s155
              $region75: #{custom-call.2} parent=68 // loop_footer_branch
                %154 = sbr.rel target = $region71
              $region76: #{custom-call.2} parent=68 // loop_exit
                _
            $region69: #{custom-call.2} parent=53 // pred_fallthru
              _
          $region54: #{custom-call.2} parent=49 // pred_fallthru
            _
          // Predicated region
          $region55: #{custom-call.2} parent=49 // pred_check
            _
          $region56: #{custom-call.2} parent=49 // pred_check_branch
            %137 = sbr.rel (0) target = $region58
          $region57: #{custom-call.2} parent=49 // pred_region
            %s139 = ssub.s32 16, 1
            loop: start=0, step=1, limit=1
            $region59: #{custom-call.2} parent=57 // loop_pre_header
              _
            $region60: #{custom-call.2} parent=57 // loop_header
              %s141 = sphi 0, %s145
              %p142 = scmp.ge.s32.totalorder %s141, 1
              %s146 = sphi %s131, %s131
              %s147 = sphi %s129, %s129
            $region61: #{custom-call.2} parent=57 // loop_header_branch
              %144 = sbr.rel (%p142) target = $region65
            $region62: #{custom-call.2} parent=57 // loop_body
              %v148 = vld [vmem:[%s146] sm:%s139]
              %149 = vst [vmem:[%s147] sm:%s139] %v148
            $region63: #{custom-call.2} parent=57 // loop_footer
              %s145 = sadd.s32 1, %s141
            $region64: #{custom-call.2} parent=57 // loop_footer_branch
              %140 = sbr.rel target = $region60
            $region65: #{custom-call.2} parent=57 // loop_exit
              _
          $region58: #{custom-call.2} parent=49 // pred_fallthru
            _
        $region50: #{custom-call.2} parent=15 // pred_fallthru
          _
        %164 = vnop
        %s165 = sand.u32 %s12, 1
        %s166 = sand.u32 %s12, 1
        %s167 = smul.addr %s166, 4
        %s168 = scalar_lea.vmem [#allocation5], %s167
        %s169 = smul.addr %s12, 4
        %s170 = scalar_lea.vmem %s2, %s169
        // Predicated region
        $region77: #{custom-call.2} parent=15 // pred_check
          _
        $region78: #{custom-call.2} parent=15 // pred_check_branch
          %172 = sbr.rel (0) target = $region80
        $region79: #{custom-call.2} parent=15 // pred_region
          // Predicated region
          $region81: #{custom-call.2} parent=79 // pred_check
            _
          $region82: #{custom-call.2} parent=79 // pred_check_branch
            %174 = sbr.rel target = $region84
          $region83: #{custom-call.2} parent=79 // pred_region
            // Predicated region
            $region96: #{custom-call.2} parent=83 // pred_check
              _
            $region97: #{custom-call.2} parent=83 // pred_check_branch
              %190 = sbr.rel (0) target = $region99
            $region98: #{custom-call.2} parent=83 // pred_region
              %s192 = ssub.s32 16, 1
              loop: start=0, step=1, limit=1
              $region100: #{custom-call.2} parent=98 // loop_pre_header
                _
              $region101: #{custom-call.2} parent=98 // loop_header
                %s194 = sphi 0, %s198
                %p195 = scmp.ge.s32.totalorder %s194, 1
                %s199 = sphi %s170, %s170
                %s200 = sphi %s168, %s168
              $region102: #{custom-call.2} parent=98 // loop_header_branch
                %197 = sbr.rel (%p195) target = $region106
              $region103: #{custom-call.2} parent=98 // loop_body
                %v201 = vld [vmem:[%s199] sm:%s192]
                %202 = vst [vmem:[%s200] sm:%s192] %v201
              $region104: #{custom-call.2} parent=98 // loop_footer
                %s198 = sadd.s32 1, %s194
              $region105: #{custom-call.2} parent=98 // loop_footer_branch
                %193 = sbr.rel target = $region101
              $region106: #{custom-call.2} parent=98 // loop_exit
                _
            $region99: #{custom-call.2} parent=83 // pred_fallthru
              _
          $region84: #{custom-call.2} parent=79 // pred_fallthru
            _
          // Predicated region
          $region85: #{custom-call.2} parent=79 // pred_check
            _
          $region86: #{custom-call.2} parent=79 // pred_check_branch
            %176 = sbr.rel (0) target = $region88
          $region87: #{custom-call.2} parent=79 // pred_region
            %s178 = ssub.s32 16, 1
            loop: start=0, step=1, limit=1
            $region89: #{custom-call.2} parent=87 // loop_pre_header
              _
            $region90: #{custom-call.2} parent=87 // loop_header
              %s180 = sphi 0, %s184
              %p181 = scmp.ge.s32.totalorder %s180, 1
              %s185 = sphi %s170, %s170
              %s186 = sphi %s168, %s168
            $region91: #{custom-call.2} parent=87 // loop_header_branch
              %183 = sbr.rel (%p181) target = $region95
            $region92: #{custom-call.2} parent=87 // loop_body
              %v187 = vld [vmem:[%s185] sm:%s178]
              %188 = vst [vmem:[%s186] sm:%s178] %v187
            $region93: #{custom-call.2} parent=87 // loop_footer
              %s184 = sadd.s32 1, %s180
            $region94: #{custom-call.2} parent=87 // loop_footer_branch
              %179 = sbr.rel target = $region90
            $region95: #{custom-call.2} parent=87 // loop_exit
              _
          $region88: #{custom-call.2} parent=79 // pred_fallthru
            _
        $region80: #{custom-call.2} parent=15 // pred_fallthru
          _
        %203 = vnop
        %s204 = sand.u32 %s12, 1
        %s205 = sand.u32 %s12, 1
        %s206 = smul.addr %s205, 4
        %s207 = scalar_lea.vmem [#allocation7], %s206
        %s208 = smul.addr %s12, 4
        %s209 = scalar_lea.vmem %s3, %s208
        // Predicated region
        $region107: #{custom-call.2} parent=15 // pred_check
          _
        $region108: #{custom-call.2} parent=15 // pred_check_branch
          %211 = sbr.rel (0) target = $region110
        $region109: #{custom-call.2} parent=15 // pred_region
          // Predicated region
          $region111: #{custom-call.2} parent=109 // pred_check
            _
          $region112: #{custom-call.2} parent=109 // pred_check_branch
            %213 = sbr.rel target = $region114
          $region113: #{custom-call.2} parent=109 // pred_region
            // Predicated region
            $region126: #{custom-call.2} parent=113 // pred_check
              _
            $region127: #{custom-call.2} parent=113 // pred_check_branch
              %229 = sbr.rel (0) target = $region129
            $region128: #{custom-call.2} parent=113 // pred_region
              %s231 = ssub.s32 16, 1
              loop: start=0, step=1, limit=1
              $region130: #{custom-call.2} parent=128 // loop_pre_header
                _
              $region131: #{custom-call.2} parent=128 // loop_header
                %s233 = sphi 0, %s237
                %p234 = scmp.ge.s32.totalorder %s233, 1
                %s238 = sphi %s209, %s209
                %s239 = sphi %s207, %s207
              $region132: #{custom-call.2} parent=128 // loop_header_branch
                %236 = sbr.rel (%p234) target = $region136
              $region133: #{custom-call.2} parent=128 // loop_body
                %v240 = vld [vmem:[%s238] sm:%s231]
                %241 = vst [vmem:[%s239] sm:%s231] %v240
              $region134: #{custom-call.2} parent=128 // loop_footer
                %s237 = sadd.s32 1, %s233
              $region135: #{custom-call.2} parent=128 // loop_footer_branch
                %232 = sbr.rel target = $region131
              $region136: #{custom-call.2} parent=128 // loop_exit
                _
            $region129: #{custom-call.2} parent=113 // pred_fallthru
              _
          $region114: #{custom-call.2} parent=109 // pred_fallthru
            _
          // Predicated region
          $region115: #{custom-call.2} parent=109 // pred_check
            _
          $region116: #{custom-call.2} parent=109 // pred_check_branch
            %215 = sbr.rel (0) target = $region118
          $region117: #{custom-call.2} parent=109 // pred_region
            %s217 = ssub.s32 16, 1
            loop: start=0, step=1, limit=1
            $region119: #{custom-call.2} parent=117 // loop_pre_header
              _
            $region120: #{custom-call.2} parent=117 // loop_header
              %s219 = sphi 0, %s223
              %p220 = scmp.ge.s32.totalorder %s219, 1
              %s224 = sphi %s209, %s209
              %s225 = sphi %s207, %s207
            $region121: #{custom-call.2} parent=117 // loop_header_branch
              %222 = sbr.rel (%p220) target = $region125
            $region122: #{custom-call.2} parent=117 // loop_body
              %v226 = vld [vmem:[%s224] sm:%s217]
              %227 = vst [vmem:[%s225] sm:%s217] %v226
            $region123: #{custom-call.2} parent=117 // loop_footer
              %s223 = sadd.s32 1, %s219
            $region124: #{custom-call.2} parent=117 // loop_footer_branch
              %218 = sbr.rel target = $region120
            $region125: #{custom-call.2} parent=117 // loop_exit
              _
          $region118: #{custom-call.2} parent=109 // pred_fallthru
            _
        $region110: #{custom-call.2} parent=15 // pred_fallthru
          _
        %242 = vnop
      $region16: #{custom-call.2} parent=5 // pred_fallthru
        _
      %p243 = scmp.le.s32.totalorder 1, %s12
      %p244 = scmp.lt.s32.totalorder %s12, 9
      %p245 = pnand %p243, %p244
      %p246 = pneg %p245
      // Predicated region
      $region137: #{custom-call.2} parent=5 // pred_check
        _
      $region138: #{custom-call.2} parent=5 // pred_check_branch
        %248 = sbr.rel (%p245) target = $region140
      $region139: #{custom-call.2} parent=5 // pred_region
        #allocation18 [shape = 'f32[4,4]{1,0}', space=vmem, size = 0x1000, scoped, tag = 'a top-left matrix']
        #allocation19 [shape = 'f32[4,4]{1,0}', space=vmem, size = 0x1000, scoped, tag = 'a top-right matrix']
        #allocation20 [shape = 'f32[4,4]{1,0}', space=vmem, size = 0x1000, scoped, tag = 'a bottom-left matrix']
        #allocation21 [shape = 'f32[4,4]{1,0}', space=vmem, size = 0x1000, scoped, tag = 'a bottom-right matrix']
        %s249 = ssub.s32 %s12, 1
        %s250 = sand.u32 %s17, 1
        %s251 = sand.u32 %s17, 1
        %s252 = smul.addr %s251, 4
        %s253 = scalar_lea.vmem [#allocation1], %s252
        %s254 = sand.u32 %s17, 1
        %s255 = sand.u32 %s17, 1
        %s256 = smul.addr %s255, 4
        %s257 = scalar_lea.vmem [#allocation3], %s256
        %s258 = sand.u32 %s17, 1
        %s259 = sand.u32 %s17, 1
        %s260 = smul.addr %s259, 4
        %s261 = scalar_lea.vmem [#allocation5], %s260
        %s262 = sand.u32 %s17, 1
        %s263 = sand.u32 %s17, 1
        %s264 = smul.addr %s263, 4
        %s265 = scalar_lea.vmem [#allocation7], %s264
        %s266 = sand.u32 %s17, 1
        %s267 = sand.u32 %s17, 1
        %s268 = smul.addr %s267, 4
        %s269 = scalar_lea.vmem [#allocation1], %s268
        %s270 = sand.u32 %s17, 1
        %s271 = sand.u32 %s17, 1
        %s272 = smul.addr %s271, 4
        %s273 = scalar_lea.vmem [#allocation3], %s272
        %s274 = sand.u32 %s17, 1
        %s275 = sand.u32 %s17, 1
        %s276 = smul.addr %s275, 4
        %s277 = scalar_lea.vmem [#allocation5], %s276
        %s278 = sand.u32 %s17, 1
        %s279 = sand.u32 %s17, 1
        %s280 = smul.addr %s279, 4
        %s281 = scalar_lea.vmem [#allocation7], %s280
        %p282 = pneg %p40
        %p283 = pneg %p37
        %s284 = sand.u32 %s27, 1
        %s285 = sand.u32 %s27, 1
        %s286 = smul.addr %s285, 8
        %s287 = scalar_lea.vmem [#allocation8], %s286
        %p288 = pneg %p68
        %p289 = pneg %p65
        %s290 = sand.u32 %s55, 1
        %s291 = sand.u32 %s55, 1
        %s292 = smul.addr %s291, 8
        %s293 = scalar_lea.vmem [#allocation9], %s292
        %s294 = sand.u32 %s17, 1
        %s295 = sand.u32 %s17, 1
        %s296 = smul.addr %s295, 4
        %s297 = scalar_lea.vmem [#allocation11], %s296
        %s298 = sand.u32 %s17, 1
        %s299 = sand.u32 %s17, 1
        %s300 = smul.addr %s299, 4
        %s301 = scalar_lea.vmem [#allocation13], %s300
        %s302 = sand.u32 %s17, 1
        %s303 = sand.u32 %s17, 1
        %s304 = smul.addr %s303, 4
        %s305 = scalar_lea.vmem [#allocation15], %s304
        %s306 = sand.u32 %s17, 1
        %s307 = sand.u32 %s17, 1
        %s308 = smul.addr %s307, 4
        %s309 = scalar_lea.vmem [#allocation17], %s308
        %s311 = sshll.u32 1, 4
        %s312 = ssub.s32 %s311, 1
        %v313 = vld [vmem:[%s269] sm:%s312]
        %314 = vst [vmem:[#allocation0] sm:%s312] %v313
        %s316 = sshll.u32 1, 4
        %s317 = ssub.s32 %s316, 1
        %v318 = vld [vmem:[%s273] sm:%s317]
        %319 = vst [vmem:[#allocation2] sm:%s317] %v318
        %s321 = sshll.u32 1, 4
        %s322 = ssub.s32 %s321, 1
        %v323 = vld [vmem:[%s277] sm:%s322]
        %324 = vst [vmem:[#allocation4] sm:%s322] %v323
        %s326 = sshll.u32 1, 4
        %s327 = ssub.s32 %s326, 1
        %v328 = vld [vmem:[%s281] sm:%s327]
        %329 = vst [vmem:[#allocation6] sm:%s327] %v328
        %s330 = sshrl.u32 %s17, 3
        %s331 = sshrl.u32 %s17, 3
        %s332 = smov [#allocation18]
        %v333 = vld [vmem:[#allocation0] sm:$0xff]
        %334 = vst [vmem:[%s332] sm:$0xff] %v333
        %s335 = smov [#allocation19]
        %v336 = vld [vmem:[#allocation2] sm:$0xff]
        %337 = vst [vmem:[%s335] sm:$0xff] %v336
        %s338 = smov [#allocation20]
        %v339 = vld [vmem:[#allocation4] sm:$0xff]
        %340 = vst [vmem:[%s338] sm:$0xff] %v339
        %s341 = smov [#allocation21]
        %v342 = vld [vmem:[#allocation6] sm:$0xff]
        %343 = vst [vmem:[%s341] sm:$0xff] %v342
        %344 = vst [vmem:[#allocation10] sm:$0xff] 0.0
        %345 = vst [vmem:[#allocation12] sm:$0xff] 0.0
        %346 = vst [vmem:[#allocation14] sm:$0xff] 0.0
        %347 = vst [vmem:[#allocation16] sm:$0xff] 0.0
        %s348 = smov [#allocation10]
        %v349 = vlaneseq
        %v350 = vand.u32 %v349, 127
        %v351 = vmov %v350
        %v352 = vlaneseq
        %v353 = vshrl.u32 %v352, 7
        %v354 = vmov %v353
        %v355 = vld [vmem:[%s348] sm:$0xf]
        %vm358 = vcmp.eq.s32.totalorder %v354, %v351
        %v359 = vsel %vm358, 1.0, %v355
        %360 = vst [vmem:[%s348] sm:$0xf] %v359
        %s361 = smov [#allocation16]
        %v362 = vlaneseq
        %v363 = vand.u32 %v362, 127
        %v364 = vmov %v363
        %v365 = vlaneseq
        %v366 = vshrl.u32 %v365, 7
        %v367 = vmov %v366
        %v368 = vld [vmem:[%s361] sm:$0xf]
        %vm371 = vcmp.eq.s32.totalorder %v367, %v364
        %v372 = vsel %vm371, 1.0, %v368
        %373 = vst [vmem:[%s361] sm:$0xf] %v372
        // While loop
        $region141: #{custom-call.2} parent=139 // loop_pre_header
          _
        $region142: #{custom-call.2} parent=139 // loop_header
          %s375 = sphi 0, %s917
          %v376 = vlaneseq
          %v377 = vand.u32 %v376, 127
          %v378 = vmov %v377
          %v379 = vlaneseq
          %v380 = vshrl.u32 %v379, 7
          %v381 = vmov %v380
          %s382 = smov [#allocation18]
          %v383 = vlaneseq
          %v384 = vand.u32 %v383, 127
          %vm385 = vcmp.ge.s32.totalorder %v384, 0
          %vm386 = vcmp.lt.s32.totalorder %v384, 4
          %vm387 = vmand %vm385, %vm386
          %v388 = vld [vmem:[%s382] sm:$0xf]
          %v389 = vsel %vm387, %v388, 0.0
          %v390 = vmul.f32 %v389, %v389
          %vm393 = vcmp.eq.s32.totalorder %v381, %v378
          %v394 = vsel %vm393, 0.0, %v390
          %v395 = vlaneseq
          %v396 = vand.u32 %v395, 127
          %v397 = vmov %v396
          %v398 = vlaneseq
          %v399 = vshrl.u32 %v398, 7
          %v400 = vmov %v399
          %s401 = smov [#allocation19]
          %v402 = vlaneseq
          %v403 = vand.u32 %v402, 127
          %vm404 = vcmp.ge.s32.totalorder %v403, 0
          %vm405 = vcmp.lt.s32.totalorder %v403, 4
          %vm406 = vmand %vm404, %vm405
          %v407 = vld [vmem:[%s401] sm:$0xf]
          %v408 = vsel %vm406, %v407, 0.0
          %v409 = vmul.f32 %v408, %v408
          %v410 = vadd.f32 %v394, %v409
          %v411 = vadd.f32 %v390, %v409
          %v412 = vlaneseq
          %v413 = vand.u32 %v412, 127
          %v414 = vmov %v413
          %v415 = vlaneseq
          %v416 = vshrl.u32 %v415, 7
          %v417 = vmov %v416
          %s418 = smov [#allocation20]
          %v419 = vlaneseq
          %v420 = vand.u32 %v419, 127
          %vm421 = vcmp.ge.s32.totalorder %v420, 0
          %vm422 = vcmp.lt.s32.totalorder %v420, 4
          %vm423 = vmand %vm421, %vm422
          %v424 = vld [vmem:[%s418] sm:$0xf]
          %v425 = vsel %vm423, %v424, 0.0
          %v426 = vmul.f32 %v425, %v425
          %v427 = vadd.f32 %v410, %v426
          %v428 = vadd.f32 %v411, %v426
          %v429 = vlaneseq
          %v430 = vand.u32 %v429, 127
          %v431 = vmov %v430
          %v432 = vlaneseq
          %v433 = vshrl.u32 %v432, 7
          %v434 = vmov %v433
          %s435 = smov [#allocation21]
          %v436 = vlaneseq
          %v437 = vand.u32 %v436, 127
          %vm438 = vcmp.ge.s32.totalorder %v437, 0
          %vm439 = vcmp.lt.s32.totalorder %v437, 4
          %vm440 = vmand %vm438, %vm439
          %v441 = vld [vmem:[%s435] sm:$0xf]
          %v442 = vsel %vm440, %v441, 0.0
          %v443 = vmul.f32 %v442, %v442
          %vm446 = vcmp.eq.s32.totalorder %v434, %v431
          %v447 = vsel %vm446, 0.0, %v443
          %v448 = vadd.f32 %v427, %v447
          %v449 = vadd.f32 %v428, %v443
          %450 = vadd.xlane.f32.xlu0 %v449
          %v451 = vpop.xlane.xlu0 %450
          %v452 = vrot.slane %v451, 4
          %v453 = vadd.f32 %v451, %v452
          %v454 = vrot.slane %v453, 2
          %v455 = vadd.f32 %v453, %v454
          %v456 = vrot.slane %v455, 1
          %v457 = vadd.f32 %v455, %v456
          %458 = vadd.xlane.f32.xlu0 %v448
          %v459 = vpop.xlane.xlu0 %458
          %v460 = vrot.slane %v459, 4
          %v461 = vadd.f32 %v459, %v460
          %v462 = vrot.slane %v461, 2
          %v463 = vadd.f32 %v461, %v462
          %v464 = vrot.slane %v463, 1
          %v465 = vadd.f32 %v463, %v464
          %s466 = vtos %v465
          %s467 = vtos %v457
          %s468 = smul.f32 1e-10, %s467
          %p469 = scmp.le.f32.partialorder %s466, %s468
          %p470 = scmp.ge.s32.totalorder %s375, 15
          %p471 = por %p469, %p470
        $region143: #{custom-call.2} parent=139 // loop_header_branch
          %919 = sbr.rel (%p471) target = $region147
        $region144: #{custom-call.2} parent=139 // loop_body
          loop: start=0, step=1, limit=7
          $region148: #{custom-call.2} parent=144 // loop_pre_header
            _
          $region149: #{custom-call.2} parent=144 // loop_header
            %s473 = sphi 0, %s477
            %p474 = scmp.ge.s32.totalorder %s473, 7
          $region150: #{custom-call.2} parent=144 // loop_header_branch
            %476 = sbr.rel (%p474) target = $region154
          $region151: #{custom-call.2} parent=144 // loop_body
            #allocation22 [shape = 'f32[1024]{0}', space=vmem, size = 0x1000, scoped, tag = 'a_tl_diag vmem']
            #allocation23 [shape = 'f32[1024]{0}', space=vmem, size = 0x1000, scoped, tag = 'a_tr_diag vmem']
            #allocation24 [shape = 'f32[1024]{0}', space=vmem, size = 0x1000, scoped, tag = 'a_br_diag vmem']
            #allocation25 [shape = 'f32[1024]{0}', space=vmem, size = 0x1000, scoped, tag = 'rt1 vmem']
            #allocation26 [shape = 'f32[1024]{0}', space=vmem, size = 0x1000, scoped, tag = 'rt2 vmem']
            #allocation27 [shape = 'f32[1024]{0}', space=vmem, size = 0x1000, scoped, tag = 'c vmem']
            #allocation28 [shape = 'f32[1024]{0}', space=vmem, size = 0x1000, scoped, tag = 's vmem']
            #allocation29 [shape = 'f32[4096]{0}', space=vmem, size = 0x4000, scoped, tag = 'c broadcast']
            #allocation30 [shape = 'f32[4096]{0}', space=vmem, size = 0x4000, scoped, tag = 's broadcast']
            %s478 = smov [#allocation18]
            %s479 = smov [#allocation22]
            %v480 = vlaneseq
            %v481 = vand.u32 %v480, 127
            %v482 = vmov %v481
            %v483 = vlaneseq
            %v484 = vshrl.u32 %v483, 7
            %v485 = vmov %v484
            %v486 = vld [vmem:[%s478] sm:$0xf]
            %vm489 = vcmp.eq.s32.totalorder %v485, %v482
            %v490 = vsel %vm489, %v486, 0.0
            %v491 = vrot.slane %v490, 4
            %v492 = vadd.f32 %v490, %v491
            %v493 = vrot.slane %v492, 2
            %v494 = vadd.f32 %v492, %v493
            %v495 = vrot.slane %v494, 1
            %v496 = vadd.f32 %v494, %v495
            %497 = vst [vmem:[%s479] sm:$0x1] %v496
            %s498 = smov [#allocation19]
            %s499 = smov [#allocation23]
            %v500 = vlaneseq
            %v501 = vand.u32 %v500, 127
            %v502 = vmov %v501
            %v503 = vlaneseq
            %v504 = vshrl.u32 %v503, 7
            %v505 = vmov %v504
            %v506 = vld [vmem:[%s498] sm:$0xf]
            %vm509 = vcmp.eq.s32.totalorder %v505, %v502
            %v510 = vsel %vm509, %v506, 0.0
            %v511 = vrot.slane %v510, 4
            %v512 = vadd.f32 %v510, %v511
            %v513 = vrot.slane %v512, 2
            %v514 = vadd.f32 %v512, %v513
            %v515 = vrot.slane %v514, 1
            %v516 = vadd.f32 %v514, %v515
            %517 = vst [vmem:[%s499] sm:$0x1] %v516
            %s518 = smov [#allocation21]
            %s519 = smov [#allocation24]
            %v520 = vlaneseq
            %v521 = vand.u32 %v520, 127
            %v522 = vmov %v521
            %v523 = vlaneseq
            %v524 = vshrl.u32 %v523, 7
            %v525 = vmov %v524
            %v526 = vld [vmem:[%s518] sm:$0xf]
            %vm529 = vcmp.eq.s32.totalorder %v525, %v522
            %v530 = vsel %vm529, %v526, 0.0
            %v531 = vrot.slane %v530, 4
            %v532 = vadd.f32 %v530, %v531
            %v533 = vrot.slane %v532, 2
            %v534 = vadd.f32 %v532, %v533
            %v535 = vrot.slane %v534, 1
            %v536 = vadd.f32 %v534, %v535
            %537 = vst [vmem:[%s519] sm:$0x1] %v536
            %s538 = smov [#allocation27]
            %s539 = smov [#allocation28]
            %s540 = smov [#allocation22]
            %v541 = vld [vmem:[%s540] sm:$0xff]
            %s542 = smov [#allocation23]
            %v543 = vld [vmem:[%s542] sm:$0xff]
            %s544 = smov [#allocation24]
            %v545 = vld [vmem:[%s544] sm:$0xff]
            %v546 = vsub.f32 %v545, %v541
            %v547 = vmul.f32 2.0, %v543
            %v548 = vrcp.pop %v547
            %v549 = vmul.f32 %v546, %v548
            %vm550 = vcmp.ge.f32.partialorder %v549, 0.0
            %v551 = vmul.f32 %v549, %v549
            %v552 = vadd.f32 1.0, %v551
            %v553 = vrsqrt.pop %v552
            %v554 = vmul.f32 %v552, %v553
            %vm555 = vcmp.eq.f32.partialorder %v552, inf
            %v556 = vsel %vm555, %v552, %v554
            %vm557 = vcmp.eq.f32.partialorder %v552, 0.0
            %v558 = vand.u32 %v552, 2147483648
            %v559 = vsel %vm557, %v558, %v556
            %v560 = vxor.u32 %v559, 2147483648
            %v561 = vsel %vm550, %v559, %v560
            %v562 = vadd.f32 %v549, %v561
            %v563 = vrcp.pop %v562
            %v564 = vand.u32 2147483647, %v541
            %v565 = vand.u32 2147483647, %v543
            %v566 = vand.u32 2147483647, %v545
            %v567 = vmin.f32 %v564, %v566
            %v568 = vmul.f32 1.1920929e-08, %v567
            %vm569 = vcmp.le.f32.partialorder %v565, %v568
            %v570 = vsel %vm569, 0.0, %v563
            %v571 = vmul.f32 %v570, %v570
            %v572 = vadd.f32 1.0, %v571
            %v573 = vrsqrt.pop %v572
            %v574 = vmul.f32 %v570, %v573
            %v575 = vmul.f32 %v570, %v543
            %v576 = vsub.f32 %v541, %v575
            %v577 = vmul.f32 %v570, %v543
            %v578 = vadd.f32 %v545, %v577
            %s579 = smov [#allocation25]
            %580 = vst [vmem:[%s579] sm:$0xff] %v576
            %s581 = smov [#allocation26]
            %582 = vst [vmem:[%s581] sm:$0xff] %v578
            %s583 = smov %s538
            %584 = vst [vmem:[%s583] sm:$0xff] %v573
            %s585 = smov %s539
            %586 = vst [vmem:[%s585] sm:$0xff] %v574
            %s587 = smov [#allocation27]
            %v588 = vld [vmem:[%s587] ss:$0 sm:$0xff]
            %v589 = vlaneseq
            %v590 = vand.u32 %v589, 127
            %v591 = vmov %v590
            %v592 = vlaneseq
            %v593 = vshrl.u32 %v592, 7
            %v594 = vmov %v593
            %vm596 = vcmp.eq.s32.totalorder %v594, %v591
            %v597 = vsel %vm596, %v588, 0.0
            %598 = vadd.xlane.f32.xlu0 %v597
            %v599 = vpop.xlane.xlu0 %598
            %s600 = smov [#allocation29]
            %601 = vst [vmem:[%s600] sm:$0xff] %v599
            %s602 = smov [#allocation28]
            %v603 = vld [vmem:[%s602] ss:$0 sm:$0xff]
            %v604 = vlaneseq
            %v605 = vand.u32 %v604, 127
            %v606 = vmov %v605
            %v607 = vlaneseq
            %v608 = vshrl.u32 %v607, 7
            %v609 = vmov %v608
            %vm611 = vcmp.eq.s32.totalorder %v609, %v606
            %v612 = vsel %vm611, %v603, 0.0
            %613 = vadd.xlane.f32.xlu0 %v612
            %v614 = vpop.xlane.xlu0 %613
            %s615 = smov [#allocation30]
            %616 = vst [vmem:[%s615] sm:$0xff] %v614
            %s617 = smov [#allocation29]
            %v618 = vld [vmem:[%s617] sm:$0xff]
            %s619 = smov [#allocation30]
            %v620 = vld [vmem:[%s619] sm:$0xff]
            %s621 = smov [#allocation18]
            %s622 = smov [#allocation19]
            %s623 = smov [#allocation20]
            %s624 = smov [#allocation21]
            %v625 = vld [vmem:[%s621] sm:$0xf]
            %v626 = vld [vmem:[%s622] sm:$0xf]
            %v627 = vld [vmem:[%s623] sm:$0xf]
            %v628 = vld [vmem:[%s624] sm:$0xf]
            %v629 = vmul.f32 %v618, %v625
            %v630 = vmul.f32 %v620, %v627
            %v631 = vsub.f32 %v629, %v630
            %v632 = vmul.f32 %v618, %v626
            %v633 = vmul.f32 %v620, %v628
            %v634 = vsub.f32 %v632, %v633
            %v635 = vmul.f32 %v620, %v625
            %v636 = vmul.f32 %v618, %v627
            %v637 = vadd.f32 %v635, %v636
            %v638 = vmul.f32 %v620, %v626
            %v639 = vmul.f32 %v618, %v628
            %v640 = vadd.f32 %v638, %v639
            %641 = vst [vmem:[%s621] sm:$0xf] %v631
            %642 = vst [vmem:[%s622] sm:$0xf] %v634
            %643 = vst [vmem:[%s623] sm:$0xf] %v637
            %644 = vst [vmem:[%s624] sm:$0xf] %v640
            %s645 = smov [#allocation27]
            %v646 = vld [vmem:[%s645] ss:$0 sm:$0xff]
            %s647 = smov [#allocation28]
            %v648 = vld [vmem:[%s647] ss:$0 sm:$0xff]
            %s649 = smov [#allocation18]
            %s650 = smov [#allocation19]
            %s651 = smov [#allocation20]
            %s652 = smov [#allocation21]
            %v653 = vld [vmem:[%s649] sm:$0xf]
            %v654 = vld [vmem:[%s650] sm:$0xf]
            %v655 = vld [vmem:[%s651] sm:$0xf]
            %v656 = vld [vmem:[%s652] sm:$0xf]
            %v657 = vmul.f32 %v646, %v653
            %v658 = vmul.f32 %v648, %v654
            %v659 = vsub.f32 %v657, %v658
            %v660 = vmul.f32 %v648, %v653
            %v661 = vmul.f32 %v646, %v654
            %v662 = vadd.f32 %v660, %v661
            %v663 = vmul.f32 %v646, %v655
            %v664 = vmul.f32 %v648, %v656
            %v665 = vsub.f32 %v663, %v664
            %v666 = vmul.f32 %v648, %v655
            %v667 = vmul.f32 %v646, %v656
            %v668 = vadd.f32 %v666, %v667
            %669 = vst [vmem:[%s649] sm:$0xf] %v659
            %670 = vst [vmem:[%s650] sm:$0xf] %v662
            %671 = vst [vmem:[%s651] sm:$0xf] %v665
            %672 = vst [vmem:[%s652] sm:$0xf] %v668
            %s673 = smov [#allocation18]
            %s674 = smov [#allocation25]
            %v675 = vlaneseq
            %v676 = vand.u32 %v675, 127
            %v677 = vmov %v676
            %v678 = vlaneseq
            %v679 = vshrl.u32 %v678, 7
            %v680 = vmov %v679
            %v681 = vld [vmem:[%s674] ss:$0 sm:$0xff]
            %v682 = vld [vmem:[%s673] sm:$0xf]
            %vm685 = vcmp.eq.s32.totalorder %v680, %v677
            %v686 = vsel %vm685, %v681, %v682
            %687 = vst [vmem:[%s673] sm:$0xf] %v686
            %s688 = smov [#allocation19]
            %v689 = vlaneseq
            %v690 = vand.u32 %v689, 127
            %v691 = vmov %v690
            %v692 = vlaneseq
            %v693 = vshrl.u32 %v692, 7
            %v694 = vmov %v693
            %v695 = vld [vmem:[%s688] sm:$0xf]
            %vm698 = vcmp.eq.s32.totalorder %v694, %v691
            %v699 = vsel %vm698, 0.0, %v695
            %700 = vst [vmem:[%s688] sm:$0xf] %v699
            %s701 = smov [#allocation20]
            %v702 = vlaneseq
            %v703 = vand.u32 %v702, 127
            %v704 = vmov %v703
            %v705 = vlaneseq
            %v706 = vshrl.u32 %v705, 7
            %v707 = vmov %v706
            %v708 = vld [vmem:[%s701] sm:$0xf]
            %vm711 = vcmp.eq.s32.totalorder %v707, %v704
            %v712 = vsel %vm711, 0.0, %v708
            %713 = vst [vmem:[%s701] sm:$0xf] %v712
            %s714 = smov [#allocation21]
            %s715 = smov [#allocation26]
            %v716 = vlaneseq
            %v717 = vand.u32 %v716, 127
            %v718 = vmov %v717
            %v719 = vlaneseq
            %v720 = vshrl.u32 %v719, 7
            %v721 = vmov %v720
            %v722 = vld [vmem:[%s715] ss:$0 sm:$0xff]
            %v723 = vld [vmem:[%s714] sm:$0xf]
            %vm726 = vcmp.eq.s32.totalorder %v721, %v718
            %v727 = vsel %vm726, %v722, %v723
            %728 = vst [vmem:[%s714] sm:$0xf] %v727
            %s729 = smov [#allocation18]
            %s730 = smov [#allocation19]
            %v731 = vld [vmem:[%s730] sm:$0xf]
            %732 = vrot.lane.b32.xlu0 %v731, 1
            %v733 = vpop.permute.xlu0 %732
            %v734 = vld [vmem:[%s729] sm:$0xf]
            %v735 = vld [vmem:[%s729] sm:$0xf]
            %736 = vrot.lane.b32.xlu0 %v735, 1
            %v737 = vpop.permute.xlu0 %736
            %v738 = vlaneseq
            %v739 = vand.u32 %v738, 127
            %vm740 = vcmp.eq.s32.totalorder %v739, 0
            %v741 = vsel %vm740, %v735, %v737
            %v742 = vlaneseq
            %v743 = vand.u32 %v742, 127
            %vm744 = vcmp.eq.s32.totalorder %v743, 1
            %v745 = vsel %vm744, %v733, %v741
            %v746 = vlaneseq
            %v747 = vand.u32 %v746, 127
            %vm748 = vcmp.ge.s32.totalorder %v747, 0
            %vm749 = vcmp.lt.s32.totalorder %v747, 4
            %vm750 = vmand %vm748, %vm749
            %v751 = vsel %vm750, %v745, 0.0
            %v752 = vld [vmem:[%s730] sm:$0xf]
            %753 = vrot.lane.b32.xlu0 %v752, 127
            %v754 = vpop.permute.xlu0 %753
            %v755 = vlaneseq
            %v756 = vand.u32 %v755, 127
            %vm757 = vcmp.eq.s32.totalorder %v756, 3
            %v758 = vsel %vm757, %v734, %v754
            %759 = vst [vmem:[%s729] sm:$0xf] %v751
            %760 = vst [vmem:[%s730] sm:$0xf] %v758
            %s761 = smov [#allocation20]
            %s762 = smov [#allocation21]
            %v763 = vld [vmem:[%s762] sm:$0xf]
            %764 = vrot.lane.b32.xlu0 %v763, 1
            %v765 = vpop.permute.xlu0 %764
            %v766 = vld [vmem:[%s761] sm:$0xf]
            %v767 = vld [vmem:[%s761] sm:$0xf]
            %768 = vrot.lane.b32.xlu0 %v767, 1
            %v769 = vpop.permute.xlu0 %768
            %v770 = vlaneseq
            %v771 = vand.u32 %v770, 127
            %vm772 = vcmp.eq.s32.totalorder %v771, 0
            %v773 = vsel %vm772, %v767, %v769
            %v774 = vlaneseq
            %v775 = vand.u32 %v774, 127
            %vm776 = vcmp.eq.s32.totalorder %v775, 1
            %v777 = vsel %vm776, %v765, %v773
            %v778 = vlaneseq
            %v779 = vand.u32 %v778, 127
            %vm780 = vcmp.ge.s32.totalorder %v779, 0
            %vm781 = vcmp.lt.s32.totalorder %v779, 4
            %vm782 = vmand %vm780, %vm781
            %v783 = vsel %vm782, %v777, 0.0
            %v784 = vld [vmem:[%s762] sm:$0xf]
            %785 = vrot.lane.b32.xlu0 %v784, 127
            %v786 = vpop.permute.xlu0 %785
            %v787 = vlaneseq
            %v788 = vand.u32 %v787, 127
            %vm789 = vcmp.eq.s32.totalorder %v788, 3
            %v790 = vsel %vm789, %v766, %v786
            %791 = vst [vmem:[%s761] sm:$0xf] %v783
            %792 = vst [vmem:[%s762] sm:$0xf] %v790
            %s793 = smov [#allocation18]
            %s794 = smov [#allocation20]
            %v795 = vld [vmem:[%s793] ss:$0 sm:$0xff]
            %s797 = scalar_lea.vmem %s793, 4294967295
            %v798 = vld [vmem:[%s797] sm:$0xe]
            %v799 = vlaneseq
            %v800 = vshrl.u32 %v799, 7
            %vm801 = vcmp.eq.s32.totalorder %v800, 0
            %v802 = vsel %vm801, %v795, %v798
            %s803 = scalar_lea.vmem %s793, 3
            %v804 = vld [vmem:[%s803] ss:$0 sm:$0xff]
            %805 = vst [vmem:[%s793] sm:$0xf] %v802
            %v806 = vld [vmem:[%s794] ss:$0 sm:$0xff]
            %s807 = scalar_lea.vmem %s793, 1
            %808 = vst [vmem:[%s807] sm:$0x1] %v806
            %s809 = scalar_lea.vmem %s794, 1
            %v810 = vld [vmem:[%s809] sm:$0x7]
            %v811 = vlaneseq
            %v812 = vshrl.u32 %v811, 7
            %vm813 = vcmp.eq.s32.totalorder %v812, 3
            %v814 = vsel %vm813, %v804, %v810
            %v815 = vld [vmem:[%s794] ss:$0 sm:$0xff]
            %816 = vst [vmem:[%s794] sm:$0xf] %v814
            %s817 = smov [#allocation19]
            %s818 = smov [#allocation21]
            %v819 = vld [vmem:[%s817] ss:$0 sm:$0xff]
            %s821 = scalar_lea.vmem %s817, 4294967295
            %v822 = vld [vmem:[%s821] sm:$0xe]
            %v823 = vlaneseq
            %v824 = vshrl.u32 %v823, 7
            %vm825 = vcmp.eq.s32.totalorder %v824, 0
            %v826 = vsel %vm825, %v819, %v822
            %s827 = scalar_lea.vmem %s817, 3
            %v828 = vld [vmem:[%s827] ss:$0 sm:$0xff]
            %829 = vst [vmem:[%s817] sm:$0xf] %v826
            %v830 = vld [vmem:[%s818] ss:$0 sm:$0xff]
            %s831 = scalar_lea.vmem %s817, 1
            %832 = vst [vmem:[%s831] sm:$0x1] %v830
            %s833 = scalar_lea.vmem %s818, 1
            %v834 = vld [vmem:[%s833] sm:$0x7]
            %v835 = vlaneseq
            %v836 = vshrl.u32 %v835, 7
            %vm837 = vcmp.eq.s32.totalorder %v836, 3
            %v838 = vsel %vm837, %v828, %v834
            %v839 = vld [vmem:[%s818] ss:$0 sm:$0xff]
            %840 = vst [vmem:[%s818] sm:$0xf] %v838
            %s841 = smov [#allocation29]
            %v842 = vld [vmem:[%s841] sm:$0xff]
            %s843 = smov [#allocation30]
            %v844 = vld [vmem:[%s843] sm:$0xff]
            %s845 = smov [#allocation10]
            %s846 = smov [#allocation12]
            %s847 = smov [#allocation14]
            %s848 = smov [#allocation16]
            %v849 = vld [vmem:[%s845] sm:$0xf]
            %v850 = vld [vmem:[%s846] sm:$0xf]
            %v851 = vld [vmem:[%s847] sm:$0xf]
            %v852 = vld [vmem:[%s848] sm:$0xf]
            %v853 = vmul.f32 %v842, %v849
            %v854 = vmul.f32 %v844, %v851
            %v855 = vsub.f32 %v853, %v854
            %v856 = vmul.f32 %v842, %v850
            %v857 = vmul.f32 %v844, %v852
            %v858 = vsub.f32 %v856, %v857
            %v859 = vmul.f32 %v844, %v849
            %v860 = vmul.f32 %v842, %v851
            %v861 = vadd.f32 %v859, %v860
            %v862 = vmul.f32 %v844, %v850
            %v863 = vmul.f32 %v842, %v852
            %v864 = vadd.f32 %v862, %v863
            %865 = vst [vmem:[%s845] sm:$0xf] %v855
            %866 = vst [vmem:[%s846] sm:$0xf] %v858
            %867 = vst [vmem:[%s847] sm:$0xf] %v861
            %868 = vst [vmem:[%s848] sm:$0xf] %v864
            %s869 = smov [#allocation10]
            %s870 = smov [#allocation14]
            %v871 = vld [vmem:[%s869] ss:$0 sm:$0xff]
            %s873 = scalar_lea.vmem %s869, 4294967295
            %v874 = vld [vmem:[%s873] sm:$0xe]
            %v875 = vlaneseq
            %v876 = vshrl.u32 %v875, 7
            %vm877 = vcmp.eq.s32.totalorder %v876, 0
            %v878 = vsel %vm877, %v871, %v874
            %s879 = scalar_lea.vmem %s869, 3
            %v880 = vld [vmem:[%s879] ss:$0 sm:$0xff]
            %881 = vst [vmem:[%s869] sm:$0xf] %v878
            %v882 = vld [vmem:[%s870] ss:$0 sm:$0xff]
            %s883 = scalar_lea.vmem %s869, 1
            %884 = vst [vmem:[%s883] sm:$0x1] %v882
            %s885 = scalar_lea.vmem %s870, 1
            %v886 = vld [vmem:[%s885] sm:$0x7]
            %v887 = vlaneseq
            %v888 = vshrl.u32 %v887, 7
            %vm889 = vcmp.eq.s32.totalorder %v888, 3
            %v890 = vsel %vm889, %v880, %v886
            %v891 = vld [vmem:[%s870] ss:$0 sm:$0xff]
            %892 = vst [vmem:[%s870] sm:$0xf] %v890
            %s893 = smov [#allocation12]
            %s894 = smov [#allocation16]
            %v895 = vld [vmem:[%s893] ss:$0 sm:$0xff]
            %s897 = scalar_lea.vmem %s893, 4294967295
            %v898 = vld [vmem:[%s897] sm:$0xe]
            %v899 = vlaneseq
            %v900 = vshrl.u32 %v899, 7
            %vm901 = vcmp.eq.s32.totalorder %v900, 0
            %v902 = vsel %vm901, %v895, %v898
            %s903 = scalar_lea.vmem %s893, 3
            %v904 = vld [vmem:[%s903] ss:$0 sm:$0xff]
            %905 = vst [vmem:[%s893] sm:$0xf] %v902
            %v906 = vld [vmem:[%s894] ss:$0 sm:$0xff]
            %s907 = scalar_lea.vmem %s893, 1
            %908 = vst [vmem:[%s907] sm:$0x1] %v906
            %s909 = scalar_lea.vmem %s894, 1
            %v910 = vld [vmem:[%s909] sm:$0x7]
            %v911 = vlaneseq
            %v912 = vshrl.u32 %v911, 7
            %vm913 = vcmp.eq.s32.totalorder %v912, 3
            %v914 = vsel %vm913, %v904, %v910
            %v915 = vld [vmem:[%s894] ss:$0 sm:$0xff]
            %916 = vst [vmem:[%s894] sm:$0xf] %v914
          $region152: #{custom-call.2} parent=144 // loop_footer
            %s477 = sadd.s32 1, %s473
          $region153: #{custom-call.2} parent=144 // loop_footer_branch
            %472 = sbr.rel target = $region149
          $region154: #{custom-call.2} parent=144 // loop_exit
            _
          %s917 = sadd.s32 %s375, 1
        $region145: #{custom-call.2} parent=139 // loop_footer
          _
        $region146: #{custom-call.2} parent=139 // loop_footer_branch
          %374 = sbr.rel target = $region142
        $region147: #{custom-call.2} parent=139 // loop_exit
          _
        %s920 = sand.u32 %s17, 7
        %s921 = scalar_lea.vmem %s287, %s920 [#allocation8]
        %s922 = sand.u32 %s17, 7
        %s923 = scalar_lea.vmem %s293, %s922 [#allocation9]
        %s924 = smov [#allocation18]
        %s925 = smov %s921
        %v926 = vlaneseq
        %v927 = vand.u32 %v926, 127
        %v928 = vmov %v927
        %v929 = vlaneseq
        %v930 = vshrl.u32 %v929, 7
        %v931 = vmov %v930
        %v932 = vld [vmem:[%s924] sm:$0xf]
        %vm935 = vcmp.eq.s32.totalorder %v931, %v928
        %v936 = vsel %vm935, %v932, 0.0
        %v937 = vrot.slane %v936, 4
        %v938 = vadd.f32 %v936, %v937
        %v939 = vrot.slane %v938, 2
        %v940 = vadd.f32 %v938, %v939
        %v941 = vrot.slane %v940, 1
        %v942 = vadd.f32 %v940, %v941
        %943 = vst [vmem:[%s925] sm:$0x1] %v942
        %s944 = smov [#allocation21]
        %s945 = smov %s923
        %v946 = vlaneseq
        %v947 = vand.u32 %v946, 127
        %v948 = vmov %v947
        %v949 = vlaneseq
        %v950 = vshrl.u32 %v949, 7
        %v951 = vmov %v950
        %v952 = vld [vmem:[%s944] sm:$0xf]
        %vm955 = vcmp.eq.s32.totalorder %v951, %v948
        %v956 = vsel %vm955, %v952, 0.0
        %v957 = vrot.slane %v956, 4
        %v958 = vadd.f32 %v956, %v957
        %v959 = vrot.slane %v958, 2
        %v960 = vadd.f32 %v958, %v959
        %v961 = vrot.slane %v960, 1
        %v962 = vadd.f32 %v960, %v961
        %963 = vst [vmem:[%s945] sm:$0x1] %v962
        %s965 = sshll.u32 1, 4
        %s966 = ssub.s32 %s965, 1
        %v968 = vld [vmem:[#allocation10] sm:%s966]
        %s969 = sshll.u32 1, 4
        %s970 = ssub.s32 %s969, 1
        %971 = vst [vmem:[%s297] sm:%s970] %v968
        %s973 = sshll.u32 1, 4
        %s974 = ssub.s32 %s973, 1
        %v976 = vld [vmem:[#allocation12] sm:%s974]
        %s977 = sshll.u32 1, 4
        %s978 = ssub.s32 %s977, 1
        %979 = vst [vmem:[%s301] sm:%s978] %v976
        %s981 = sshll.u32 1, 4
        %s982 = ssub.s32 %s981, 1
        %v984 = vld [vmem:[#allocation14] sm:%s982]
        %s985 = sshll.u32 1, 4
        %s986 = ssub.s32 %s985, 1
        %987 = vst [vmem:[%s305] sm:%s986] %v984
        %s989 = sshll.u32 1, 4
        %s990 = ssub.s32 %s989, 1
        %v992 = vld [vmem:[#allocation16] sm:%s990]
        %s993 = sshll.u32 1, 4
        %s994 = ssub.s32 %s993, 1
        %995 = vst [vmem:[%s309] sm:%s994] %v992
        %s996 = sand.u32 %s27, 1
        %s997 = sand.u32 %s27, 1
        %s998 = smul.addr %s997, 8
        %s999 = scalar_lea.vmem [#allocation8], %s998
        %s1000 = sand.u32 %s55, 1
        %s1001 = sand.u32 %s55, 1
        %s1002 = smul.addr %s1001, 8
        %s1003 = scalar_lea.vmem [#allocation9], %s1002
        %s1004 = sand.u32 %s17, 1
        %s1005 = sand.u32 %s17, 1
        %s1006 = smul.addr %s1005, 4
        %s1007 = scalar_lea.vmem [#allocation11], %s1006
        %s1008 = sand.u32 %s17, 1
        %s1009 = sand.u32 %s17, 1
        %s1010 = smul.addr %s1009, 4
        %s1011 = scalar_lea.vmem [#allocation13], %s1010
        %s1012 = sand.u32 %s17, 1
        %s1013 = sand.u32 %s17, 1
        %s1014 = smul.addr %s1013, 4
        %s1015 = scalar_lea.vmem [#allocation15], %s1014
        %s1016 = sand.u32 %s17, 1
        %s1017 = sand.u32 %s17, 1
        %s1018 = smul.addr %s1017, 4
        %s1019 = scalar_lea.vmem [#allocation17], %s1018
        // Predicated region
        $region155: #{custom-call.2} parent=139 // pred_check
          %p1020 = pneg %p37
        $region156: #{custom-call.2} parent=139 // pred_check_branch
          %1022 = sbr.rel (%p1020) target = $region158
        $region157: #{custom-call.2} parent=139 // pred_region
          %s1023 = sshrl.u32 %s17, 3
          %s1024 = smul.addr %s1023, 8
          %s1025 = scalar_lea.vmem %s4, %s1024
          // Predicated region
          $region159: #{custom-call.2} parent=157 // pred_check
            _
          $region160: #{custom-call.2} parent=157 // pred_check_branch
            %1027 = sbr.rel (0) target = $region162
          $region161: #{custom-call.2} parent=157 // pred_region
            // Predicated region
            $region163: #{custom-call.2} parent=161 // pred_check
              _
            $region164: #{custom-call.2} parent=161 // pred_check_branch
              %1029 = sbr.rel (0) target = $region166
            $region165: #{custom-call.2} parent=161 // pred_region
              // Predicated region
              $region178: #{custom-call.2} parent=165 // pred_check
                _
              $region179: #{custom-call.2} parent=165 // pred_check_branch
                %1045 = sbr.rel (0) target = $region181
              $region180: #{custom-call.2} parent=165 // pred_region
                loop: start=0, step=1, limit=1
                $region182: #{custom-call.2} parent=180 // loop_pre_header
                  _
                $region183: #{custom-call.2} parent=180 // loop_header
                  %s1047 = sphi 0, %s1051
                  %p1048 = scmp.ge.s32.totalorder %s1047, 1
                  %s1052 = sphi %s999, %s999
                  %s1053 = sphi %s1025, %s1025
                $region184: #{custom-call.2} parent=180 // loop_header_branch
                  %1050 = sbr.rel (%p1048) target = $region188
                $region185: #{custom-call.2} parent=180 // loop_body
                  %v1054 = vld [vmem:[%s1052] sm:$0xff]
                  %1055 = vst [vmem:[%s1053] sm:$0xff] %v1054
                $region186: #{custom-call.2} parent=180 // loop_footer
                  %s1051 = sadd.s32 1, %s1047
                $region187: #{custom-call.2} parent=180 // loop_footer_branch
                  %1046 = sbr.rel target = $region183
                $region188: #{custom-call.2} parent=180 // loop_exit
                  _
              $region181: #{custom-call.2} parent=165 // pred_fallthru
                _
              // Predicated region
              $region189: #{custom-call.2} parent=165 // pred_check
                _
              $region190: #{custom-call.2} parent=165 // pred_check_branch
                %1057 = sbr.rel target = $region192
              $region191: #{custom-call.2} parent=165 // pred_region
                _
              $region192: #{custom-call.2} parent=165 // pred_fallthru
                _
            $region166: #{custom-call.2} parent=161 // pred_fallthru
              _
            // Predicated region
            $region167: #{custom-call.2} parent=161 // pred_check
              _
            $region168: #{custom-call.2} parent=161 // pred_check_branch
              %1031 = sbr.rel target = $region170
            $region169: #{custom-call.2} parent=161 // pred_region
              %s1033 = ssub.s32 256, 1
              loop: start=0, step=1, limit=1
              $region171: #{custom-call.2} parent=169 // loop_pre_header
                _
              $region172: #{custom-call.2} parent=169 // loop_header
                %s1035 = sphi 0, %s1039
                %p1036 = scmp.ge.s32.totalorder %s1035, 1
                %s1040 = sphi %s999, %s999
                %s1041 = sphi %s1025, %s1025
              $region173: #{custom-call.2} parent=169 // loop_header_branch
                %1038 = sbr.rel (%p1036) target = $region177
              $region174: #{custom-call.2} parent=169 // loop_body
                %v1042 = vld [vmem:[%s1040] sm:%s1033]
                %1043 = vst [vmem:[%s1041] sm:%s1033] %v1042
              $region175: #{custom-call.2} parent=169 // loop_footer
                %s1039 = sadd.s32 1, %s1035
              $region176: #{custom-call.2} parent=169 // loop_footer_branch
                %1034 = sbr.rel target = $region172
              $region177: #{custom-call.2} parent=169 // loop_exit
                _
            $region170: #{custom-call.2} parent=161 // pred_fallthru
              _
          $region162: #{custom-call.2} parent=157 // pred_fallthru
            _
          %1058 = vnop
        $region158: #{custom-call.2} parent=139 // pred_fallthru
          _
        // Predicated region
        $region193: #{custom-call.2} parent=139 // pred_check
          %p1059 = pneg %p65
        $region194: #{custom-call.2} parent=139 // pred_check_branch
          %1061 = sbr.rel (%p1059) target = $region196
        $region195: #{custom-call.2} parent=139 // pred_region
          %s1062 = sshrl.u32 %s17, 3
          %s1063 = smul.addr %s1062, 8
          %s1064 = scalar_lea.vmem %s5, %s1063
          // Predicated region
          $region197: #{custom-call.2} parent=195 // pred_check
            _
          $region198: #{custom-call.2} parent=195 // pred_check_branch
            %1066 = sbr.rel (0) target = $region200
          $region199: #{custom-call.2} parent=195 // pred_region
            // Predicated region
            $region201: #{custom-call.2} parent=199 // pred_check
              _
            $region202: #{custom-call.2} parent=199 // pred_check_branch
              %1068 = sbr.rel (0) target = $region204
            $region203: #{custom-call.2} parent=199 // pred_region
              // Predicated region
              $region216: #{custom-call.2} parent=203 // pred_check
                _
              $region217: #{custom-call.2} parent=203 // pred_check_branch
                %1084 = sbr.rel (0) target = $region219
              $region218: #{custom-call.2} parent=203 // pred_region
                loop: start=0, step=1, limit=1
                $region220: #{custom-call.2} parent=218 // loop_pre_header
                  _
                $region221: #{custom-call.2} parent=218 // loop_header
                  %s1086 = sphi 0, %s1090
                  %p1087 = scmp.ge.s32.totalorder %s1086, 1
                  %s1091 = sphi %s1003, %s1003
                  %s1092 = sphi %s1064, %s1064
                $region222: #{custom-call.2} parent=218 // loop_header_branch
                  %1089 = sbr.rel (%p1087) target = $region226
                $region223: #{custom-call.2} parent=218 // loop_body
                  %v1093 = vld [vmem:[%s1091] sm:$0xff]
                  %1094 = vst [vmem:[%s1092] sm:$0xff] %v1093
                $region224: #{custom-call.2} parent=218 // loop_footer
                  %s1090 = sadd.s32 1, %s1086
                $region225: #{custom-call.2} parent=218 // loop_footer_branch
                  %1085 = sbr.rel target = $region221
                $region226: #{custom-call.2} parent=218 // loop_exit
                  _
              $region219: #{custom-call.2} parent=203 // pred_fallthru
                _
              // Predicated region
              $region227: #{custom-call.2} parent=203 // pred_check
                _
              $region228: #{custom-call.2} parent=203 // pred_check_branch
                %1096 = sbr.rel target = $region230
              $region229: #{custom-call.2} parent=203 // pred_region
                _
              $region230: #{custom-call.2} parent=203 // pred_fallthru
                _
            $region204: #{custom-call.2} parent=199 // pred_fallthru
              _
            // Predicated region
            $region205: #{custom-call.2} parent=199 // pred_check
              _
            $region206: #{custom-call.2} parent=199 // pred_check_branch
              %1070 = sbr.rel target = $region208
            $region207: #{custom-call.2} parent=199 // pred_region
              %s1072 = ssub.s32 256, 1
              loop: start=0, step=1, limit=1
              $region209: #{custom-call.2} parent=207 // loop_pre_header
                _
              $region210: #{custom-call.2} parent=207 // loop_header
                %s1074 = sphi 0, %s1078
                %p1075 = scmp.ge.s32.totalorder %s1074, 1
                %s1079 = sphi %s1003, %s1003
                %s1080 = sphi %s1064, %s1064
              $region211: #{custom-call.2} parent=207 // loop_header_branch
                %1077 = sbr.rel (%p1075) target = $region215
              $region212: #{custom-call.2} parent=207 // loop_body
                %v1081 = vld [vmem:[%s1079] sm:%s1072]
                %1082 = vst [vmem:[%s1080] sm:%s1072] %v1081
              $region213: #{custom-call.2} parent=207 // loop_footer
                %s1078 = sadd.s32 1, %s1074
              $region214: #{custom-call.2} parent=207 // loop_footer_branch
                %1073 = sbr.rel target = $region210
              $region215: #{custom-call.2} parent=207 // loop_exit
                _
            $region208: #{custom-call.2} parent=199 // pred_fallthru
              _
          $region200: #{custom-call.2} parent=195 // pred_fallthru
            _
          %1097 = vnop
        $region196: #{custom-call.2} parent=139 // pred_fallthru
          _
        %s1098 = smul.addr %s17, 4
        %s1099 = scalar_lea.vmem %s6, %s1098
        // Predicated region
        $region231: #{custom-call.2} parent=139 // pred_check
          _
        $region232: #{custom-call.2} parent=139 // pred_check_branch
          %1101 = sbr.rel (0) target = $region234
        $region233: #{custom-call.2} parent=139 // pred_region
          // Predicated region
          $region235: #{custom-call.2} parent=233 // pred_check
            _
          $region236: #{custom-call.2} parent=233 // pred_check_branch
            %1103 = sbr.rel target = $region238
          $region237: #{custom-call.2} parent=233 // pred_region
            // Predicated region
            $region250: #{custom-call.2} parent=237 // pred_check
              _
            $region251: #{custom-call.2} parent=237 // pred_check_branch
              %1119 = sbr.rel (0) target = $region253
            $region252: #{custom-call.2} parent=237 // pred_region
              %s1121 = ssub.s32 16, 1
              loop: start=0, step=1, limit=1
              $region254: #{custom-call.2} parent=252 // loop_pre_header
                _
              $region255: #{custom-call.2} parent=252 // loop_header
                %s1123 = sphi 0, %s1127
                %p1124 = scmp.ge.s32.totalorder %s1123, 1
                %s1128 = sphi %s1007, %s1007
                %s1129 = sphi %s1099, %s1099
              $region256: #{custom-call.2} parent=252 // loop_header_branch
                %1126 = sbr.rel (%p1124) target = $region260
              $region257: #{custom-call.2} parent=252 // loop_body
                %v1130 = vld [vmem:[%s1128] sm:%s1121]
                %1131 = vst [vmem:[%s1129] sm:%s1121] %v1130
              $region258: #{custom-call.2} parent=252 // loop_footer
                %s1127 = sadd.s32 1, %s1123
              $region259: #{custom-call.2} parent=252 // loop_footer_branch
                %1122 = sbr.rel target = $region255
              $region260: #{custom-call.2} parent=252 // loop_exit
                _
            $region253: #{custom-call.2} parent=237 // pred_fallthru
              _
          $region238: #{custom-call.2} parent=233 // pred_fallthru
            _
          // Predicated region
          $region239: #{custom-call.2} parent=233 // pred_check
            _
          $region240: #{custom-call.2} parent=233 // pred_check_branch
            %1105 = sbr.rel (0) target = $region242
          $region241: #{custom-call.2} parent=233 // pred_region
            %s1107 = ssub.s32 16, 1
            loop: start=0, step=1, limit=1
            $region243: #{custom-call.2} parent=241 // loop_pre_header
              _
            $region244: #{custom-call.2} parent=241 // loop_header
              %s1109 = sphi 0, %s1113
              %p1110 = scmp.ge.s32.totalorder %s1109, 1
              %s1114 = sphi %s1007, %s1007
              %s1115 = sphi %s1099, %s1099
            $region245: #{custom-call.2} parent=241 // loop_header_branch
              %1112 = sbr.rel (%p1110) target = $region249
            $region246: #{custom-call.2} parent=241 // loop_body
              %v1116 = vld [vmem:[%s1114] sm:%s1107]
              %1117 = vst [vmem:[%s1115] sm:%s1107] %v1116
            $region247: #{custom-call.2} parent=241 // loop_footer
              %s1113 = sadd.s32 1, %s1109
            $region248: #{custom-call.2} parent=241 // loop_footer_branch
              %1108 = sbr.rel target = $region244
            $region249: #{custom-call.2} parent=241 // loop_exit
              _
          $region242: #{custom-call.2} parent=233 // pred_fallthru
            _
        $region234: #{custom-call.2} parent=139 // pred_fallthru
          _
        %1132 = vnop
        %s1133 = smul.addr %s17, 4
        %s1134 = scalar_lea.vmem %s7, %s1133
        // Predicated region
        $region261: #{custom-call.2} parent=139 // pred_check
          _
        $region262: #{custom-call.2} parent=139 // pred_check_branch
          %1136 = sbr.rel (0) target = $region264
        $region263: #{custom-call.2} parent=139 // pred_region
          // Predicated region
          $region265: #{custom-call.2} parent=263 // pred_check
            _
          $region266: #{custom-call.2} parent=263 // pred_check_branch
            %1138 = sbr.rel target = $region268
          $region267: #{custom-call.2} parent=263 // pred_region
            // Predicated region
            $region280: #{custom-call.2} parent=267 // pred_check
              _
            $region281: #{custom-call.2} parent=267 // pred_check_branch
              %1154 = sbr.rel (0) target = $region283
            $region282: #{custom-call.2} parent=267 // pred_region
              %s1156 = ssub.s32 16, 1
              loop: start=0, step=1, limit=1
              $region284: #{custom-call.2} parent=282 // loop_pre_header
                _
              $region285: #{custom-call.2} parent=282 // loop_header
                %s1158 = sphi 0, %s1162
                %p1159 = scmp.ge.s32.totalorder %s1158, 1
                %s1163 = sphi %s1011, %s1011
                %s1164 = sphi %s1134, %s1134
              $region286: #{custom-call.2} parent=282 // loop_header_branch
                %1161 = sbr.rel (%p1159) target = $region290
              $region287: #{custom-call.2} parent=282 // loop_body
                %v1165 = vld [vmem:[%s1163] sm:%s1156]
                %1166 = vst [vmem:[%s1164] sm:%s1156] %v1165
              $region288: #{custom-call.2} parent=282 // loop_footer
                %s1162 = sadd.s32 1, %s1158
              $region289: #{custom-call.2} parent=282 // loop_footer_branch
                %1157 = sbr.rel target = $region285
              $region290: #{custom-call.2} parent=282 // loop_exit
                _
            $region283: #{custom-call.2} parent=267 // pred_fallthru
              _
          $region268: #{custom-call.2} parent=263 // pred_fallthru
            _
          // Predicated region
          $region269: #{custom-call.2} parent=263 // pred_check
            _
          $region270: #{custom-call.2} parent=263 // pred_check_branch
            %1140 = sbr.rel (0) target = $region272
          $region271: #{custom-call.2} parent=263 // pred_region
            %s1142 = ssub.s32 16, 1
            loop: start=0, step=1, limit=1
            $region273: #{custom-call.2} parent=271 // loop_pre_header
              _
            $region274: #{custom-call.2} parent=271 // loop_header
              %s1144 = sphi 0, %s1148
              %p1145 = scmp.ge.s32.totalorder %s1144, 1
              %s1149 = sphi %s1011, %s1011
              %s1150 = sphi %s1134, %s1134
            $region275: #{custom-call.2} parent=271 // loop_header_branch
              %1147 = sbr.rel (%p1145) target = $region279
            $region276: #{custom-call.2} parent=271 // loop_body
              %v1151 = vld [vmem:[%s1149] sm:%s1142]
              %1152 = vst [vmem:[%s1150] sm:%s1142] %v1151
            $region277: #{custom-call.2} parent=271 // loop_footer
              %s1148 = sadd.s32 1, %s1144
            $region278: #{custom-call.2} parent=271 // loop_footer_branch
              %1143 = sbr.rel target = $region274
            $region279: #{custom-call.2} parent=271 // loop_exit
              _
          $region272: #{custom-call.2} parent=263 // pred_fallthru
            _
        $region264: #{custom-call.2} parent=139 // pred_fallthru
          _
        %1167 = vnop
        %s1168 = smul.addr %s17, 4
        %s1169 = scalar_lea.vmem %s8, %s1168
        // Predicated region
        $region291: #{custom-call.2} parent=139 // pred_check
          _
        $region292: #{custom-call.2} parent=139 // pred_check_branch
          %1171 = sbr.rel (0) target = $region294
        $region293: #{custom-call.2} parent=139 // pred_region
          // Predicated region
          $region295: #{custom-call.2} parent=293 // pred_check
            _
          $region296: #{custom-call.2} parent=293 // pred_check_branch
            %1173 = sbr.rel target = $region298
          $region297: #{custom-call.2} parent=293 // pred_region
            // Predicated region
            $region310: #{custom-call.2} parent=297 // pred_check
              _
            $region311: #{custom-call.2} parent=297 // pred_check_branch
              %1189 = sbr.rel (0) target = $region313
            $region312: #{custom-call.2} parent=297 // pred_region
              %s1191 = ssub.s32 16, 1
              loop: start=0, step=1, limit=1
              $region314: #{custom-call.2} parent=312 // loop_pre_header
                _
              $region315: #{custom-call.2} parent=312 // loop_header
                %s1193 = sphi 0, %s1197
                %p1194 = scmp.ge.s32.totalorder %s1193, 1
                %s1198 = sphi %s1015, %s1015
                %s1199 = sphi %s1169, %s1169
              $region316: #{custom-call.2} parent=312 // loop_header_branch
                %1196 = sbr.rel (%p1194) target = $region320
              $region317: #{custom-call.2} parent=312 // loop_body
                %v1200 = vld [vmem:[%s1198] sm:%s1191]
                %1201 = vst [vmem:[%s1199] sm:%s1191] %v1200
              $region318: #{custom-call.2} parent=312 // loop_footer
                %s1197 = sadd.s32 1, %s1193
              $region319: #{custom-call.2} parent=312 // loop_footer_branch
                %1192 = sbr.rel target = $region315
              $region320: #{custom-call.2} parent=312 // loop_exit
                _
            $region313: #{custom-call.2} parent=297 // pred_fallthru
              _
          $region298: #{custom-call.2} parent=293 // pred_fallthru
            _
          // Predicated region
          $region299: #{custom-call.2} parent=293 // pred_check
            _
          $region300: #{custom-call.2} parent=293 // pred_check_branch
            %1175 = sbr.rel (0) target = $region302
          $region301: #{custom-call.2} parent=293 // pred_region
            %s1177 = ssub.s32 16, 1
            loop: start=0, step=1, limit=1
            $region303: #{custom-call.2} parent=301 // loop_pre_header
              _
            $region304: #{custom-call.2} parent=301 // loop_header
              %s1179 = sphi 0, %s1183
              %p1180 = scmp.ge.s32.totalorder %s1179, 1
              %s1184 = sphi %s1015, %s1015
              %s1185 = sphi %s1169, %s1169
            $region305: #{custom-call.2} parent=301 // loop_header_branch
              %1182 = sbr.rel (%p1180) target = $region309
            $region306: #{custom-call.2} parent=301 // loop_body
              %v1186 = vld [vmem:[%s1184] sm:%s1177]
              %1187 = vst [vmem:[%s1185] sm:%s1177] %v1186
            $region307: #{custom-call.2} parent=301 // loop_footer
              %s1183 = sadd.s32 1, %s1179
            $region308: #{custom-call.2} parent=301 // loop_footer_branch
              %1178 = sbr.rel target = $region304
            $region309: #{custom-call.2} parent=301 // loop_exit
              _
          $region302: #{custom-call.2} parent=293 // pred_fallthru
            _
        $region294: #{custom-call.2} parent=139 // pred_fallthru
          _
        %1202 = vnop
        %s1203 = smul.addr %s17, 4
        %s1204 = scalar_lea.vmem %s9, %s1203
        // Predicated region
        $region321: #{custom-call.2} parent=139 // pred_check
          _
        $region322: #{custom-call.2} parent=139 // pred_check_branch
          %1206 = sbr.rel (0) target = $region324
        $region323: #{custom-call.2} parent=139 // pred_region
          // Predicated region
          $region325: #{custom-call.2} parent=323 // pred_check
            _
          $region326: #{custom-call.2} parent=323 // pred_check_branch
            %1208 = sbr.rel target = $region328
          $region327: #{custom-call.2} parent=323 // pred_region
            // Predicated region
            $region340: #{custom-call.2} parent=327 // pred_check
              _
            $region341: #{custom-call.2} parent=327 // pred_check_branch
              %1224 = sbr.rel (0) target = $region343
            $region342: #{custom-call.2} parent=327 // pred_region
              %s1226 = ssub.s32 16, 1
              loop: start=0, step=1, limit=1
              $region344: #{custom-call.2} parent=342 // loop_pre_header
                _
              $region345: #{custom-call.2} parent=342 // loop_header
                %s1228 = sphi 0, %s1232
                %p1229 = scmp.ge.s32.totalorder %s1228, 1
                %s1233 = sphi %s1019, %s1019
                %s1234 = sphi %s1204, %s1204
              $region346: #{custom-call.2} parent=342 // loop_header_branch
                %1231 = sbr.rel (%p1229) target = $region350
              $region347: #{custom-call.2} parent=342 // loop_body
                %v1235 = vld [vmem:[%s1233] sm:%s1226]
                %1236 = vst [vmem:[%s1234] sm:%s1226] %v1235
              $region348: #{custom-call.2} parent=342 // loop_footer
                %s1232 = sadd.s32 1, %s1228
              $region349: #{custom-call.2} parent=342 // loop_footer_branch
                %1227 = sbr.rel target = $region345
              $region350: #{custom-call.2} parent=342 // loop_exit
                _
            $region343: #{custom-call.2} parent=327 // pred_fallthru
              _
          $region328: #{custom-call.2} parent=323 // pred_fallthru
            _
          // Predicated region
          $region329: #{custom-call.2} parent=323 // pred_check
            _
          $region330: #{custom-call.2} parent=323 // pred_check_branch
            %1210 = sbr.rel (0) target = $region332
          $region331: #{custom-call.2} parent=323 // pred_region
            %s1212 = ssub.s32 16, 1
            loop: start=0, step=1, limit=1
            $region333: #{custom-call.2} parent=331 // loop_pre_header
              _
            $region334: #{custom-call.2} parent=331 // loop_header
              %s1214 = sphi 0, %s1218
              %p1215 = scmp.ge.s32.totalorder %s1214, 1
              %s1219 = sphi %s1019, %s1019
              %s1220 = sphi %s1204, %s1204
            $region335: #{custom-call.2} parent=331 // loop_header_branch
              %1217 = sbr.rel (%p1215) target = $region339
            $region336: #{custom-call.2} parent=331 // loop_body
              %v1221 = vld [vmem:[%s1219] sm:%s1212]
              %1222 = vst [vmem:[%s1220] sm:%s1212] %v1221
            $region337: #{custom-call.2} parent=331 // loop_footer
              %s1218 = sadd.s32 1, %s1214
            $region338: #{custom-call.2} parent=331 // loop_footer_branch
              %1213 = sbr.rel target = $region334
            $region339: #{custom-call.2} parent=331 // loop_exit
              _
          $region332: #{custom-call.2} parent=323 // pred_fallthru
            _
        $region324: #{custom-call.2} parent=139 // pred_fallthru
          _
        %1237 = vnop
      $region140: #{custom-call.2} parent=5 // pred_fallthru
        _
      %p1238 = scmp.le.s32.totalorder 2, %s12
      // Predicated region
      $region351: #{custom-call.2} parent=5 // pred_check
        %p1239 = pneg %p1238
      $region352: #{custom-call.2} parent=5 // pred_check_branch
        %1241 = sbr.rel (%p1239) target = $region354
      $region353: #{custom-call.2} parent=5 // pred_region
        %s1242 = ssub.s32 %s12, 2
        // Predicated region
        $region355: #{custom-call.2} parent=353 // pred_check
          %p1243 = pneg %p43
        $region356: #{custom-call.2} parent=353 // pred_check_branch
          %1245 = sbr.rel (%p1243) target = $region358
        $region357: #{custom-call.2} parent=353 // pred_region
          %s1246 = sand.u32 %s28, 1
          %s1247 = sand.u32 %s28, 1
          %s1248 = smul.addr %s1247, 8
          %s1249 = scalar_lea.vmem [#allocation8], %s1248
        $region358: #{custom-call.2} parent=353 // pred_fallthru
          _
        // Predicated region
        $region359: #{custom-call.2} parent=353 // pred_check
          %p1250 = pneg %p71
        $region360: #{custom-call.2} parent=353 // pred_check_branch
          %1252 = sbr.rel (%p1250) target = $region362
        $region361: #{custom-call.2} parent=353 // pred_region
          %s1253 = sand.u32 %s56, 1
          %s1254 = sand.u32 %s56, 1
          %s1255 = smul.addr %s1254, 8
          %s1256 = scalar_lea.vmem [#allocation9], %s1255
        $region362: #{custom-call.2} parent=353 // pred_fallthru
          _
        %s1257 = sand.u32 %s18, 1
        %s1258 = sand.u32 %s18, 1
        %s1259 = smul.addr %s1258, 4
        %s1260 = scalar_lea.vmem [#allocation11], %s1259
        %s1261 = sand.u32 %s18, 1
        %s1262 = sand.u32 %s18, 1
        %s1263 = smul.addr %s1262, 4
        %s1264 = scalar_lea.vmem [#allocation13], %s1263
        %s1265 = sand.u32 %s18, 1
        %s1266 = sand.u32 %s18, 1
        %s1267 = smul.addr %s1266, 4
        %s1268 = scalar_lea.vmem [#allocation15], %s1267
        %s1269 = sand.u32 %s18, 1
        %s1270 = sand.u32 %s18, 1
        %s1271 = smul.addr %s1270, 4
        %s1272 = scalar_lea.vmem [#allocation17], %s1271
      $region354: #{custom-call.2} parent=5 // pred_fallthru
        _
    $region6: #{custom-call.2} parent=1 // loop_footer
      %s16 = sadd.s32 1, %s12
    $region7: #{custom-call.2} parent=1 // loop_footer_branch
      %11 = sbr.rel target = $region3
    $region8: #{custom-call.2} parent=1 // loop_exit
      _

// kernel: shape_classifier_forward.5
$region0: #{shape_classifier_forward.5}
  #allocation0 [shape = 'u32[]', space=smem, size = 0x4, offset = 0x4, fixed_abs, tag = 'smem constant byte address 0x4 - core index']
  #allocation1 [shape = 'u32[144,128]{1,0:T(1,128)}', space=vmem, size = 0x12000, scoped, tag = 'internal scratch']
  %s0 = inlined_call_operand.vmem [shape: f32[3,8,128], index: 0, kind: input, shape index: {}]
  %s1 = inlined_call_operand.vmem [shape: f32[64,128], index: 1, kind: output, shape index: {}]
  %s2 = sld [smem:[#allocation0]]
  $region14: #{shape_classifier_forward.5} parent=0
    _
  %s4 = ssub.s32 1, %s2
  %s5 = scalar_select 0, %s4, %s2
  // Predicated region
  $region2: #{shape_classifier_forward.5} parent=0 // pred_check
    _
  $region3: #{shape_classifier_forward.5} parent=0 // pred_check_branch
    %7 = sbr.rel (0) target = $region5
  $region4: #{shape_classifier_forward.5} parent=0 // pred_region
    _
  $region5: #{shape_classifier_forward.5} parent=0 // pred_fallthru
    _
  %v8 = vld [vmem:[%s0] sm:$0xff]
  %v9 = vld [vmem:[%s0 + $0x8] sm:$0xff]
  %v10 = vld [vmem:[%s0 + $0x10] sm:$0xff]
  %v11 = vlaneseq
  %v12 = vshrl.u32 %v11, 7
  %v13 = vsub.s32 0, %v12
  %v14 = vrot.slane %v8, %v13
  %v15 = vsub.f32 %v14, %v8
  %v16 = vlaneseq
  %v17 = vshrl.u32 %v16, 7
  %v18 = vsub.s32 0, %v17
  %v19 = vrot.slane %v9, %v18
  %v20 = vsub.f32 %v19, %v9
  %v21 = vlaneseq
  %v22 = vshrl.u32 %v21, 7
  %v23 = vsub.s32 0, %v22
  %v24 = vrot.slane %v10, %v23
  %v25 = vsub.f32 %v24, %v10
  %v26 = vmul.f32 %v15, %v15
  %v27 = vmul.f32 %v20, %v20
  %v28 = vadd.f32 %v26, %v27
  %v29 = vmul.f32 %v25, %v25
  %v30 = vadd.f32 %v28, %v29
  %v31 = vrsqrt.pop %v30
  %v32 = vmul.f32 %v30, %v31
  %vm33 = vcmp.eq.f32.partialorder %v30, inf
  %v34 = vsel %vm33, %v30, %v32
  %vm35 = vcmp.eq.f32.partialorder %v30, 0.0
  %v36 = vand.u32 %v30, 2147483648
  %v37 = vsel %vm35, %v36, %v34
  %v38 = vmul.f32 %v37, 1.442695
  %v39 = vpow.pop %v38
  %v40 = vlaneseq
  %v41 = vshrl.u32 %v40, 7
  %v42 = vsub.s32 1, %v41
  %v43 = vrot.slane %v8, %v42
  %v44 = vsub.f32 %v43, %v8
  %v45 = vlaneseq
  %v46 = vshrl.u32 %v45, 7
  %v47 = vsub.s32 1, %v46
  %v48 = vrot.slane %v9, %v47
  %v49 = vsub.f32 %v48, %v9
  %v50 = vlaneseq
  %v51 = vshrl.u32 %v50, 7
  %v52 = vsub.s32 1, %v51
  %v53 = vrot.slane %v10, %v52
  %v54 = vsub.f32 %v53, %v10
  %v55 = vmul.f32 %v44, %v44
  %v56 = vmul.f32 %v49, %v49
  %v57 = vadd.f32 %v55, %v56
  %v58 = vmul.f32 %v54, %v54
  %v59 = vadd.f32 %v57, %v58
  %v60 = vrsqrt.pop %v59
  %v61 = vmul.f32 %v59, %v60
  %vm62 = vcmp.eq.f32.partialorder %v59, inf
  %v63 = vsel %vm62, %v59, %v61
  %vm64 = vcmp.eq.f32.partialorder %v59, 0.0
  %v65 = vand.u32 %v59, 2147483648
  %v66 = vsel %vm64, %v65, %v63
  %v67 = vmul.f32 %v66, 1.442695
  %v68 = vpow.pop %v67
  %v69 = vlaneseq
  %v70 = vshrl.u32 %v69, 7
  %v71 = vsub.s32 2, %v70
  %v72 = vrot.slane %v8, %v71
  %v73 = vsub.f32 %v72, %v8
  %v74 = vlaneseq
  %v75 = vshrl.u32 %v74, 7
  %v76 = vsub.s32 2, %v75
  %v77 = vrot.slane %v9, %v76
  %v78 = vsub.f32 %v77, %v9
  %v79 = vlaneseq
  %v80 = vshrl.u32 %v79, 7
  %v81 = vsub.s32 2, %v80
  %v82 = vrot.slane %v10, %v81
  %v83 = vsub.f32 %v82, %v10
  %v84 = vmul.f32 %v73, %v73
  %v85 = vmul.f32 %v78, %v78
  %v86 = vadd.f32 %v84, %v85
  %v87 = vmul.f32 %v83, %v83
  %v88 = vadd.f32 %v86, %v87
  %v89 = vrsqrt.pop %v88
  %v90 = vmul.f32 %v88, %v89
  %vm91 = vcmp.eq.f32.partialorder %v88, inf
  %v92 = vsel %vm91, %v88, %v90
  %vm93 = vcmp.eq.f32.partialorder %v88, 0.0
  %v94 = vand.u32 %v88, 2147483648
  %v95 = vsel %vm93, %v94, %v92
  %v96 = vmul.f32 %v95, 1.442695
  %v97 = vpow.pop %v96
  %v98 = vlaneseq
  %v99 = vshrl.u32 %v98, 7
  %v100 = vsub.s32 3, %v99
  %v101 = vrot.slane %v8, %v100
  %v102 = vsub.f32 %v101, %v8
  %v103 = vlaneseq
  %v104 = vshrl.u32 %v103, 7
  %v105 = vsub.s32 3, %v104
  %v106 = vrot.slane %v9, %v105
  %v107 = vsub.f32 %v106, %v9
  %v108 = vlaneseq
  %v109 = vshrl.u32 %v108, 7
  %v110 = vsub.s32 3, %v109
  %v111 = vrot.slane %v10, %v110
  %v112 = vsub.f32 %v111, %v10
  %v113 = vmul.f32 %v102, %v102
  %v114 = vmul.f32 %v107, %v107
  %v115 = vadd.f32 %v113, %v114
  %v116 = vmul.f32 %v112, %v112
  %v117 = vadd.f32 %v115, %v116
  %v118 = vrsqrt.pop %v117
  %v119 = vmul.f32 %v117, %v118
  %vm120 = vcmp.eq.f32.partialorder %v117, inf
  %v121 = vsel %vm120, %v117, %v119
  %vm122 = vcmp.eq.f32.partialorder %v117, 0.0
  %v123 = vand.u32 %v117, 2147483648
  %v124 = vsel %vm122, %v123, %v121
  %v125 = vmul.f32 %v124, 1.442695
  %v126 = vpow.pop %v125
  %v127 = vlaneseq
  %v128 = vshrl.u32 %v127, 7
  %v129 = vsub.s32 4, %v128
  %v130 = vrot.slane %v8, %v129
  %v131 = vsub.f32 %v130, %v8
  %v132 = vlaneseq
  %v133 = vshrl.u32 %v132, 7
  %v134 = vsub.s32 4, %v133
  %v135 = vrot.slane %v9, %v134
  %v136 = vsub.f32 %v135, %v9
  %v137 = vlaneseq
  %v138 = vshrl.u32 %v137, 7
  %v139 = vsub.s32 4, %v138
  %v140 = vrot.slane %v10, %v139
  %v141 = vsub.f32 %v140, %v10
  %v142 = vmul.f32 %v131, %v131
  %v143 = vmul.f32 %v136, %v136
  %v144 = vadd.f32 %v142, %v143
  %v145 = vmul.f32 %v141, %v141
  %v146 = vadd.f32 %v144, %v145
  %v147 = vrsqrt.pop %v146
  %v148 = vmul.f32 %v146, %v147
  %vm149 = vcmp.eq.f32.partialorder %v146, inf
  %v150 = vsel %vm149, %v146, %v148
  %vm151 = vcmp.eq.f32.partialorder %v146, 0.0
  %v152 = vand.u32 %v146, 2147483648
  %v153 = vsel %vm151, %v152, %v150
  %v154 = vmul.f32 %v153, 1.442695
  %v155 = vpow.pop %v154
  %v156 = vlaneseq
  %v157 = vshrl.u32 %v156, 7
  %v158 = vsub.s32 5, %v157
  %v159 = vrot.slane %v8, %v158
  %v160 = vsub.f32 %v159, %v8
  %v161 = vlaneseq
  %v162 = vshrl.u32 %v161, 7
  %v163 = vsub.s32 5, %v162
  %v164 = vrot.slane %v9, %v163
  %v165 = vsub.f32 %v164, %v9
  %v166 = vlaneseq
  %v167 = vshrl.u32 %v166, 7
  %v168 = vsub.s32 5, %v167
  %v169 = vrot.slane %v10, %v168
  %v170 = vsub.f32 %v169, %v10
  %v171 = vmul.f32 %v160, %v160
  %v172 = vmul.f32 %v165, %v165
  %v173 = vadd.f32 %v171, %v172
  %v174 = vmul.f32 %v170, %v170
  %v175 = vadd.f32 %v173, %v174
  %v176 = vrsqrt.pop %v175
  %v177 = vmul.f32 %v175, %v176
  %vm178 = vcmp.eq.f32.partialorder %v175, inf
  %v179 = vsel %vm178, %v175, %v177
  %vm180 = vcmp.eq.f32.partialorder %v175, 0.0
  %v181 = vand.u32 %v175, 2147483648
  %v182 = vsel %vm180, %v181, %v179
  %v183 = vmul.f32 %v182, 1.442695
  %v184 = vpow.pop %v183
  %v185 = vlaneseq
  %v186 = vshrl.u32 %v185, 7
  %v187 = vsub.s32 6, %v186
  %v188 = vrot.slane %v8, %v187
  %v189 = vsub.f32 %v188, %v8
  %v190 = vlaneseq
  %v191 = vshrl.u32 %v190, 7
  %v192 = vsub.s32 6, %v191
  %v193 = vrot.slane %v9, %v192
  %v194 = vsub.f32 %v193, %v9
  %v195 = vlaneseq
  %v196 = vshrl.u32 %v195, 7
  %v197 = vsub.s32 6, %v196
  %v198 = vrot.slane %v10, %v197
  %v199 = vsub.f32 %v198, %v10
  %v200 = vmul.f32 %v189, %v189
  %v201 = vmul.f32 %v194, %v194
  %v202 = vadd.f32 %v200, %v201
  %v203 = vmul.f32 %v199, %v199
  %v204 = vadd.f32 %v202, %v203
  %v205 = vrsqrt.pop %v204
  %v206 = vmul.f32 %v204, %v205
  %vm207 = vcmp.eq.f32.partialorder %v204, inf
  %v208 = vsel %vm207, %v204, %v206
  %vm209 = vcmp.eq.f32.partialorder %v204, 0.0
  %v210 = vand.u32 %v204, 2147483648
  %v211 = vsel %vm209, %v210, %v208
  %v212 = vmul.f32 %v211, 1.442695
  %v213 = vpow.pop %v212
  %v214 = vlaneseq
  %v215 = vshrl.u32 %v214, 7
  %v216 = vsub.s32 7, %v215
  %v217 = vrot.slane %v8, %v216
  %v218 = vsub.f32 %v217, %v8
  %v219 = vlaneseq
  %v220 = vshrl.u32 %v219, 7
  %v221 = vsub.s32 7, %v220
  %v222 = vrot.slane %v9, %v221
  %v223 = vsub.f32 %v222, %v9
  %v224 = vlaneseq
  %v225 = vshrl.u32 %v224, 7
  %v226 = vsub.s32 7, %v225
  %v227 = vrot.slane %v10, %v226
  %v228 = vsub.f32 %v227, %v10
  %v229 = vmul.f32 %v218, %v218
  %v230 = vmul.f32 %v223, %v223
  %v231 = vadd.f32 %v229, %v230
  %v232 = vmul.f32 %v228, %v228
  %v233 = vadd.f32 %v231, %v232
  %v234 = vrsqrt.pop %v233
  %v235 = vmul.f32 %v233, %v234
  %vm236 = vcmp.eq.f32.partialorder %v233, inf
  %v237 = vsel %vm236, %v233, %v235
  %vm238 = vcmp.eq.f32.partialorder %v233, 0.0
  %v239 = vand.u32 %v233, 2147483648
  %v240 = vsel %vm238, %v239, %v237
  %v241 = vmul.f32 %v240, 1.442695
  %v242 = vpow.pop %v241
  %v243 = vadd.f32 %v39, %v68
  %v244 = vadd.f32 %v243, %v97
  %v245 = vadd.f32 %v244, %v126
  %v246 = vadd.f32 %v245, %v155
  %v247 = vadd.f32 %v246, %v184
  %v248 = vadd.f32 %v247, %v213
  %v249 = vadd.f32 %v248, %v242
  %v250 = vlaneseq
  %v251 = vshrl.u32 %v250, 7
  %v252 = vadd.f32 %v249, 1e-07
  %v253 = vrsqrt.pop %v252
  %vm254 = vcmp.eq.s32.totalorder %v251, 0
  %v255 = vsel %vm254, 1, 0
  %v256 = vcvt.s32.f32 %v255
  %v257 = vlaneseq
  %v258 = vshrl.u32 %v257, 7
  %v259 = vsub.s32 0, %v258
  %v260 = vrot.slane %v253, %v259
  %v261 = vmul.f32 %v260, %v39
  %v262 = vmul.f32 %v261, %v253
  %v263 = vsub.f32 %v256, %v262
  %vm264 = vcmp.eq.s32.totalorder %v251, 1
  %v265 = vsel %vm264, 1, 0
  %v266 = vcvt.s32.f32 %v265
  %v267 = vlaneseq
  %v268 = vshrl.u32 %v267, 7
  %v269 = vsub.s32 1, %v268
  %v270 = vrot.slane %v253, %v269
  %v271 = vmul.f32 %v270, %v68
  %v272 = vmul.f32 %v271, %v253
  %v273 = vsub.f32 %v266, %v272
  %vm274 = vcmp.eq.s32.totalorder %v251, 2
  %v275 = vsel %vm274, 1, 0
  %v276 = vcvt.s32.f32 %v275
  %v277 = vlaneseq
  %v278 = vshrl.u32 %v277, 7
  %v279 = vsub.s32 2, %v278
  %v280 = vrot.slane %v253, %v279
  %v281 = vmul.f32 %v280, %v97
  %v282 = vmul.f32 %v281, %v253
  %v283 = vsub.f32 %v276, %v282
  %vm284 = vcmp.eq.s32.totalorder %v251, 3
  %v285 = vsel %vm284, 1, 0
  %v286 = vcvt.s32.f32 %v285
  %v287 = vlaneseq
  %v288 = vshrl.u32 %v287, 7
  %v289 = vsub.s32 3, %v288
  %v290 = vrot.slane %v253, %v289
  %v291 = vmul.f32 %v290, %v126
  %v292 = vmul.f32 %v291, %v253
  %v293 = vsub.f32 %v286, %v292
  %vm294 = vcmp.eq.s32.totalorder %v251, 4
  %v295 = vsel %vm294, 1, 0
  %v296 = vcvt.s32.f32 %v295
  %v297 = vlaneseq
  %v298 = vshrl.u32 %v297, 7
  %v299 = vsub.s32 4, %v298
  %v300 = vrot.slane %v253, %v299
  %v301 = vmul.f32 %v300, %v155
  %v302 = vmul.f32 %v301, %v253
  %v303 = vsub.f32 %v296, %v302
  %vm304 = vcmp.eq.s32.totalorder %v251, 5
  %v305 = vsel %vm304, 1, 0
  %v306 = vcvt.s32.f32 %v305
  %v307 = vlaneseq
  %v308 = vshrl.u32 %v307, 7
  %v309 = vsub.s32 5, %v308
  %v310 = vrot.slane %v253, %v309
  %v311 = vmul.f32 %v310, %v184
  %v312 = vmul.f32 %v311, %v253
  %v313 = vsub.f32 %v306, %v312
  %vm314 = vcmp.eq.s32.totalorder %v251, 6
  %v315 = vsel %vm314, 1, 0
  %v316 = vcvt.s32.f32 %v315
  %v317 = vlaneseq
  %v318 = vshrl.u32 %v317, 7
  %v319 = vsub.s32 6, %v318
  %v320 = vrot.slane %v253, %v319
  %v321 = vmul.f32 %v320, %v213
  %v322 = vmul.f32 %v321, %v253
  %v323 = vsub.f32 %v316, %v322
  %vm324 = vcmp.eq.s32.totalorder %v251, 7
  %v325 = vsel %vm324, 1, 0
  %v326 = vcvt.s32.f32 %v325
  %v327 = vlaneseq
  %v328 = vshrl.u32 %v327, 7
  %v329 = vsub.s32 7, %v328
  %v330 = vrot.slane %v253, %v329
  %v331 = vmul.f32 %v330, %v242
  %v332 = vmul.f32 %v331, %v253
  %v333 = vsub.f32 %v326, %v332
  %334 = vst [vmem:[%s1] sm:$0xff] %v263
  %335 = vst [vmem:[%s1 + $0x8] sm:$0xff] %v273
  %336 = vst [vmem:[%s1 + $0x10] sm:$0xff] %v283
  %337 = vst [vmem:[%s1 + $0x18] sm:$0xff] %v293
  %338 = vst [vmem:[%s1 + $0x20] sm:$0xff] %v303
  %339 = vst [vmem:[%s1 + $0x28] sm:$0xff] %v313
  %340 = vst [vmem:[%s1 + $0x30] sm:$0xff] %v323
  %341 = vst [vmem:[%s1 + $0x38] sm:$0xff] %v333
  // Predicated region
  $region6: #{shape_classifier_forward.5} parent=0 // pred_check
    _
  $region7: #{shape_classifier_forward.5} parent=0 // pred_check_branch
    %343 = sbr.rel (0) target = $region9
  $region8: #{shape_classifier_forward.5} parent=0 // pred_region
    _
  $region9: #{shape_classifier_forward.5} parent=0 // pred_fallthru
    _
  // Predicated region
  $region10: #{shape_classifier_forward.5} parent=0 // pred_check
    _
  $region11: #{shape_classifier_forward.5} parent=0 // pred_check_branch
    %345 = sbr.rel (0) target = $region13
  $region12: #{shape_classifier_forward.5} parent=0 // pred_region
    _
  $region13: #{shape_classifier_forward.5} parent=0 // pred_fallthru
    _

// kernel: shape_classifier_forward.6
$region0: #{shape_classifier_forward.6}
  #allocation0 [shape = 'u32[]', space=smem, size = 0x4, offset = 0x4, fixed_abs, tag = 'smem constant byte address 0x4 - core index']
  #allocation1 [shape = 'u32[144,128]{1,0:T(1,128)}', space=vmem, size = 0x12000, scoped, tag = 'internal scratch']
  %s0 = inlined_call_operand.vmem [shape: f32[8,128], index: 0, kind: input, shape index: {}]
  %s1 = inlined_call_operand.vmem [shape: bf16[128,128], index: 1, kind: input, shape index: {}]
  %s2 = inlined_call_operand.vmem [shape: f32[1,128], index: 2, kind: input, shape index: {}]
  %s3 = inlined_call_operand.vmem [shape: f32[8,128], index: 3, kind: output, shape index: {0}]
  %s4 = inlined_call_operand.vmem [shape: f32[1,2,128], index: 4, kind: output, shape index: {1}]
  %5 = xla_tuple %s3, %s4
  %s6 = sld [smem:[#allocation0]]
  $region30: #{shape_classifier_forward.6} parent=0
    _
  %s8 = ssub.s32 1, %s6
  %s9 = scalar_select 0, %s8, %s6
  // Predicated region
  $region2: #{shape_classifier_forward.6} parent=0 // pred_check
    _
  $region3: #{shape_classifier_forward.6} parent=0 // pred_check_branch
    %11 = sbr.rel (0) target = $region5
  $region4: #{shape_classifier_forward.6} parent=0 // pred_region
    _
  $region5: #{shape_classifier_forward.6} parent=0 // pred_fallthru
    _
  // Predicated region
  $region6: #{shape_classifier_forward.6} parent=0 // pred_check
    _
  $region7: #{shape_classifier_forward.6} parent=0 // pred_check_branch
    %13 = sbr.rel (0) target = $region9
  $region8: #{shape_classifier_forward.6} parent=0 // pred_region
    _
  $region9: #{shape_classifier_forward.6} parent=0 // pred_fallthru
    _
  // Predicated region
  $region10: #{shape_classifier_forward.6} parent=0 // pred_check
    _
  $region11: #{shape_classifier_forward.6} parent=0 // pred_check_branch
    %15 = sbr.rel (0) target = $region13
  $region12: #{shape_classifier_forward.6} parent=0 // pred_region
    _
  $region13: #{shape_classifier_forward.6} parent=0 // pred_fallthru
    _
  %v17 = vld [vmem:[%s0] sm:$0xff]
  %v18 = vpack.c.bf16 %v17, %v17
  %v19 = vld [vmem:[%s1] sm:$0xf]
  %v20 = vld [vmem:[%s1 + $0x4] sm:$0xf]
  %v21 = vld [vmem:[%s1 + $0x8] sm:$0xf]
  %v22 = vld [vmem:[%s1 + $0xc] sm:$0xf]
  %v23 = vld [vmem:[%s1 + $0x10] sm:$0xf]
  %v24 = vld [vmem:[%s1 + $0x14] sm:$0xf]
  %v25 = vld [vmem:[%s1 + $0x18] sm:$0xf]
  %v26 = vld [vmem:[%s1 + $0x1c] sm:$0xf]
  %v27 = vld [vmem:[%s1 + $0x20] sm:$0xf]
  %v28 = vld [vmem:[%s1 + $0x24] sm:$0xf]
  %v29 = vld [vmem:[%s1 + $0x28] sm:$0xf]
  %v30 = vld [vmem:[%s1 + $0x2c] sm:$0xf]
  %v31 = vld [vmem:[%s1 + $0x30] sm:$0xf]
  %v32 = vld [vmem:[%s1 + $0x34] sm:$0xf]
  %v33 = vld [vmem:[%s1 + $0x38] sm:$0xf]
  %v34 = vld [vmem:[%s1 + $0x3c] sm:$0xf]
  %v35 = vld [vmem:[%s2] sm:$0x1]
  %v37 = vlaneseq
  %v38 = vshrl.u32 %v37, 7
  %v39 = vsub.s32 0, %v38
  %v40 = vrot.slane %v35, %v39
  %v58 = vunpack.c.l.b16 %v19
  %v59 = vunpack.c.l.b16 %v20
  %v60 = vunpack.c.l.b16 %v21
  %v61 = vunpack.c.l.b16 %v22
  %v62 = vunpack.c.l.b16 %v23
  %v63 = vunpack.c.l.b16 %v24
  %v64 = vunpack.c.l.b16 %v25
  %v65 = vunpack.c.l.b16 %v26
  %v66 = vunpack.c.l.b16 %v27
  %v67 = vunpack.c.l.b16 %v28
  %v68 = vunpack.c.l.b16 %v29
  %v69 = vunpack.c.l.b16 %v30
  %v70 = vunpack.c.l.b16 %v31
  %v71 = vunpack.c.l.b16 %v32
  %v72 = vunpack.c.l.b16 %v33
  %v73 = vunpack.c.l.b16 %v34
  %v74 = vpack.c.b16 %v59, %v58
  %v75 = vpack.c.b16 %v61, %v60
  %v76 = vpack.c.b16 %v63, %v62
  %v77 = vpack.c.b16 %v65, %v64
  %v78 = vpack.c.b16 %v67, %v66
  %v79 = vpack.c.b16 %v69, %v68
  %v80 = vpack.c.b16 %v71, %v70
  %v81 = vpack.c.b16 %v73, %v72
  %90 = vmatprep.subr.bf16.mxu0 0
  %91 = vmatpush1.bf16.msra.mxu0 %v81
  %92 = vmatprep.subr.bf16.mxu0 0
  %93 = vmatpush1.bf16.msra.mxu0 %v80
  %94 = vmatprep.subr.bf16.mxu0 0
  %95 = vmatpush1.bf16.msra.mxu0 %v79
  %96 = vmatprep.subr.bf16.mxu0 0
  %97 = vmatpush1.bf16.msra.mxu0 %v78
  %98 = vmatprep.subr.bf16.mxu0 0
  %99 = vmatpush1.bf16.msra.mxu0 %v77
  %100 = vmatprep.subr.bf16.mxu0 0
  %101 = vmatpush1.bf16.msra.mxu0 %v76
  %102 = vmatprep.subr.bf16.mxu0 0
  %103 = vmatpush1.bf16.msra.mxu0 %v75
  %104 = vmatprep.subr.bf16.mxu0 0
  %105 = vmatpush1.bf16.msra.mxu0 %v74
  %106 = vmatprep.subr.bf16.mxu0 0
  %107 = vmatpush2.bf16.msra.mxu0 0
  %108 = vmatprep.subr.bf16.mxu0 0
  %109 = vmatpush2.bf16.msra.mxu0 0
  %110 = vmatprep.subr.bf16.mxu0 0
  %111 = vmatpush2.bf16.msra.mxu0 0
  %112 = vmatprep.subr.bf16.mxu0 0
  %113 = vmatpush2.bf16.msra.mxu0 0
  %114 = vmatprep.subr.bf16.mxu0 0
  %115 = vmatpush2.bf16.msra.mxu0 0
  %116 = vmatprep.subr.bf16.mxu0 0
  %117 = vmatpush2.bf16.msra.mxu0 0
  %118 = vmatprep.subr.bf16.mxu0 0
  %119 = vmatpush2.bf16.msra.mxu0 0
  %120 = vmatprep.subr.bf16.mxu0 0
  %121 = vmatpush2.bf16.msra.mxu0 0
  %122 = vmatprep.mubr.bf16.mxu0 0
  %123 = vmatmul.mubr.bf16.gmra.mxu0 %v18
  %v124 = vpop.f32.mrf.mxu0
  %v125 = vadd.f32 %v40, %v124
  %v126 = vpop.f32.mrf.mxu0
  %v127 = vpop.f32.mrf.mxu0
  %v128 = vpop.f32.mrf.mxu0
  %129 = vdwg.mxu0
  %130 = vst [vmem:[%s3] sm:$0xff] %v125
  %s131 = smul.u32 0, 8
  %v132 = vlaneseq
  %v133 = vshrl.u32 %v132, 7
  %v134 = vstv %s131
  %v135 = vadd.s32 %v134, %v133
  %vm136 = vcmp.lt.s32.totalorder %v135, 8
  %v137 = vsel %vm136, 1, 0
  %v138 = vcvt.s32.f32 %v137
  %v139 = vmul.f32 %v125, %v138
  %v140 = vrot.slane %v139, 4
  %v141 = vadd.f32 %v139, %v140
  %v142 = vrot.slane %v141, 2
  %v143 = vadd.f32 %v141, %v142
  %v144 = vrot.slane %v143, 1
  %v145 = vadd.f32 %v143, %v144
  %v146 = vmul.f32 %v139, %v125
  %v147 = vrot.slane %v146, 4
  %v148 = vadd.f32 %v146, %v147
  %v149 = vrot.slane %v148, 2
  %v150 = vadd.f32 %v148, %v149
  %v151 = vrot.slane %v150, 1
  %v152 = vadd.f32 %v150, %v151
  %vm153 = vcmask 1040384
  %v154 = vsel %vm153, %v145, %v152
  %155 = vst [vmem:[%s4] sm:$0x3] %v154
  // Predicated region
  $region14: #{shape_classifier_forward.6} parent=0 // pred_check
    _
  $region15: #{shape_classifier_forward.6} parent=0 // pred_check_branch
    %157 = sbr.rel (0) target = $region17
  $region16: #{shape_classifier_forward.6} parent=0 // pred_region
    _
  $region17: #{shape_classifier_forward.6} parent=0 // pred_fallthru
    _
  // Predicated region
  $region18: #{shape_classifier_forward.6} parent=0 // pred_check
    _
  $region19: #{shape_classifier_forward.6} parent=0 // pred_check_branch
    %159 = sbr.rel (0) target = $region21
  $region20: #{shape_classifier_forward.6} parent=0 // pred_region
    _
  $region21: #{shape_classifier_forward.6} parent=0 // pred_fallthru
    _
  // Predicated region
  $region22: #{shape_classifier_forward.6} parent=0 // pred_check
    _
  $region23: #{shape_classifier_forward.6} parent=0 // pred_check_branch
    %161 = sbr.rel (0) target = $region25
  $region24: #{shape_classifier_forward.6} parent=0 // pred_region
    _
  $region25: #{shape_classifier_forward.6} parent=0 // pred_fallthru
    _
  // Predicated region
  $region26: #{shape_classifier_forward.6} parent=0 // pred_check
    _
  $region27: #{shape_classifier_forward.6} parent=0 // pred_check_branch
    %163 = sbr.rel (0) target = $region29
  $region28: #{shape_classifier_forward.6} parent=0 // pred_region
    _
  $region29: #{shape_classifier_forward.6} parent=0 // pred_fallthru
    _

// kernel: shape_classifier_forward.7
$region0: #{shape_classifier_forward.7}
  #allocation0 [shape = 'u32[]', space=smem, size = 0x4, offset = 0x4, fixed_abs, tag = 'smem constant byte address 0x4 - core index']
  #allocation1 [shape = 'u32[144,128]{1,0:T(1,128)}', space=vmem, size = 0x12000, scoped, tag = 'internal scratch']
  %s0 = inlined_call_operand.vmem [shape: f32[8,128], index: 0, kind: input, shape index: {}]
  %s1 = inlined_call_operand.vmem [shape: f32[2,128], index: 1, kind: input, shape index: {}]
  %s2 = inlined_call_operand.vmem [shape: f32[1,128], index: 2, kind: input, shape index: {}]
  %s3 = inlined_call_operand.vmem [shape: f32[1,128], index: 3, kind: input, shape index: {}]
  %s4 = inlined_call_operand.vmem [shape: bf16[128,128], index: 4, kind: input, shape index: {}]
  %s5 = inlined_call_operand.vmem [shape: f32[1,128], index: 5, kind: input, shape index: {}]
  %s6 = inlined_call_operand.vmem [shape: f32[8,128], index: 6, kind: output, shape index: {0}]
  %s7 = inlined_call_operand.vmem [shape: f32[1,2,128], index: 7, kind: output, shape index: {1}]
  %8 = xla_tuple %s6, %s7
  %s9 = sld [smem:[#allocation0]]
  $region42: #{shape_classifier_forward.7} parent=0
    _
  %s11 = ssub.s32 1, %s9
  %s12 = scalar_select 0, %s11, %s9
  // Predicated region
  $region2: #{shape_classifier_forward.7} parent=0 // pred_check
    _
  $region3: #{shape_classifier_forward.7} parent=0 // pred_check_branch
    %14 = sbr.rel (0) target = $region5
  $region4: #{shape_classifier_forward.7} parent=0 // pred_region
    _
  $region5: #{shape_classifier_forward.7} parent=0 // pred_fallthru
    _
  // Predicated region
  $region6: #{shape_classifier_forward.7} parent=0 // pred_check
    _
  $region7: #{shape_classifier_forward.7} parent=0 // pred_check_branch
    %16 = sbr.rel (0) target = $region9
  $region8: #{shape_classifier_forward.7} parent=0 // pred_region
    _
  $region9: #{shape_classifier_forward.7} parent=0 // pred_fallthru
    _
  // Predicated region
  $region10: #{shape_classifier_forward.7} parent=0 // pred_check
    _
  $region11: #{shape_classifier_forward.7} parent=0 // pred_check_branch
    %18 = sbr.rel (0) target = $region13
  $region12: #{shape_classifier_forward.7} parent=0 // pred_region
    _
  $region13: #{shape_classifier_forward.7} parent=0 // pred_fallthru
    _
  // Predicated region
  $region14: #{shape_classifier_forward.7} parent=0 // pred_check
    _
  $region15: #{shape_classifier_forward.7} parent=0 // pred_check_branch
    %20 = sbr.rel (0) target = $region17
  $region16: #{shape_classifier_forward.7} parent=0 // pred_region
    _
  $region17: #{shape_classifier_forward.7} parent=0 // pred_fallthru
    _
  // Predicated region
  $region18: #{shape_classifier_forward.7} parent=0 // pred_check
    _
  $region19: #{shape_classifier_forward.7} parent=0 // pred_check_branch
    %22 = sbr.rel (0) target = $region21
  $region20: #{shape_classifier_forward.7} parent=0 // pred_region
    _
  $region21: #{shape_classifier_forward.7} parent=0 // pred_fallthru
    _
  // Predicated region
  $region22: #{shape_classifier_forward.7} parent=0 // pred_check
    _
  $region23: #{shape_classifier_forward.7} parent=0 // pred_check_branch
    %24 = sbr.rel (0) target = $region25
  $region24: #{shape_classifier_forward.7} parent=0 // pred_region
    _
  $region25: #{shape_classifier_forward.7} parent=0 // pred_fallthru
    _
  %v26 = vld [vmem:[%s0] sm:$0xff]
  %v27 = vld [vmem:[%s1] sm:$0x1]
  %v28 = vld [vmem:[%s1 + $0x1] sm:$0x1]
  %v29 = vlaneseq
  %v30 = vshrl.u32 %v29, 7
  %v31 = vsub.s32 0, %v30
  %v32 = vrot.slane %v27, %v31
  %v33 = vsub.f32 %v26, %v32
  %v34 = vlaneseq
  %v35 = vshrl.u32 %v34, 7
  %v36 = vsub.s32 0, %v35
  %v37 = vrot.slane %v28, %v36
  %v38 = vmul.f32 %v33, %v37
  %v39 = vld [vmem:[%s2] sm:$0x1]
  %v41 = vlaneseq
  %v42 = vshrl.u32 %v41, 7
  %v43 = vsub.s32 0, %v42
  %v44 = vrot.slane %v39, %v43
  %v46 = vmul.f32 %v38, %v44
  %v47 = vld [vmem:[%s3] sm:$0x1]
  %v49 = vlaneseq
  %v50 = vshrl.u32 %v49, 7
  %v51 = vsub.s32 0, %v50
  %v52 = vrot.slane %v47, %v51
  %v54 = vadd.f32 %v46, %v52
  %v55 = vmax.f32 %v54, 0.0
  %v56 = vpack.c.bf16 %v55, %v55
  %v57 = vld [vmem:[%s4] sm:$0xf]
  %v58 = vld [vmem:[%s4 + $0x4] sm:$0xf]
  %v59 = vld [vmem:[%s4 + $0x8] sm:$0xf]
  %v60 = vld [vmem:[%s4 + $0xc] sm:$0xf]
  %v61 = vld [vmem:[%s4 + $0x10] sm:$0xf]
  %v62 = vld [vmem:[%s4 + $0x14] sm:$0xf]
  %v63 = vld [vmem:[%s4 + $0x18] sm:$0xf]
  %v64 = vld [vmem:[%s4 + $0x1c] sm:$0xf]
  %v65 = vld [vmem:[%s4 + $0x20] sm:$0xf]
  %v66 = vld [vmem:[%s4 + $0x24] sm:$0xf]
  %v67 = vld [vmem:[%s4 + $0x28] sm:$0xf]
  %v68 = vld [vmem:[%s4 + $0x2c] sm:$0xf]
  %v69 = vld [vmem:[%s4 + $0x30] sm:$0xf]
  %v70 = vld [vmem:[%s4 + $0x34] sm:$0xf]
  %v71 = vld [vmem:[%s4 + $0x38] sm:$0xf]
  %v72 = vld [vmem:[%s4 + $0x3c] sm:$0xf]
  %v73 = vld [vmem:[%s5] sm:$0x1]
  %v75 = vlaneseq
  %v76 = vshrl.u32 %v75, 7
  %v77 = vsub.s32 0, %v76
  %v78 = vrot.slane %v73, %v77
  %v96 = vunpack.c.l.b16 %v57
  %v97 = vunpack.c.l.b16 %v58
  %v98 = vunpack.c.l.b16 %v59
  %v99 = vunpack.c.l.b16 %v60
  %v100 = vunpack.c.l.b16 %v61
  %v101 = vunpack.c.l.b16 %v62
  %v102 = vunpack.c.l.b16 %v63
  %v103 = vunpack.c.l.b16 %v64
  %v104 = vunpack.c.l.b16 %v65
  %v105 = vunpack.c.l.b16 %v66
  %v106 = vunpack.c.l.b16 %v67
  %v107 = vunpack.c.l.b16 %v68
  %v108 = vunpack.c.l.b16 %v69
  %v109 = vunpack.c.l.b16 %v70
  %v110 = vunpack.c.l.b16 %v71
  %v111 = vunpack.c.l.b16 %v72
  %v112 = vpack.c.b16 %v97, %v96
  %v113 = vpack.c.b16 %v99, %v98
  %v114 = vpack.c.b16 %v101, %v100
  %v115 = vpack.c.b16 %v103, %v102
  %v116 = vpack.c.b16 %v105, %v104
  %v117 = vpack.c.b16 %v107, %v106
  %v118 = vpack.c.b16 %v109, %v108
  %v119 = vpack.c.b16 %v111, %v110
  %128 = vmatprep.subr.bf16.mxu0 0
  %129 = vmatpush1.bf16.msra.mxu0 %v119
  %130 = vmatprep.subr.bf16.mxu0 0
  %131 = vmatpush1.bf16.msra.mxu0 %v118
  %132 = vmatprep.subr.bf16.mxu0 0
  %133 = vmatpush1.bf16.msra.mxu0 %v117
  %134 = vmatprep.subr.bf16.mxu0 0
  %135 = vmatpush1.bf16.msra.mxu0 %v116
  %136 = vmatprep.subr.bf16.mxu0 0
  %137 = vmatpush1.bf16.msra.mxu0 %v115
  %138 = vmatprep.subr.bf16.mxu0 0
  %139 = vmatpush1.bf16.msra.mxu0 %v114
  %140 = vmatprep.subr.bf16.mxu0 0
  %141 = vmatpush1.bf16.msra.mxu0 %v113
  %142 = vmatprep.subr.bf16.mxu0 0
  %143 = vmatpush1.bf16.msra.mxu0 %v112
  %144 = vmatprep.subr.bf16.mxu0 0
  %145 = vmatpush2.bf16.msra.mxu0 0
  %146 = vmatprep.subr.bf16.mxu0 0
  %147 = vmatpush2.bf16.msra.mxu0 0
  %148 = vmatprep.subr.bf16.mxu0 0
  %149 = vmatpush2.bf16.msra.mxu0 0
  %150 = vmatprep.subr.bf16.mxu0 0
  %151 = vmatpush2.bf16.msra.mxu0 0
  %152 = vmatprep.subr.bf16.mxu0 0
  %153 = vmatpush2.bf16.msra.mxu0 0
  %154 = vmatprep.subr.bf16.mxu0 0
  %155 = vmatpush2.bf16.msra.mxu0 0
  %156 = vmatprep.subr.bf16.mxu0 0
  %157 = vmatpush2.bf16.msra.mxu0 0
  %158 = vmatprep.subr.bf16.mxu0 0
  %159 = vmatpush2.bf16.msra.mxu0 0
  %160 = vmatprep.mubr.bf16.mxu0 0
  %161 = vmatmul.mubr.bf16.gmra.mxu0 %v56
  %v162 = vpop.f32.mrf.mxu0
  %v163 = vadd.f32 %v78, %v162
  %v164 = vpop.f32.mrf.mxu0
  %v165 = vpop.f32.mrf.mxu0
  %v166 = vpop.f32.mrf.mxu0
  %167 = vdwg.mxu0
  %168 = vst [vmem:[%s6] sm:$0xff] %v163
  %s169 = smul.u32 0, 8
  %v170 = vlaneseq
  %v171 = vshrl.u32 %v170, 7
  %v172 = vstv %s169
  %v173 = vadd.s32 %v172, %v171
  %vm174 = vcmp.lt.s32.totalorder %v173, 8
  %v175 = vsel %vm174, 1, 0
  %v176 = vcvt.s32.f32 %v175
  %v177 = vmul.f32 %v163, %v176
  %v178 = vrot.slane %v177, 4
  %v179 = vadd.f32 %v177, %v178
  %v180 = vrot.slane %v179, 2
  %v181 = vadd.f32 %v179, %v180
  %v182 = vrot.slane %v181, 1
  %v183 = vadd.f32 %v181, %v182
  %v184 = vmul.f32 %v177, %v163
  %v185 = vrot.slane %v184, 4
  %v186 = vadd.f32 %v184, %v185
  %v187 = vrot.slane %v186, 2
  %v188 = vadd.f32 %v186, %v187
  %v189 = vrot.slane %v188, 1
  %v190 = vadd.f32 %v188, %v189
  %vm191 = vcmask 1040384
  %v192 = vsel %vm191, %v183, %v190
  %193 = vst [vmem:[%s7] sm:$0x3] %v192
  // Predicated region
  $region26: #{shape_classifier_forward.7} parent=0 // pred_check
    _
  $region27: #{shape_classifier_forward.7} parent=0 // pred_check_branch
    %195 = sbr.rel (0) target = $region29
  $region28: #{shape_classifier_forward.7} parent=0 // pred_region
    _
  $region29: #{shape_classifier_forward.7} parent=0 // pred_fallthru
    _
  // Predicated region
  $region30: #{shape_classifier_forward.7} parent=0 // pred_check
    _
  $region31: #{shape_classifier_forward.7} parent=0 // pred_check_branch
    %197 = sbr.rel (0) target = $region33
  $region32: #{shape_classifier_forward.7} parent=0 // pred_region
    _
  $region33: #{shape_classifier_forward.7} parent=0 // pred_fallthru
    _
  // Predicated region
  $region34: #{shape_classifier_forward.7} parent=0 // pred_check
    _
  $region35: #{shape_classifier_forward.7} parent=0 // pred_check_branch
    %199 = sbr.rel (0) target = $region37
  $region36: #{shape_classifier_forward.7} parent=0 // pred_region
    _
  $region37: #{shape_classifier_forward.7} parent=0 // pred_fallthru
    _
  // Predicated region
  $region38: #{shape_classifier_forward.7} parent=0 // pred_check
    _
  $region39: #{shape_classifier_forward.7} parent=0 // pred_check_branch
    %201 = sbr.rel (0) target = $region41
  $region40: #{shape_classifier_forward.7} parent=0 // pred_region
    _
  $region41: #{shape_classifier_forward.7} parent=0 // pred_fallthru
    _

// kernel: shape_classifier_forward.9
$region0: #{shape_classifier_forward.9}
  #allocation0 [shape = 'u32[]', space=smem, size = 0x4, offset = 0x4, fixed_abs, tag = 'smem constant byte address 0x4 - core index']
  #allocation1 [shape = 'u32[144,128]{1,0:T(1,128)}', space=vmem, size = 0x12000, scoped, tag = 'internal scratch']
  %s0 = inlined_call_operand.vmem [shape: f32[8,128], index: 0, kind: input, shape index: {}]
  %s1 = inlined_call_operand.vmem [shape: f32[2,128], index: 1, kind: input, shape index: {}]
  %s2 = inlined_call_operand.vmem [shape: f32[1,128], index: 2, kind: input, shape index: {}]
  %s3 = inlined_call_operand.vmem [shape: f32[1,128], index: 3, kind: input, shape index: {}]
  %s4 = inlined_call_operand.vmem [shape: bf16[128,128], index: 4, kind: input, shape index: {}]
  %s5 = inlined_call_operand.vmem [shape: f32[1,128], index: 5, kind: input, shape index: {}]
  %s6 = inlined_call_operand.hbm [shape: f32[8,128], index: 6, kind: output, shape index: {}]
  %s7 = sld [smem:[#allocation0]]
  $region34: #{shape_classifier_forward.9} parent=0
    _
  %s9 = ssub.s32 1, %s7
  %s10 = scalar_select 0, %s9, %s7
  $region1: #{shape_classifier_forward.9} parent=0
    #allocation2 [shape = 'u8[4096]{0}', space=vmem, size = 0x1000, scoped, tag = 'output window, operand 0, single buffered']
    #allocation3 [shape = 's32[1]{0}', space=sflag, size = 0x4, scoped, tag = 'scoped memory for shape_classifier_forward.9']
    %11 = vsyncpa [#allocation3], 0
    // Predicated region
    $region2: #{shape_classifier_forward.9} parent=1 // pred_check
      _
    $region3: #{shape_classifier_forward.9} parent=1 // pred_check_branch
      %13 = sbr.rel (0) target = $region5
    $region4: #{shape_classifier_forward.9} parent=1 // pred_region
      _
    $region5: #{shape_classifier_forward.9} parent=1 // pred_fallthru
      _
    // Predicated region
    $region6: #{shape_classifier_forward.9} parent=1 // pred_check
      _
    $region7: #{shape_classifier_forward.9} parent=1 // pred_check_branch
      %15 = sbr.rel (0) target = $region9
    $region8: #{shape_classifier_forward.9} parent=1 // pred_region
      _
    $region9: #{shape_classifier_forward.9} parent=1 // pred_fallthru
      _
    // Predicated region
    $region10: #{shape_classifier_forward.9} parent=1 // pred_check
      _
    $region11: #{shape_classifier_forward.9} parent=1 // pred_check_branch
      %17 = sbr.rel (0) target = $region13
    $region12: #{shape_classifier_forward.9} parent=1 // pred_region
      _
    $region13: #{shape_classifier_forward.9} parent=1 // pred_fallthru
      _
    // Predicated region
    $region14: #{shape_classifier_forward.9} parent=1 // pred_check
      _
    $region15: #{shape_classifier_forward.9} parent=1 // pred_check_branch
      %19 = sbr.rel (0) target = $region17
    $region16: #{shape_classifier_forward.9} parent=1 // pred_region
      _
    $region17: #{shape_classifier_forward.9} parent=1 // pred_fallthru
      _
    // Predicated region
    $region18: #{shape_classifier_forward.9} parent=1 // pred_check
      _
    $region19: #{shape_classifier_forward.9} parent=1 // pred_check_branch
      %21 = sbr.rel (0) target = $region21
    $region20: #{shape_classifier_forward.9} parent=1 // pred_region
      _
    $region21: #{shape_classifier_forward.9} parent=1 // pred_fallthru
      _
    // Predicated region
    $region22: #{shape_classifier_forward.9} parent=1 // pred_check
      _
    $region23: #{shape_classifier_forward.9} parent=1 // pred_check_branch
      %23 = sbr.rel (0) target = $region25
    $region24: #{shape_classifier_forward.9} parent=1 // pred_region
      _
    $region25: #{shape_classifier_forward.9} parent=1 // pred_fallthru
      _
    %v25 = vld [vmem:[%s0] sm:$0xff]
    %v26 = vld [vmem:[%s1] sm:$0x1]
    %v27 = vld [vmem:[%s1 + $0x1] sm:$0x1]
    %v28 = vlaneseq
    %v29 = vshrl.u32 %v28, 7
    %v30 = vsub.s32 0, %v29
    %v31 = vrot.slane %v26, %v30
    %v32 = vsub.f32 %v25, %v31
    %v33 = vlaneseq
    %v34 = vshrl.u32 %v33, 7
    %v35 = vsub.s32 0, %v34
    %v36 = vrot.slane %v27, %v35
    %v37 = vmul.f32 %v32, %v36
    %v38 = vld [vmem:[%s2] sm:$0x1]
    %v40 = vlaneseq
    %v41 = vshrl.u32 %v40, 7
    %v42 = vsub.s32 0, %v41
    %v43 = vrot.slane %v38, %v42
    %v45 = vmul.f32 %v37, %v43
    %v46 = vld [vmem:[%s3] sm:$0x1]
    %v48 = vlaneseq
    %v49 = vshrl.u32 %v48, 7
    %v50 = vsub.s32 0, %v49
    %v51 = vrot.slane %v46, %v50
    %v53 = vadd.f32 %v45, %v51
    %v54 = vmax.f32 %v53, 0.0
    %v55 = vpack.c.bf16 %v54, %v54
    %v56 = vld [vmem:[%s4] sm:$0xf]
    %v57 = vld [vmem:[%s4 + $0x4] sm:$0xf]
    %v58 = vld [vmem:[%s4 + $0x8] sm:$0xf]
    %v59 = vld [vmem:[%s4 + $0xc] sm:$0xf]
    %v60 = vld [vmem:[%s4 + $0x10] sm:$0xf]
    %v61 = vld [vmem:[%s4 + $0x14] sm:$0xf]
    %v62 = vld [vmem:[%s4 + $0x18] sm:$0xf]
    %v63 = vld [vmem:[%s4 + $0x1c] sm:$0xf]
    %v64 = vld [vmem:[%s4 + $0x20] sm:$0xf]
    %v65 = vld [vmem:[%s4 + $0x24] sm:$0xf]
    %v66 = vld [vmem:[%s4 + $0x28] sm:$0xf]
    %v67 = vld [vmem:[%s4 + $0x2c] sm:$0xf]
    %v68 = vld [vmem:[%s4 + $0x30] sm:$0xf]
    %v69 = vld [vmem:[%s4 + $0x34] sm:$0xf]
    %v70 = vld [vmem:[%s4 + $0x38] sm:$0xf]
    %v71 = vld [vmem:[%s4 + $0x3c] sm:$0xf]
    %v72 = vld [vmem:[%s5] sm:$0x1]
    %v74 = vlaneseq
    %v75 = vshrl.u32 %v74, 7
    %v76 = vsub.s32 0, %v75
    %v77 = vrot.slane %v72, %v76
    %v95 = vunpack.c.l.b16 %v56
    %v96 = vunpack.c.l.b16 %v57
    %v97 = vunpack.c.l.b16 %v58
    %v98 = vunpack.c.l.b16 %v59
    %v99 = vunpack.c.l.b16 %v60
    %v100 = vunpack.c.l.b16 %v61
    %v101 = vunpack.c.l.b16 %v62
    %v102 = vunpack.c.l.b16 %v63
    %v103 = vunpack.c.l.b16 %v64
    %v104 = vunpack.c.l.b16 %v65
    %v105 = vunpack.c.l.b16 %v66
    %v106 = vunpack.c.l.b16 %v67
    %v107 = vunpack.c.l.b16 %v68
    %v108 = vunpack.c.l.b16 %v69
    %v109 = vunpack.c.l.b16 %v70
    %v110 = vunpack.c.l.b16 %v71
    %v111 = vpack.c.b16 %v96, %v95
    %v112 = vpack.c.b16 %v98, %v97
    %v113 = vpack.c.b16 %v100, %v99
    %v114 = vpack.c.b16 %v102, %v101
    %v115 = vpack.c.b16 %v104, %v103
    %v116 = vpack.c.b16 %v106, %v105
    %v117 = vpack.c.b16 %v108, %v107
    %v118 = vpack.c.b16 %v110, %v109
    %127 = vmatprep.subr.bf16.mxu0 0
    %128 = vmatpush1.bf16.msra.mxu0 %v118
    %129 = vmatprep.subr.bf16.mxu0 0
    %130 = vmatpush1.bf16.msra.mxu0 %v117
    %131 = vmatprep.subr.bf16.mxu0 0
    %132 = vmatpush1.bf16.msra.mxu0 %v116
    %133 = vmatprep.subr.bf16.mxu0 0
    %134 = vmatpush1.bf16.msra.mxu0 %v115
    %135 = vmatprep.subr.bf16.mxu0 0
    %136 = vmatpush1.bf16.msra.mxu0 %v114
    %137 = vmatprep.subr.bf16.mxu0 0
    %138 = vmatpush1.bf16.msra.mxu0 %v113
    %139 = vmatprep.subr.bf16.mxu0 0
    %140 = vmatpush1.bf16.msra.mxu0 %v112
    %141 = vmatprep.subr.bf16.mxu0 0
    %142 = vmatpush1.bf16.msra.mxu0 %v111
    %143 = vmatprep.subr.bf16.mxu0 0
    %144 = vmatpush2.bf16.msra.mxu0 0
    %145 = vmatprep.subr.bf16.mxu0 0
    %146 = vmatpush2.bf16.msra.mxu0 0
    %147 = vmatprep.subr.bf16.mxu0 0
    %148 = vmatpush2.bf16.msra.mxu0 0
    %149 = vmatprep.subr.bf16.mxu0 0
    %150 = vmatpush2.bf16.msra.mxu0 0
    %151 = vmatprep.subr.bf16.mxu0 0
    %152 = vmatpush2.bf16.msra.mxu0 0
    %153 = vmatprep.subr.bf16.mxu0 0
    %154 = vmatpush2.bf16.msra.mxu0 0
    %155 = vmatprep.subr.bf16.mxu0 0
    %156 = vmatpush2.bf16.msra.mxu0 0
    %157 = vmatprep.subr.bf16.mxu0 0
    %158 = vmatpush2.bf16.msra.mxu0 0
    %159 = vmatprep.mubr.bf16.mxu0 0
    %160 = vmatmul.mubr.bf16.gmra.mxu0 %v55
    %v161 = vpop.f32.mrf.mxu0
    %v162 = vadd.f32 %v77, %v161
    %v163 = vpop.f32.mrf.mxu0
    %v164 = vpop.f32.mrf.mxu0
    %v165 = vpop.f32.mrf.mxu0
    %166 = vdwg.mxu0
    %167 = vst [vmem:[#allocation2] sm:$0xff] %v162
    // Predicated region
    $region26: #{shape_classifier_forward.9} parent=1 // pred_check
      _
    $region27: #{shape_classifier_forward.9} parent=1 // pred_check_branch
      %169 = sbr.rel (0) target = $region29
    $region28: #{shape_classifier_forward.9} parent=1 // pred_region
      %s171 = ssub.s32 128, 128
      %172 = vsyncadd [#allocation3], %s171
      %s174 = sshll.u32 [#allocation2], 4
      %s175 = int_to_ptr.vmem [resolvable:$true] %s174
      %177 = dma.vmem_to_hbm [thread:$0]  %s175, 128, %s6, [#allocation3]
    $region29: #{shape_classifier_forward.9} parent=1 // pred_fallthru
      _
    // Predicated region
    $region30: #{shape_classifier_forward.9} parent=1 // pred_check
      _
    $region31: #{shape_classifier_forward.9} parent=1 // pred_check_branch
      %179 = sbr.rel (0) target = $region33
    $region32: #{shape_classifier_forward.9} parent=1 // pred_region
      %180 = dma.done [#allocation3], 128
    $region33: #{shape_classifier_forward.9} parent=1 // pred_fallthru
      _
    %181 = vsyncpa [#allocation3], 1

</llo_original>
